<compile_context>
chip_gen: v7x
topology: tpu7x:2x2x1
jax: 0.10.0
libtpu: 0.0.40
codegen_flags: <defaults>
</compile_context>

<pallas_src>
import functools

import jax
import jax.numpy as jnp
from jax.experimental import pallas as pl
from jax.experimental.pallas import tpu as pltpu

EPS = 1e-5
_ROW_TILE_TARGET = 8192                 # rows per tile (~1 MiB-class tiles even at narrow C)
_VMEM_BUDGET = 40 * 1024 * 1024         # per-call working-set budget (2x double-buffered blocks)
_VMEM_LIMIT = 48 * 1024 * 1024          # scoped VMEM request (safe on v5e/v6e 128 MiB, v7x 64 MiB)


def _compiler_params():
    return pltpu.CompilerParams(
        dimension_semantics=("parallel",),
        vmem_limit_bytes=_VMEM_LIMIT,
    )


def _pick_row_tile(m, bytes_per_row, target=_ROW_TILE_TARGET, budget=_VMEM_BUDGET):
    """Largest row tile <= min(target, VMEM budget) that divides m, multiple of 8,
    splitting into >=2 grid steps when cheap so v7x megacore can shard the axis."""
    cap = min(target, max(8, budget // max(1, 2 * bytes_per_row)))
    if m <= cap:
        if m % 16 == 0 and m >= 16:
            return m // 2          # >= 2 grid steps for megacore, still a multiple of 8
        return m
    start = cap - (cap % 8)
    for t in range(start, 7, -8):
        if m % t == 0:
            return t
    return m                       # fallback: single full tile (valid block, may be large)


def _pick_batch_tile(n, rows_per_image, bytes_per_image,
                     target=_ROW_TILE_TARGET, budget=_VMEM_BUDGET):
    cap = max(1, min(target // max(rows_per_image, 1),
                     budget // max(1, 2 * bytes_per_image)))
    nb = min(n, cap)
    if n >= 2:
        nb = min(nb, n // 2)       # leave >= 2 grid steps for v7x megacore
    nb = max(nb, 1)
    while n % nb:
        nb -= 1
    return nb


# ----------------------------- Pallas kernels ------------------------------


def _bn_partials(y):
    """(1, 2, C) block: [sum, sum of squares] over rows, written with a single store."""
    ss = jnp.sum(y, axis=0, keepdims=True)
    sq = jnp.sum(y * y, axis=0, keepdims=True)
    return jnp.concatenate([ss, sq], axis=0)[None]


def _matmul_stats_kernel(x_ref, w_ref, y_ref, s_ref):
    # Y = X @ W (bf16 operands, f32 accumulation); emit bf16 Y + per-tile BN partials.
    y = jnp.dot(x_ref[...], w_ref[...], preferred_element_type=jnp.float32)
    y_ref[...] = y.astype(y_ref.dtype)
    s_ref[...] = _bn_partials(y)


def matmul_stats(x, w):
    m, k = x.shape
    c = w.shape[1]
    tile = _pick_row_tile(m, bytes_per_row=2 * k + 2 * c)
    grid = (m // tile,)
    return pl.pallas_call(
        _matmul_stats_kernel,
        grid=grid,
        in_specs=[pl.BlockSpec((tile, k), lambda i: (i, 0)),
                  pl.BlockSpec((k, c), lambda i: (0, 0))],
        out_specs=(pl.BlockSpec((tile, c), lambda i: (i, 0)),
                   pl.BlockSpec((1, 2, c), lambda i: (i, 0, 0))),
        out_shape=(jax.ShapeDtypeStruct((m, c), jnp.bfloat16),
                   jax.ShapeDtypeStruct((grid[0], 2, c), jnp.float32)),
        compiler_params=_compiler_params(),
    )(x, w)


def _dconv3x3_stats_kernel(x_ref, w_ref, y_ref, s_ref, *, ho, wo):
    # 3x3 / stride-2 / pad-1 conv over a space-to-depth(2x2) block as 4 shift-grouped
    # matmuls (K = 4*cin). bf16 ref sliced directly (no f32 materialization), full-channel
    # slices only (no per-tap lane sub-slicing).
    nb = x_ref.shape[0]
    c4 = x_ref.shape[3]
    cout = w_ref.shape[2]
    acc = jnp.zeros((nb * ho * wo, cout), jnp.float32)
    for s in range(4):
        oh, ow = s // 2, s % 2
        xt = x_ref[:, pl.ds(oh, ho), pl.ds(ow, wo), :].reshape(nb * ho * wo, c4)
        acc = acc + jnp.dot(xt, w_ref[s], preferred_element_type=jnp.float32)
    y_ref[...] = acc.astype(y_ref.dtype)
    s_ref[...] = _bn_partials(acc)


def dconv3x3_s2_stats(x_s2d, w2p, ho, wo):
    n, hp2, wp2, c4 = x_s2d.shape
    cout = w2p.shape[2]
    bytes_per_image = hp2 * wp2 * c4 * 2 + ho * wo * cout * 2
    nb = _pick_batch_tile(n, ho * wo, bytes_per_image)
    if (nb * ho * wo) % 8 != 0:
        nb = n                      # keep the output block row count aligned (or full)
    grid = (n // nb,)
    kernel = functools.partial(_dconv3x3_stats_kernel, ho=ho, wo=wo)
    return pl.pallas_call(
        kernel,
        grid=grid,
        in_specs=[pl.BlockSpec((nb, hp2, wp2, c4), lambda i: (i, 0, 0, 0)),
                  pl.BlockSpec((4, c4, cout), lambda i: (0, 0, 0))],
        out_specs=(pl.BlockSpec((nb * ho * wo, cout), lambda i: (i, 0)),
                   pl.BlockSpec((1, 2, cout), lambda i: (i, 0, 0))),
        out_shape=(jax.ShapeDtypeStruct((n * ho * wo, cout), jnp.bfloat16),
                   jax.ShapeDtypeStruct((grid[0], 2, cout), jnp.float32)),
        compiler_params=_compiler_params(),
    )(x_s2d, w2p)


def _dual_matmul_stats_kernel(y2_ref, sc2_ref, sh2_ref, xs_ref, w3_ref, ws_ref,
                              o_ref, s_ref):
    # BN2 normalize + ReLU fused prologue, then conv3 and the shortcut 1x1 conv on the
    # same row tile; both results lane-concatenated into one wider output stream.
    x2 = jnp.maximum(y2_ref[...].astype(jnp.float32) * sc2_ref[...] + sh2_ref[...], 0.0)
    y3 = jnp.dot(x2.astype(jnp.bfloat16), w3_ref[...],
                 preferred_element_type=jnp.float32)
    ys = jnp.dot(xs_ref[...], ws_ref[...], preferred_element_type=jnp.float32)
    cat = jnp.concatenate([y3, ys], axis=1)
    o_ref[...] = cat.astype(o_ref.dtype)
    s_ref[...] = _bn_partials(cat)


def conv3_and_shortcut(y2, sc2, sh2, xs, w3, ws):
    m, p2 = y2.shape
    cin = xs.shape[1]
    p3 = w3.shape[1]
    bytes_per_row = 2 * p2 + 2 * cin + 2 * (2 * p3)
    tile = _pick_row_tile(m, bytes_per_row)
    grid = (m // tile,)
    return pl.pallas_call(
        _dual_matmul_stats_kernel,
        grid=grid,
        in_specs=[pl.BlockSpec((tile, p2), lambda i: (i, 0)),
                  pl.BlockSpec((1, p2), lambda i: (0, 0)),
                  pl.BlockSpec((1, p2), lambda i: (0, 0)),
                  pl.BlockSpec((tile, cin), lambda i: (i, 0)),
                  pl.BlockSpec((p2, p3), lambda i: (0, 0)),
                  pl.BlockSpec((cin, p3), lambda i: (0, 0))],
        out_specs=(pl.BlockSpec((tile, 2 * p3), lambda i: (i, 0)),
                   pl.BlockSpec((1, 2, 2 * p3), lambda i: (i, 0, 0))),
        out_shape=(jax.ShapeDtypeStruct((m, 2 * p3), jnp.bfloat16),
                   jax.ShapeDtypeStruct((grid[0], 2, 2 * p3), jnp.float32)),
        compiler_params=_compiler_params(),
    )(y2, sc2, sh2, xs, w3, ws)


def _residual_norm_kernel(y_ref, sc_ref, sh_ref, o_ref, *, p3):
    v = y_ref[...].astype(jnp.float32) * sc_ref[...] + sh_ref[...]
    o_ref[...] = jnp.maximum(v[:, :p3] + v[:, p3:], 0.0)


def residual_norm(y3ys, sc34, sh34, p3):
    m, c2 = y3ys.shape
    bytes_per_row = 2 * c2 + 4 * p3
    tile = _pick_row_tile(m, bytes_per_row)
    grid = (m // tile,)
    kernel = functools.partial(_residual_norm_kernel, p3=p3)
    return pl.pallas_call(
        kernel,
        grid=grid,
        in_specs=[pl.BlockSpec((tile, c2), lambda i: (i, 0)),
                  pl.BlockSpec((1, c2), lambda i: (0, 0)),
                  pl.BlockSpec((1, c2), lambda i: (0, 0))],
        out_specs=pl.BlockSpec((tile, p3), lambda i: (i, 0)),
        out_shape=jax.ShapeDtypeStruct((m, p3), jnp.float32),
        compiler_params=_compiler_params(),
    )(y3ys, sc34, sh34)


# ------------------------------- glue (JAX) --------------------------------


def bn_affine_from_stats(stats, count, gamma, beta):
    """Reduce per-tile (sum, sumsq) partials -> per-channel scale/shift (training-mode BN)."""
    total = jnp.sum(stats, axis=0)                           # (2, C)
    mean = total[0] / count
    var = jnp.maximum(total[1] / count - mean * mean, 0.0)   # biased var, single pass
    scale = gamma * jax.lax.rsqrt(var + EPS)
    shift = beta - mean * scale
    return scale[None, :], shift[None, :]                    # (1, C) each


def make_channel_perms(key, c, hw):
    keys = jax.random.split(key, c)
    return jax.vmap(lambda k: jax.random.permutation(k, hw))(keys)   # (C, HW)


def make_s2d_tables(perms, H, W):
    """Precompose per-channel shuffle + zero-pad + space-to-depth(2x2) into one gather table.
    Returns idx (T, C) int32 with T = hp2*wp2*4 ordered (i, j, g) (g = ph*2+pw fastest),
    and mask (T,) f32 that is 0 on zero-pad positions."""
    ho, wo = H // 2, W // 2
    hp2, wp2 = ho + 1, wo + 1
    g = jnp.arange(4)
    ph, pw = g // 2, g % 2
    ii = jnp.arange(hp2)
    jj = jnp.arange(wp2)
    r = 2 * ii[:, None, None] + ph[None, None, :] - 1        # (hp2, 1, 4)
    c = 2 * jj[None, :, None] + pw[None, None, :] - 1        # (1, wp2, 4)
    inb = (r >= 0) & (r < H) & (c >= 0) & (c < W)            # (hp2, wp2, 4)
    s = jnp.clip(r, 0, H - 1) * W + jnp.clip(c, 0, W - 1)    # (hp2, wp2, 4)
    s_flat = s.reshape(-1)
    idx = perms[:, s_flat].T.astype(jnp.int32)               # (T, C)
    mask = inb.reshape(-1).astype(jnp.float32)               # (T,)
    return idx, mask


def shortcut_gather(x_rows, perms, H, W):
    """Compose the per-channel shuffle with the stride-2 subsample of the 1x1 shortcut conv."""
    n, hw, c = x_rows.shape
    ho, wo = H // 2, W // 2
    ii = jnp.arange(ho) * 2
    jj = jnp.arange(wo) * 2
    coarse = (ii[:, None] * W + jj[None, :]).reshape(-1)       # (ho*wo,)
    sel = perms[:, coarse].astype(jnp.int32)                   # (C, ho*wo)
    idx = jnp.broadcast_to(sel.T[None], (n, ho * wo, c))
    return jnp.take_along_axis(x_rows, idx, axis=1)            # (N, ho*wo, C)


def init_params(key, inplanes, planes):
    p1, p2, p3 = planes
    k1, k2, k3, k4 = jax.random.split(key, 4)

    def kaiming(k, shape, fan_in):
        return jax.random.normal(k, shape, jnp.float32) * jnp.sqrt(2.0 / fan_in)

    # conv1: 1x1 (p1, inplanes) -> matmul (inplanes, p1)
    w1 = kaiming(k1, (inplanes, p1), inplanes).astype(jnp.bfloat16)

    # dconv1.conv: torch weight (p2, p1, 3, 3), packed for 4 shift-grouped matmuls:
    # w2p[s, g*p1+c, co] = W[co, c, 2*oh+ph, 2*ow+pw] for s=(oh,ow), g=(ph,pw);
    # zero when the tap falls outside the 3x3 kernel.
    w2_t = kaiming(k2, (p2, p1, 3, 3), p1 * 9)
    shifts = []
    for oh in range(2):
        for ow in range(2):
            blocks = []
            for ph in range(2):
                for pw in range(2):
                    kh, kw = 2 * oh + ph, 2 * ow + pw
                    if kh < 3 and kw < 3:
                        blocks.append(jnp.transpose(w2_t[:, :, kh, kw]))   # (p1, p2)
                    else:
                        blocks.append(jnp.zeros((p1, p2), jnp.float32))
            shifts.append(jnp.concatenate(blocks, axis=0))                 # (4*p1, p2)
    w2p = jnp.stack(shifts, axis=0).astype(jnp.bfloat16)                   # (4, 4*p1, p2)

    # conv3: 1x1 -> (p2, p3); dconv2.conv: 1x1 stride 2 -> (inplanes, p3)
    w3 = kaiming(k3, (p2, p3), p2).astype(jnp.bfloat16)
    ws = kaiming(k4, (inplanes, p3), inplanes).astype(jnp.bfloat16)

    def bn(c):  # PyTorch default init: gamma=1, beta=0
        return jnp.ones((c,), jnp.float32), jnp.zeros((c,), jnp.float32)

    g1, b1 = bn(p1)
    g2, b2 = bn(p2)
    g3, b3 = bn(p3)
    g4, b4 = bn(p3)
    return dict(w1=w1, w2p=w2p, w3=w3, ws=ws,
                g1=g1, b1=b1, g2=g2, b2=b2, g3=g3, b3=b3, g4=g4, b4=b4)


def bottleneck_shuffle_forward(x_nchw, params, shuffle_key):
    n, cin, H, W = x_nchw.shape
    assert H % 2 == 0 and W % 2 == 0
    ho, wo = H // 2, W // 2
    hp2, wp2 = ho + 1, wo + 1
    hw = H * W
    k1, k2 = jax.random.split(shuffle_key, 2)

    p1 = params["w1"].shape[1]
    p3 = params["w3"].shape[1]

    x_rows = jnp.transpose(x_nchw, (0, 2, 3, 1)).reshape(n, hw, cin).astype(jnp.bfloat16)

    # ---- conv1 (1x1) + BN1 streaming stats  [Pallas K1, bf16 out] ----
    y1, st1 = matmul_stats(x_rows.reshape(n * hw, cin), params["w1"])
    sc1, sh1 = bn_affine_from_stats(st1, n * hw, params["g1"], params["b1"])

    # ---- single combined gather: shuffle ∘ pad ∘ space-to-depth, with BN1+ReLU folded in
    #      before the pad mask (pad zeros stay exact zeros) ----
    perms1 = make_channel_perms(k1, p1, hw)
    idx_tbl, mask = make_s2d_tables(perms1, H, W)              # (T, p1), (T,)
    y1_3 = y1.reshape(n, hw, p1)
    gathered = jnp.take_along_axis(
        y1_3, jnp.broadcast_to(idx_tbl[None], (n, idx_tbl.shape[0], p1)), axis=1)
    act = jnp.maximum(gathered.astype(jnp.float32) * sc1 + sh1, 0.0) * mask[None, :, None]
    x_s2d = act.astype(jnp.bfloat16).reshape(n, hp2, wp2, 4 * p1)

    # ---- dconv1 (3x3, stride 2, pad 1) + BN2 stats  [Pallas K2, 4 grouped matmuls] ----
    y2, st2 = dconv3x3_s2_stats(x_s2d, params["w2p"], ho, wo)
    sc2, sh2 = bn_affine_from_stats(st2, n * ho * wo, params["g2"], params["b2"])

    # ---- shortcut input: shuffle composed with stride-2 subsample (one XLA gather) ----
    perms2 = make_channel_perms(k2, cin, hw)
    xs = shortcut_gather(x_rows, perms2, H, W).reshape(n * ho * wo, cin)

    # ---- conv3 + shortcut conv, BN2 normalize fused, BN3/BN4 stats  [Pallas K3] ----
    y3ys, st34 = conv3_and_shortcut(y2, sc2, sh2, xs, params["w3"], params["ws"])
    sc3, sh3 = bn_affine_from_stats(st34[:, :, :p3], n * ho * wo, params["g3"], params["b3"])
    sc4, sh4 = bn_affine_from_stats(st34[:, :, p3:], n * ho * wo, params["g4"], params["b4"])

    # ---- BN3 + BN4 + residual add + ReLU  [Pallas K4, concatenated streams] ----
    sc34 = jnp.concatenate([sc3, sc4], axis=1)
    sh34 = jnp.concatenate([sh3, sh4], axis=1)
    out = residual_norm(y3ys, sc34, sh34, p3)
    out = out.reshape(n, ho, wo, p3)
    return jnp.transpose(out, (0, 3, 1, 2))  # back to NCHW


if __name__ == "__main__":
    key = jax.random.PRNGKey(0)
    k_x, k_p, k_shuffle = jax.random.split(key, 3)

    # Small shapes consistent with the module: NCHW input, bottleneck planes, stride-2 downsample.
    N, inplanes, H, W = 2, 16, 16, 16
    planes = (8, 8, 16)                       # (plane1, plane2, plane3)
    x = jax.random.normal(k_x, (N, inplanes, H, W), jnp.float32)

    params = init_params(k_p, inplanes, planes)
    fwd = jax.jit(bottleneck_shuffle_forward)
    out = jax.block_until_ready(fwd(x, params, k_shuffle))

    assert out.shape == (N, planes[2], H // 2, W // 2), out.shape
    assert bool(jnp.all(jnp.isfinite(out)))
    print("KERNEL_OK")
</pallas_src>

<mosaic_0001>
module attributes {stable_mosaic.version = 11 : i64} {
  func.func private @main(%arg0: i32) attributes {dimension_semantics = [#tpu.dimension_semantics<core_parallel>], iteration_bounds = array<i64: 2>, tpu.core_type = #tpu.core_type<sc_scalar_subcore>, window_params = []} {
    return
  }
}

module attributes {stable_mosaic.version = 11 : i64} {
  func.func private @main(%arg0: i32) attributes {dimension_semantics = [#tpu.dimension_semantics<core_parallel>], iteration_bounds = array<i64: 2>, tpu.core_type = #tpu.core_type<sc_scalar_subcore>, window_params = []} {
    return
  }
}

module attributes {stable_mosaic.version = 11 : i64} {
  func.func @_matmul_stats_kernel(%arg0: i32, %arg1: memref<256x16xbf16, #tpu.memory_space<vmem>>, %arg2: memref<16x8xbf16, #tpu.memory_space<vmem>>, %arg3: memref<256x8xbf16, #tpu.memory_space<vmem>>, %arg4: memref<1x2x8xf32, #tpu.memory_space<vmem>>) attributes {dimension_semantics = [#tpu.dimension_semantics<parallel>], iteration_bounds = array<i64: 2>, scalar_prefetch = 0 : i64, scratch_operands = 0 : i64, tpu.core_type = #tpu.core_type<tc>, window_params = [{transform_indices = @transform_0, window_bounds = array<i64: 256, 16>}, {pipeline_mode = #tpu.pipeline_mode<synchronous>, transform_indices = @transform_1, window_bounds = array<i64: 16, 8>}, {transform_indices = @transform_2, window_bounds = array<i64: 256, 8>}, {transform_indices = @transform_3, window_bounds = array<i64: 1, 2, 8>}]} {
    %c0 = arith.constant 0 : index
    %c0_0 = arith.constant 0 : index
    %0 = vector.load %arg1[%c0, %c0_0] : memref<256x16xbf16, #tpu.memory_space<vmem>>, vector<256x16xbf16>
    %c0_1 = arith.constant 0 : index
    %c0_2 = arith.constant 0 : index
    %1 = vector.load %arg2[%c0_1, %c0_2] : memref<16x8xbf16, #tpu.memory_space<vmem>>, vector<16x8xbf16>
    %cst = arith.constant dense<0.000000e+00> : vector<256x8xf32>
    %2 = tpu.matmul %0, %1, %cst {dimension_numbers = #tpu.dot_dimension_numbers<[1], [0], [0], [1], [0, 0, 1, 1], [], []>} : vector<256x16xbf16>, vector<16x8xbf16>, vector<256x8xf32> -> vector<256x8xf32>
    %3 = arith.truncf %2 : vector<256x8xf32> to vector<256x8xbf16>
    %c0_3 = arith.constant 0 : index
    %c0_4 = arith.constant 0 : index
    %4 = vector.load %arg3[%c0_3, %c0_4] : memref<256x8xbf16, #tpu.memory_space<vmem>>, vector<256x8xbf16>
    tpu.vector_store %arg3[%c0_3, %c0_4], %3 {strides = array<i32>} : memref<256x8xbf16, #tpu.memory_space<vmem>>, vector<256x8xbf16>,
    %cst_5 = arith.constant dense<0.000000e+00> : vector<8xf32>
    %5 = vector.multi_reduction <add>, %2, %cst_5 [0] : vector<256x8xf32> to vector<8xf32>
    %6 = vector.shape_cast %5 : vector<8xf32> to vector<1x8xf32>
    %7 = arith.mulf %2, %2 : vector<256x8xf32>
    %cst_6 = arith.constant dense<0.000000e+00> : vector<8xf32>
    %8 = vector.multi_reduction <add>, %7, %cst_6 [0] : vector<256x8xf32> to vector<8xf32>
    %9 = vector.shape_cast %8 : vector<8xf32> to vector<1x8xf32>
    %10 = tpu.concatenate %6, %9 in 0 : vector<1x8xf32>, vector<1x8xf32> -> vector<2x8xf32>
    %11 = vector.shape_cast %10 : vector<2x8xf32> to vector<1x2x8xf32>
    %c0_7 = arith.constant 0 : index
    %c0_8 = arith.constant 0 : index
    %c0_9 = arith.constant 0 : index
    %12 = vector.load %arg4[%c0_7, %c0_8, %c0_9] : memref<1x2x8xf32, #tpu.memory_space<vmem>>, vector<1x2x8xf32>
    tpu.vector_store %arg4[%c0_7, %c0_8, %c0_9], %11 {strides = array<i32>} : memref<1x2x8xf32, #tpu.memory_space<vmem>>, vector<1x2x8xf32>,
    return
  }
  func.func @transform_0(%arg0: i32) -> (i32, i32) {
    %c0_i32 = arith.constant 0 : i32
    %c0_i32_0 = arith.constant 0 : i32
    return %arg0, %c0_i32 : i32, i32
  }
  func.func @transform_1(%arg0: i32) -> (i32, i32) {
    %c0_i32 = arith.constant 0 : i32
    %c0_i32_0 = arith.constant 0 : i32
    %c0_i32_1 = arith.constant 0 : i32
    return %c0_i32, %c0_i32_0 : i32, i32
  }
  func.func @transform_2(%arg0: i32) -> (i32, i32) {
    %c0_i32 = arith.constant 0 : i32
    %c0_i32_0 = arith.constant 0 : i32
    return %arg0, %c0_i32 : i32, i32
  }
  func.func @transform_3(%arg0: i32) -> (i32, i32, i32) {
    %c0_i32 = arith.constant 0 : i32
    %c0_i32_0 = arith.constant 0 : i32
    %c0_i32_1 = arith.constant 0 : i32
    return %arg0, %c0_i32, %c0_i32_0 : i32, i32, i32
  }
}

module attributes {stable_mosaic.version = 11 : i64} {
  func.func @_dconv3x3_stats_kernel(%arg0: i32, %arg1: memref<1x9x9x32xbf16, #tpu.memory_space<vmem>>, %arg2: memref<4x32x8xbf16, #tpu.memory_space<vmem>>, %arg3: memref<64x8xbf16, #tpu.memory_space<vmem>>, %arg4: memref<1x2x8xf32, #tpu.memory_space<vmem>>) attributes {dimension_semantics = [#tpu.dimension_semantics<parallel>], iteration_bounds = array<i64: 2>, scalar_prefetch = 0 : i64, scratch_operands = 0 : i64, tpu.core_type = #tpu.core_type<tc>, window_params = [{transform_indices = @transform_0, window_bounds = array<i64: 1, 9, 9, 32>}, {pipeline_mode = #tpu.pipeline_mode<synchronous>, transform_indices = @transform_1, window_bounds = array<i64: 4, 32, 8>}, {transform_indices = @transform_2, window_bounds = array<i64: 64, 8>}, {transform_indices = @transform_3, window_bounds = array<i64: 1, 2, 8>}]} {
    %cst = arith.constant 0.000000e+00 : f32
    %0 = vector.broadcast %cst : f32 to vector<64x8xf32>
    %c0 = arith.constant 0 : index
    %c0_0 = arith.constant 0 : index
    %c0_1 = arith.constant 0 : index
    %c0_2 = arith.constant 0 : index
    %1 = vector.load %arg1[%c0, %c0_0, %c0_1, %c0_2] : memref<1x9x9x32xbf16, #tpu.memory_space<vmem>>, vector<1x8x8x32xbf16>
    %2 = vector.shape_cast %1 : vector<1x8x8x32xbf16> to vector<64x32xbf16>
    %c0_3 = arith.constant 0 : index
    %c0_4 = arith.constant 0 : index
    %c0_5 = arith.constant 0 : index
    %3 = vector.load %arg2[%c0_3, %c0_4, %c0_5] : memref<4x32x8xbf16, #tpu.memory_space<vmem>>, vector<1x32x8xbf16>
    %4 = vector.shape_cast %3 : vector<1x32x8xbf16> to vector<32x8xbf16>
    %cst_6 = arith.constant dense<0.000000e+00> : vector<64x8xf32>
    %5 = tpu.matmul %2, %4, %cst_6 {dimension_numbers = #tpu.dot_dimension_numbers<[1], [0], [0], [1], [0, 0, 1, 1], [], []>} : vector<64x32xbf16>, vector<32x8xbf16>, vector<64x8xf32> -> vector<64x8xf32>
    %6 = arith.addf %0, %5 : vector<64x8xf32>
    %c0_7 = arith.constant 0 : index
    %c0_8 = arith.constant 0 : index
    %c1 = arith.constant 1 : index
    %c0_9 = arith.constant 0 : index
    %7 = vector.load %arg1[%c0_7, %c0_8, %c1, %c0_9] : memref<1x9x9x32xbf16, #tpu.memory_space<vmem>>, vector<1x8x8x32xbf16>
    %8 = vector.shape_cast %7 : vector<1x8x8x32xbf16> to vector<64x32xbf16>
    %c1_10 = arith.constant 1 : index
    %c0_11 = arith.constant 0 : index
    %c0_12 = arith.constant 0 : index
    %9 = vector.load %arg2[%c1_10, %c0_11, %c0_12] : memref<4x32x8xbf16, #tpu.memory_space<vmem>>, vector<1x32x8xbf16>
    %10 = vector.shape_cast %9 : vector<1x32x8xbf16> to vector<32x8xbf16>
    %cst_13 = arith.constant dense<0.000000e+00> : vector<64x8xf32>
    %11 = tpu.matmul %8, %10, %cst_13 {dimension_numbers = #tpu.dot_dimension_numbers<[1], [0], [0], [1], [0, 0, 1, 1], [], []>} : vector<64x32xbf16>, vector<32x8xbf16>, vector<64x8xf32> -> vector<64x8xf32>
    %12 = arith.addf %6, %11 : vector<64x8xf32>
    %c0_14 = arith.constant 0 : index
    %c1_15 = arith.constant 1 : index
    %c0_16 = arith.constant 0 : index
    %c0_17 = arith.constant 0 : index
    %13 = vector.load %arg1[%c0_14, %c1_15, %c0_16, %c0_17] : memref<1x9x9x32xbf16, #tpu.memory_space<vmem>>, vector<1x8x8x32xbf16>
    %14 = vector.shape_cast %13 : vector<1x8x8x32xbf16> to vector<64x32xbf16>
    %c2 = arith.constant 2 : index
    %c0_18 = arith.constant 0 : index
    %c0_19 = arith.constant 0 : index
    %15 = vector.load %arg2[%c2, %c0_18, %c0_19] : memref<4x32x8xbf16, #tpu.memory_space<vmem>>, vector<1x32x8xbf16>
    %16 = vector.shape_cast %15 : vector<1x32x8xbf16> to vector<32x8xbf16>
    %cst_20 = arith.constant dense<0.000000e+00> : vector<64x8xf32>
    %17 = tpu.matmul %14, %16, %cst_20 {dimension_numbers = #tpu.dot_dimension_numbers<[1], [0], [0], [1], [0, 0, 1, 1], [], []>} : vector<64x32xbf16>, vector<32x8xbf16>, vector<64x8xf32> -> vector<64x8xf32>
    %18 = arith.addf %12, %17 : vector<64x8xf32>
    %c0_21 = arith.constant 0 : index
    %c1_22 = arith.constant 1 : index
    %c1_23 = arith.constant 1 : index
    %c0_24 = arith.constant 0 : index
    %19 = vector.load %arg1[%c0_21, %c1_22, %c1_23, %c0_24] : memref<1x9x9x32xbf16, #tpu.memory_space<vmem>>, vector<1x8x8x32xbf16>
    %20 = vector.shape_cast %19 : vector<1x8x8x32xbf16> to vector<64x32xbf16>
    %c3 = arith.constant 3 : index
    %c0_25 = arith.constant 0 : index
    %c0_26 = arith.constant 0 : index
    %21 = vector.load %arg2[%c3, %c0_25, %c0_26] : memref<4x32x8xbf16, #tpu.memory_space<vmem>>, vector<1x32x8xbf16>
    %22 = vector.shape_cast %21 : vector<1x32x8xbf16> to vector<32x8xbf16>
    %cst_27 = arith.constant dense<0.000000e+00> : vector<64x8xf32>
    %23 = tpu.matmul %20, %22, %cst_27 {dimension_numbers = #tpu.dot_dimension_numbers<[1], [0], [0], [1], [0, 0, 1, 1], [], []>} : vector<64x32xbf16>, vector<32x8xbf16>, vector<64x8xf32> -> vector<64x8xf32>
    %24 = arith.addf %18, %23 : vector<64x8xf32>
    %25 = arith.truncf %24 : vector<64x8xf32> to vector<64x8xbf16>
    %c0_28 = arith.constant 0 : index
    %c0_29 = arith.constant 0 : index
    %26 = vector.load %arg3[%c0_28, %c0_29] : memref<64x8xbf16, #tpu.memory_space<vmem>>, vector<64x8xbf16>
    tpu.vector_store %arg3[%c0_28, %c0_29], %25 {strides = array<i32>} : memref<64x8xbf16, #tpu.memory_space<vmem>>, vector<64x8xbf16>,
    %cst_30 = arith.constant dense<0.000000e+00> : vector<8xf32>
    %27 = vector.multi_reduction <add>, %24, %cst_30 [0] : vector<64x8xf32> to vector<8xf32>
    %28 = vector.shape_cast %27 : vector<8xf32> to vector<1x8xf32>
    %29 = arith.mulf %24, %24 : vector<64x8xf32>
    %cst_31 = arith.constant dense<0.000000e+00> : vector<8xf32>
    %30 = vector.multi_reduction <add>, %29, %cst_31 [0] : vector<64x8xf32> to vector<8xf32>
    %31 = vector.shape_cast %30 : vector<8xf32> to vector<1x8xf32>
    %32 = tpu.concatenate %28, %31 in 0 : vector<1x8xf32>, vector<1x8xf32> -> vector<2x8xf32>
    %33 = vector.shape_cast %32 : vector<2x8xf32> to vector<1x2x8xf32>
    %c0_32 = arith.constant 0 : index
    %c0_33 = arith.constant 0 : index
    %c0_34 = arith.constant 0 : index
    %34 = vector.load %arg4[%c0_32, %c0_33, %c0_34] : memref<1x2x8xf32, #tpu.memory_space<vmem>>, vector<1x2x8xf32>
    tpu.vector_store %arg4[%c0_32, %c0_33, %c0_34], %33 {strides = array<i32>} : memref<1x2x8xf32, #tpu.memory_space<vmem>>, vector<1x2x8xf32>,
    return
  }
  func.func @transform_0(%arg0: i32) -> (i32, i32, i32, i32) {
    %c0_i32 = arith.constant 0 : i32
    %c0_i32_0 = arith.constant 0 : i32
    %c0_i32_1 = arith.constant 0 : i32
    %c0_i32_2 = arith.constant 0 : i32
    return %arg0, %c0_i32, %c0_i32_0, %c0_i32_1 : i32, i32, i32, i32
  }
  func.func @transform_1(%arg0: i32) -> (i32, i32, i32) {
    %c0_i32 = arith.constant 0 : i32
    %c0_i32_0 = arith.constant 0 : i32
    %c0_i32_1 = arith.constant 0 : i32
    %c0_i32_2 = arith.constant 0 : i32
    return %c0_i32, %c0_i32_0, %c0_i32_1 : i32, i32, i32
  }
  func.func @transform_2(%arg0: i32) -> (i32, i32) {
    %c0_i32 = arith.constant 0 : i32
    %c0_i32_0 = arith.constant 0 : i32
    return %arg0, %c0_i32 : i32, i32
  }
  func.func @transform_3(%arg0: i32) -> (i32, i32, i32) {
    %c0_i32 = arith.constant 0 : i32
    %c0_i32_0 = arith.constant 0 : i32
    %c0_i32_1 = arith.constant 0 : i32
    return %arg0, %c0_i32, %c0_i32_0 : i32, i32, i32
  }
}

module attributes {stable_mosaic.version = 11 : i64} {
  func.func @_dual_matmul_stats_kernel(%arg0: i32, %arg1: memref<64x8xbf16, #tpu.memory_space<vmem>>, %arg2: memref<1x8xf32, #tpu.memory_space<vmem>>, %arg3: memref<1x8xf32, #tpu.memory_space<vmem>>, %arg4: memref<64x16xbf16, #tpu.memory_space<vmem>>, %arg5: memref<8x16xbf16, #tpu.memory_space<vmem>>, %arg6: memref<16x16xbf16, #tpu.memory_space<vmem>>, %arg7: memref<64x32xbf16, #tpu.memory_space<vmem>>, %arg8: memref<1x2x32xf32, #tpu.memory_space<vmem>>) attributes {dimension_semantics = [#tpu.dimension_semantics<parallel>], iteration_bounds = array<i64: 2>, scalar_prefetch = 0 : i64, scratch_operands = 0 : i64, tpu.core_type = #tpu.core_type<tc>, window_params = [{transform_indices = @transform_0, window_bounds = array<i64: 64, 8>}, {pipeline_mode = #tpu.pipeline_mode<synchronous>, transform_indices = @transform_1, window_bounds = array<i64: 1, 8>}, {pipeline_mode = #tpu.pipeline_mode<synchronous>, transform_indices = @transform_2, window_bounds = array<i64: 1, 8>}, {transform_indices = @transform_3, window_bounds = array<i64: 64, 16>}, {pipeline_mode = #tpu.pipeline_mode<synchronous>, transform_indices = @transform_4, window_bounds = array<i64: 8, 16>}, {pipeline_mode = #tpu.pipeline_mode<synchronous>, transform_indices = @transform_5, window_bounds = array<i64: 16, 16>}, {transform_indices = @transform_6, window_bounds = array<i64: 64, 32>}, {transform_indices = @transform_7, window_bounds = array<i64: 1, 2, 32>}]} {
    %c0 = arith.constant 0 : index
    %c0_0 = arith.constant 0 : index
    %0 = vector.load %arg1[%c0, %c0_0] : memref<64x8xbf16, #tpu.memory_space<vmem>>, vector<64x8xbf16>
    %1 = arith.extf %0 : vector<64x8xbf16> to vector<64x8xf32>
    %c0_1 = arith.constant 0 : index
    %c0_2 = arith.constant 0 : index
    %2 = vector.load %arg2[%c0_1, %c0_2] : memref<1x8xf32, #tpu.memory_space<vmem>>, vector<1x8xf32>
    %3 = vector.broadcast %2 : vector<1x8xf32> to vector<64x8xf32>
    %4 = arith.mulf %1, %3 : vector<64x8xf32>
    %c0_3 = arith.constant 0 : index
    %c0_4 = arith.constant 0 : index
    %5 = vector.load %arg3[%c0_3, %c0_4] : memref<1x8xf32, #tpu.memory_space<vmem>>, vector<1x8xf32>
    %6 = vector.broadcast %5 : vector<1x8xf32> to vector<64x8xf32>
    %7 = arith.addf %4, %6 : vector<64x8xf32>
    %cst = arith.constant 0.000000e+00 : f32
    %8 = vector.broadcast %cst : f32 to vector<64x8xf32>
    %9 = arith.maximumf %7, %8 : vector<64x8xf32>
    %10 = arith.truncf %9 : vector<64x8xf32> to vector<64x8xbf16>
    %c0_5 = arith.constant 0 : index
    %c0_6 = arith.constant 0 : index
    %11 = vector.load %arg5[%c0_5, %c0_6] : memref<8x16xbf16, #tpu.memory_space<vmem>>, vector<8x16xbf16>
    %cst_7 = arith.constant dense<0.000000e+00> : vector<64x16xf32>
    %12 = tpu.matmul %10, %11, %cst_7 {dimension_numbers = #tpu.dot_dimension_numbers<[1], [0], [0], [1], [0, 0, 1, 1], [], []>} : vector<64x8xbf16>, vector<8x16xbf16>, vector<64x16xf32> -> vector<64x16xf32>
    %c0_8 = arith.constant 0 : index
    %c0_9 = arith.constant 0 : index
    %13 = vector.load %arg4[%c0_8, %c0_9] : memref<64x16xbf16, #tpu.memory_space<vmem>>, vector<64x16xbf16>
    %c0_10 = arith.constant 0 : index
    %c0_11 = arith.constant 0 : index
    %14 = vector.load %arg6[%c0_10, %c0_11] : memref<16x16xbf16, #tpu.memory_space<vmem>>, vector<16x16xbf16>
    %cst_12 = arith.constant dense<0.000000e+00> : vector<64x16xf32>
    %15 = tpu.matmul %13, %14, %cst_12 {dimension_numbers = #tpu.dot_dimension_numbers<[1], [0], [0], [1], [0, 0, 1, 1], [], []>} : vector<64x16xbf16>, vector<16x16xbf16>, vector<64x16xf32> -> vector<64x16xf32>
    %16 = tpu.concatenate %12, %15 in 1 : vector<64x16xf32>, vector<64x16xf32> -> vector<64x32xf32>
    %17 = arith.truncf %16 : vector<64x32xf32> to vector<64x32xbf16>
    %c0_13 = arith.constant 0 : index
    %c0_14 = arith.constant 0 : index
    %18 = vector.load %arg7[%c0_13, %c0_14] : memref<64x32xbf16, #tpu.memory_space<vmem>>, vector<64x32xbf16>
    tpu.vector_store %arg7[%c0_13, %c0_14], %17 {strides = array<i32>} : memref<64x32xbf16, #tpu.memory_space<vmem>>, vector<64x32xbf16>,
    %cst_15 = arith.constant dense<0.000000e+00> : vector<32xf32>
    %19 = vector.multi_reduction <add>, %16, %cst_15 [0] : vector<64x32xf32> to vector<32xf32>
    %20 = vector.shape_cast %19 : vector<32xf32> to vector<1x32xf32>
    %21 = arith.mulf %16, %16 : vector<64x32xf32>
    %cst_16 = arith.constant dense<0.000000e+00> : vector<32xf32>
    %22 = vector.multi_reduction <add>, %21, %cst_16 [0] : vector<64x32xf32> to vector<32xf32>
    %23 = vector.shape_cast %22 : vector<32xf32> to vector<1x32xf32>
    %24 = tpu.concatenate %20, %23 in 0 : vector<1x32xf32>, vector<1x32xf32> -> vector<2x32xf32>
    %25 = vector.shape_cast %24 : vector<2x32xf32> to vector<1x2x32xf32>
    %c0_17 = arith.constant 0 : index
    %c0_18 = arith.constant 0 : index
    %c0_19 = arith.constant 0 : index
    %26 = vector.load %arg8[%c0_17, %c0_18, %c0_19] : memref<1x2x32xf32, #tpu.memory_space<vmem>>, vector<1x2x32xf32>
    tpu.vector_store %arg8[%c0_17, %c0_18, %c0_19], %25 {strides = array<i32>} : memref<1x2x32xf32, #tpu.memory_space<vmem>>, vector<1x2x32xf32>,
    return
  }
  func.func @transform_0(%arg0: i32) -> (i32, i32) {
    %c0_i32 = arith.constant 0 : i32
    %c0_i32_0 = arith.constant 0 : i32
    return %arg0, %c0_i32 : i32, i32
  }
  func.func @transform_1(%arg0: i32) -> (i32, i32) {
    %c0_i32 = arith.constant 0 : i32
    %c0_i32_0 = arith.constant 0 : i32
    %c0_i32_1 = arith.constant 0 : i32
    return %c0_i32, %c0_i32_0 : i32, i32
  }
  func.func @transform_2(%arg0: i32) -> (i32, i32) {
    %c0_i32 = arith.constant 0 : i32
    %c0_i32_0 = arith.constant 0 : i32
    %c0_i32_1 = arith.constant 0 : i32
    return %c0_i32, %c0_i32_0 : i32, i32
  }
  func.func @transform_3(%arg0: i32) -> (i32, i32) {
    %c0_i32 = arith.constant 0 : i32
    %c0_i32_0 = arith.constant 0 : i32
    return %arg0, %c0_i32 : i32, i32
  }
  func.func @transform_4(%arg0: i32) -> (i32, i32) {
    %c0_i32 = arith.constant 0 : i32
    %c0_i32_0 = arith.constant 0 : i32
    %c0_i32_1 = arith.constant 0 : i32
    return %c0_i32, %c0_i32_0 : i32, i32
  }
  func.func @transform_5(%arg0: i32) -> (i32, i32) {
    %c0_i32 = arith.constant 0 : i32
    %c0_i32_0 = arith.constant 0 : i32
    %c0_i32_1 = arith.constant 0 : i32
    return %c0_i32, %c0_i32_0 : i32, i32
  }
  func.func @transform_6(%arg0: i32) -> (i32, i32) {
    %c0_i32 = arith.constant 0 : i32
    %c0_i32_0 = arith.constant 0 : i32
    return %arg0, %c0_i32 : i32, i32
  }
  func.func @transform_7(%arg0: i32) -> (i32, i32, i32) {
    %c0_i32 = arith.constant 0 : i32
    %c0_i32_0 = arith.constant 0 : i32
    %c0_i32_1 = arith.constant 0 : i32
    return %arg0, %c0_i32, %c0_i32_0 : i32, i32, i32
  }
}

module attributes {stable_mosaic.version = 11 : i64} {
  func.func @_residual_norm_kernel(%arg0: i32, %arg1: memref<64x32xbf16, #tpu.memory_space<vmem>>, %arg2: memref<1x32xf32, #tpu.memory_space<vmem>>, %arg3: memref<1x32xf32, #tpu.memory_space<vmem>>, %arg4: memref<64x16xf32, #tpu.memory_space<vmem>>) attributes {dimension_semantics = [#tpu.dimension_semantics<parallel>], iteration_bounds = array<i64: 2>, scalar_prefetch = 0 : i64, scratch_operands = 0 : i64, tpu.core_type = #tpu.core_type<tc>, window_params = [{transform_indices = @transform_0, window_bounds = array<i64: 64, 32>}, {pipeline_mode = #tpu.pipeline_mode<synchronous>, transform_indices = @transform_1, window_bounds = array<i64: 1, 32>}, {pipeline_mode = #tpu.pipeline_mode<synchronous>, transform_indices = @transform_2, window_bounds = array<i64: 1, 32>}, {transform_indices = @transform_3, window_bounds = array<i64: 64, 16>}]} {
    %c0 = arith.constant 0 : index
    %c0_0 = arith.constant 0 : index
    %0 = vector.load %arg1[%c0, %c0_0] : memref<64x32xbf16, #tpu.memory_space<vmem>>, vector<64x32xbf16>
    %1 = arith.extf %0 : vector<64x32xbf16> to vector<64x32xf32>
    %c0_1 = arith.constant 0 : index
    %c0_2 = arith.constant 0 : index
    %2 = vector.load %arg2[%c0_1, %c0_2] : memref<1x32xf32, #tpu.memory_space<vmem>>, vector<1x32xf32>
    %3 = vector.broadcast %2 : vector<1x32xf32> to vector<64x32xf32>
    %4 = arith.mulf %1, %3 : vector<64x32xf32>
    %c0_3 = arith.constant 0 : index
    %c0_4 = arith.constant 0 : index
    %5 = vector.load %arg3[%c0_3, %c0_4] : memref<1x32xf32, #tpu.memory_space<vmem>>, vector<1x32xf32>
    %6 = vector.broadcast %5 : vector<1x32xf32> to vector<64x32xf32>
    %7 = arith.addf %4, %6 : vector<64x32xf32>
    %8 = vector.extract_strided_slice %7 {offsets = [0, 0], sizes = [64, 16], strides = [1, 1]} : vector<64x32xf32> to vector<64x16xf32>
    %9 = vector.extract_strided_slice %7 {offsets = [0, 16], sizes = [64, 16], strides = [1, 1]} : vector<64x32xf32> to vector<64x16xf32>
    %10 = arith.addf %8, %9 : vector<64x16xf32>
    %cst = arith.constant 0.000000e+00 : f32
    %11 = vector.broadcast %cst : f32 to vector<64x16xf32>
    %12 = arith.maximumf %10, %11 : vector<64x16xf32>
    %c0_5 = arith.constant 0 : index
    %c0_6 = arith.constant 0 : index
    %13 = vector.load %arg4[%c0_5, %c0_6] : memref<64x16xf32, #tpu.memory_space<vmem>>, vector<64x16xf32>
    tpu.vector_store %arg4[%c0_5, %c0_6], %12 {strides = array<i32>} : memref<64x16xf32, #tpu.memory_space<vmem>>, vector<64x16xf32>,
    return
  }
  func.func @transform_0(%arg0: i32) -> (i32, i32) {
    %c0_i32 = arith.constant 0 : i32
    %c0_i32_0 = arith.constant 0 : i32
    return %arg0, %c0_i32 : i32, i32
  }
  func.func @transform_1(%arg0: i32) -> (i32, i32) {
    %c0_i32 = arith.constant 0 : i32
    %c0_i32_0 = arith.constant 0 : i32
    %c0_i32_1 = arith.constant 0 : i32
    return %c0_i32, %c0_i32_0 : i32, i32
  }
  func.func @transform_2(%arg0: i32) -> (i32, i32) {
    %c0_i32 = arith.constant 0 : i32
    %c0_i32_0 = arith.constant 0 : i32
    %c0_i32_1 = arith.constant 0 : i32
    return %c0_i32, %c0_i32_0 : i32, i32
  }
  func.func @transform_3(%arg0: i32) -> (i32, i32) {
    %c0_i32 = arith.constant 0 : i32
    %c0_i32_0 = arith.constant 0 : i32
    return %arg0, %c0_i32 : i32, i32
  }
}

</mosaic_0001>

<llo_original>
// kernel: bottleneck_shuffle_forward.4
$region0: #{bottleneck_shuffle_forward.4}
  #allocation0 [shape = 'u32[]', space=smem, size = 0x4, offset = 0x4, fixed_abs, tag = 'smem constant byte address 0x4 - core index']
  #allocation1 [shape = 'u32[144,128]{1,0:T(1,128)}', space=vmem, size = 0x12000, scoped, tag = 'internal scratch']
  %s0 = inlined_call_operand.vmem [shape: bf16[512,16], index: 0, kind: input, shape index: {}]
  %s1 = inlined_call_operand.vmem [shape: bf16[16,8], index: 1, kind: input, shape index: {}]
  %s2 = inlined_call_operand.hbm [shape: bf16[512,8], index: 2, kind: output, shape index: {0}]
  %s3 = inlined_call_operand.vmem [shape: f32[2,2,8], index: 3, kind: output, shape index: {1}]
  %4 = xla_tuple %s2, %s3
  %s5 = sld [smem:[#allocation0]]
  $region49: #{bottleneck_shuffle_forward.4} parent=0
    _
  %s7 = ssub.s32 1, %s5
  %s8 = scalar_select 0, %s7, %s5
  $region1: #{bottleneck_shuffle_forward.4} parent=0
    #allocation2 [shape = 'u8[131072]{0}', space=vmem, size = 0x20000, scoped, tag = 'output window, operand 0']
    #allocation3 [shape = 's32[2]{0}', space=sflag, size = 0x8, scoped, tag = 'scoped memory for bottleneck_shuffle_forward.4']
    %9 = vsyncpa [#allocation3], 0
    %s10 = scalar_lea.sflag [#allocation3], 1
    %11 = vsyncpa %s10, 0
    loop: start=0, step=1, limit=4
    $region2: #{bottleneck_shuffle_forward.4} parent=1 // loop_pre_header
      _
    $region3: #{bottleneck_shuffle_forward.4} parent=1 // loop_header
      %s13 = sphi 0, %s17
      %p14 = scmp.ge.s32.totalorder %s13, 4
      %s23 = sphi 0, %s25
      %s26 = sphi 0, %s23
      %s27 = sphi 0, %s26
      %s43 = sphi 0, %s27
      %s47 = sphi 0, %s47
      %s49 = sphi 0, %s47
      %s50 = sphi 0, %s49
      %s64 = sphi 0, %s50
      %s70 = sphi 0, %s72
      %s73 = sphi 0, %s70
      %s74 = sphi 0, %s73
      %s90 = sphi 0, %s74
      %s96 = sphi 0, %s98
      %s99 = sphi 0, %s96
      %s100 = sphi 0, %s99
      %s116 = sphi 0, %s100
    $region4: #{bottleneck_shuffle_forward.4} parent=1 // loop_header_branch
      %16 = sbr.rel (%p14) target = $region8
    $region5: #{bottleneck_shuffle_forward.4} parent=1 // loop_body
      %s18 = ssub.s32 %s13, 1
      %s19 = ssub.s32 %s13, 2
      %s20 = sadd.s32 %s13, 1
      %s21 = ssub.s32 %s13, %s20
      %p22 = scmp.eq.s32.totalorder %s21, 0
      %s24 = sadd.s32 %s23, 1
      %s25 = scalar_select %p22, %s23, %s24
      %p28 = pneg %p22
      %p29 = scmp.eq.s32.totalorder %s13, 1
      %p30 = por %p28, %p29
      %p31 = scmp.ne.s32.totalorder %s23, %s26
      %p32 = scmp.eq.s32.totalorder %s13, 0
      %p33 = por %p31, %p32
      %p34 = scmp.ne.s32.totalorder %s23, %s26
      %p35 = scmp.eq.s32.totalorder %s18, 1
      %p36 = por %p34, %p35
      %p37 = scmp.ne.s32.totalorder %s26, %s27
      %p38 = scmp.eq.s32.totalorder %s18, 0
      %p39 = por %p37, %p38
      %p40 = scmp.ne.s32.totalorder %s26, %s27
      %p41 = scmp.eq.s32.totalorder %s19, 1
      %p42 = por %p40, %p41
      %p44 = scmp.ne.s32.totalorder %s27, %s43
      %p45 = scmp.eq.s32.totalorder %s19, 0
      %p46 = por %p44, %p45
      %s48 = sadd.s32 %s47, 1
      %p51 = scmp.eq.s32.totalorder %s13, 1
      %p52 = scmp.ne.s32.totalorder %s47, %s49
      %p53 = scmp.eq.s32.totalorder %s13, 0
      %p54 = por %p52, %p53
      %p55 = scmp.ne.s32.totalorder %s47, %s49
      %p56 = scmp.eq.s32.totalorder %s18, 1
      %p57 = por %p55, %p56
      %p58 = scmp.ne.s32.totalorder %s49, %s50
      %p59 = scmp.eq.s32.totalorder %s18, 0
      %p60 = por %p58, %p59
      %p61 = scmp.ne.s32.totalorder %s49, %s50
      %p62 = scmp.eq.s32.totalorder %s19, 1
      %p63 = por %p61, %p62
      %p65 = scmp.ne.s32.totalorder %s50, %s64
      %p66 = scmp.eq.s32.totalorder %s19, 0
      %p67 = por %p65, %p66
      %s68 = ssub.s32 %s13, %s20
      %p69 = scmp.eq.s32.totalorder %s68, 0
      %s71 = sadd.s32 %s70, 1
      %s72 = scalar_select %p69, %s70, %s71
      %p75 = pneg %p69
      %p76 = scmp.eq.s32.totalorder %s13, 1
      %p77 = por %p75, %p76
      %p78 = scmp.ne.s32.totalorder %s70, %s73
      %p79 = scmp.eq.s32.totalorder %s13, 0
      %p80 = por %p78, %p79
      %p81 = scmp.ne.s32.totalorder %s70, %s73
      %p82 = scmp.eq.s32.totalorder %s18, 1
      %p83 = por %p81, %p82
      %p84 = scmp.ne.s32.totalorder %s73, %s74
      %p85 = scmp.eq.s32.totalorder %s18, 0
      %p86 = por %p84, %p85
      %p87 = scmp.ne.s32.totalorder %s73, %s74
      %p88 = scmp.eq.s32.totalorder %s19, 1
      %p89 = por %p87, %p88
      %p91 = scmp.ne.s32.totalorder %s74, %s90
      %p92 = scmp.eq.s32.totalorder %s19, 0
      %p93 = por %p91, %p92
      %s94 = ssub.s32 %s13, %s20
      %p95 = scmp.eq.s32.totalorder %s94, 0
      %s97 = sadd.s32 %s96, 1
      %s98 = scalar_select %p95, %s96, %s97
      %p101 = pneg %p95
      %p102 = scmp.eq.s32.totalorder %s13, 1
      %p103 = por %p101, %p102
      %p104 = scmp.ne.s32.totalorder %s96, %s99
      %p105 = scmp.eq.s32.totalorder %s13, 0
      %p106 = por %p104, %p105
      %p107 = scmp.ne.s32.totalorder %s96, %s99
      %p108 = scmp.eq.s32.totalorder %s18, 1
      %p109 = por %p107, %p108
      %p110 = scmp.ne.s32.totalorder %s99, %s100
      %p111 = scmp.eq.s32.totalorder %s18, 0
      %p112 = por %p110, %p111
      %p113 = scmp.ne.s32.totalorder %s99, %s100
      %p114 = scmp.eq.s32.totalorder %s19, 1
      %p115 = por %p113, %p114
      %p117 = scmp.ne.s32.totalorder %s100, %s116
      %p118 = scmp.eq.s32.totalorder %s19, 0
      %p119 = por %p117, %p118
      %p120 = scmp.le.s32.totalorder 1, %s13
      %p121 = scmp.lt.s32.totalorder %s13, 3
      %p122 = pnand %p120, %p121
      %p123 = pneg %p122
      // Predicated region
      $region9: #{bottleneck_shuffle_forward.4} parent=5 // pred_check
        _
      $region10: #{bottleneck_shuffle_forward.4} parent=5 // pred_check_branch
        %125 = sbr.rel (%p122) target = $region12
      $region11: #{bottleneck_shuffle_forward.4} parent=5 // pred_region
        %s126 = ssub.s32 %s13, 1
        // Predicated region
        $region13: #{bottleneck_shuffle_forward.4} parent=11 // pred_check
          %p127 = pneg %p60
        $region14: #{bottleneck_shuffle_forward.4} parent=11 // pred_check_branch
          %129 = sbr.rel (%p127) target = $region16
        $region15: #{bottleneck_shuffle_forward.4} parent=11 // pred_region
          _
        $region16: #{bottleneck_shuffle_forward.4} parent=11 // pred_fallthru
          _
      $region12: #{bottleneck_shuffle_forward.4} parent=5 // pred_fallthru
        _
      %p130 = scmp.lt.s32.totalorder %s13, 2
      // Predicated region
      $region17: #{bottleneck_shuffle_forward.4} parent=5 // pred_check
        %p131 = pneg %p130
      $region18: #{bottleneck_shuffle_forward.4} parent=5 // pred_check_branch
        %133 = sbr.rel (%p131) target = $region20
      $region19: #{bottleneck_shuffle_forward.4} parent=5 // pred_region
        // Predicated region
        $region21: #{bottleneck_shuffle_forward.4} parent=19 // pred_check
          %p134 = pneg %p33
        $region22: #{bottleneck_shuffle_forward.4} parent=19 // pred_check_branch
          %136 = sbr.rel (%p134) target = $region24
        $region23: #{bottleneck_shuffle_forward.4} parent=19 // pred_region
          %s137 = smul.u32 32, %s13
          %p138 = scmp.lt.s32.totalorder %s137, 63
          %s139 = scalar_select %p138, %s137, 63
          %s140 = smul.addr %s139, 4
          %s141 = scalar_lea.vmem %s0, %s140
          %s142 = smul.u32 32, %s13
        $region24: #{bottleneck_shuffle_forward.4} parent=19 // pred_fallthru
          _
      $region20: #{bottleneck_shuffle_forward.4} parent=5 // pred_fallthru
        _
      %p143 = scmp.le.s32.totalorder 1, %s13
      %p144 = scmp.lt.s32.totalorder %s13, 3
      %p145 = pnand %p143, %p144
      %p146 = pneg %p145
      // Predicated region
      $region25: #{bottleneck_shuffle_forward.4} parent=5 // pred_check
        _
      $region26: #{bottleneck_shuffle_forward.4} parent=5 // pred_check_branch
        %148 = sbr.rel (%p145) target = $region28
      $region27: #{bottleneck_shuffle_forward.4} parent=5 // pred_region
        %s149 = ssub.s32 %s13, 1
        %s150 = smul.u32 32, %s18
        %p151 = scmp.lt.s32.totalorder %s150, 63
        %s152 = scalar_select %p151, %s150, 63
        %s153 = smul.addr %s152, 4
        %s154 = scalar_lea.vmem %s0, %s153
        %p155 = pneg %p39
        %p156 = pneg %p36
        %p157 = pneg %p60
        %p158 = pneg %p57
        %p159 = pneg %p86
        %p160 = pneg %p83
        %s161 = sand.u32 %s73, 1
        %s162 = scalar_lea.sflag [#allocation3], %s161
        %s163 = sand.u32 %s73, 1
        %s164 = smul.addr %s163, 128
        %s165 = scalar_lea.vmem [#allocation2], %s164
        %p166 = pneg %p112
        %p167 = pneg %p109
        %p168 = scmp.lt.s32.totalorder %s18, 1
        %s169 = scalar_select %p168, %s18, 1
        %s170 = smul.addr %s169, 2
        %s171 = scalar_lea.vmem %s3, %s170
        %s172 = smul.u32 32, %s18
        %p173 = scmp.lt.s32.totalorder %s172, 63
        %s174 = scalar_select %p173, %s172, 63
        %s175 = smul.addr %s174, 4
        %s176 = scalar_lea.vmem %s0, %s175
        %s177 = smul.u32 32, %s18
        %s178 = smul.u32 32, %s18
        %p179 = scmp.lt.s32.totalorder %s18, 1
        %s180 = scalar_select %p179, %s18, 1
        %s181 = smul.addr %s180, 2
        %s182 = scalar_lea.vmem %s3, %s181
        %v184 = vld [vmem:[%s176] sm:$0xf]
        %v185 = vld [vmem:[%s176 + $0x4] sm:$0xf]
        %v186 = vld [vmem:[%s176 + $0x8] sm:$0xf]
        %v187 = vld [vmem:[%s176 + $0xc] sm:$0xf]
        %v188 = vld [vmem:[%s176 + $0x10] sm:$0xf]
        %v189 = vld [vmem:[%s176 + $0x14] sm:$0xf]
        %v190 = vld [vmem:[%s176 + $0x18] sm:$0xf]
        %v191 = vld [vmem:[%s176 + $0x1c] sm:$0xf]
        %v192 = vld [vmem:[%s176 + $0x20] sm:$0xf]
        %v193 = vld [vmem:[%s176 + $0x24] sm:$0xf]
        %v194 = vld [vmem:[%s176 + $0x28] sm:$0xf]
        %v195 = vld [vmem:[%s176 + $0x2c] sm:$0xf]
        %v196 = vld [vmem:[%s176 + $0x30] sm:$0xf]
        %v197 = vld [vmem:[%s176 + $0x34] sm:$0xf]
        %v198 = vld [vmem:[%s176 + $0x38] sm:$0xf]
        %v199 = vld [vmem:[%s176 + $0x3c] sm:$0xf]
        %v200 = vld [vmem:[%s176 + $0x40] sm:$0xf]
        %v201 = vld [vmem:[%s176 + $0x44] sm:$0xf]
        %v202 = vld [vmem:[%s176 + $0x48] sm:$0xf]
        %v203 = vld [vmem:[%s176 + $0x4c] sm:$0xf]
        %v204 = vld [vmem:[%s176 + $0x50] sm:$0xf]
        %v205 = vld [vmem:[%s176 + $0x54] sm:$0xf]
        %v206 = vld [vmem:[%s176 + $0x58] sm:$0xf]
        %v207 = vld [vmem:[%s176 + $0x5c] sm:$0xf]
        %v208 = vld [vmem:[%s176 + $0x60] sm:$0xf]
        %v209 = vld [vmem:[%s176 + $0x64] sm:$0xf]
        %v210 = vld [vmem:[%s176 + $0x68] sm:$0xf]
        %v211 = vld [vmem:[%s176 + $0x6c] sm:$0xf]
        %v212 = vld [vmem:[%s176 + $0x70] sm:$0xf]
        %v213 = vld [vmem:[%s176 + $0x74] sm:$0xf]
        %v214 = vld [vmem:[%s176 + $0x78] sm:$0xf]
        %v215 = vld [vmem:[%s176 + $0x7c] sm:$0xf]
        %v216 = vld [vmem:[%s1] sm:$0xf]
        %v217 = vld [vmem:[%s1 + $0x4] sm:$0xf]
        %v250 = vunpack.c.l.b16 %v184
        %v251 = vunpack.c.l.b16 %v185
        %v252 = vunpack.c.l.b16 %v186
        %v253 = vunpack.c.l.b16 %v187
        %v254 = vunpack.c.l.b16 %v188
        %v255 = vunpack.c.l.b16 %v189
        %v256 = vunpack.c.l.b16 %v190
        %v257 = vunpack.c.l.b16 %v191
        %v258 = vunpack.c.l.b16 %v192
        %v259 = vunpack.c.l.b16 %v193
        %v260 = vunpack.c.l.b16 %v194
        %v261 = vunpack.c.l.b16 %v195
        %v262 = vunpack.c.l.b16 %v196
        %v263 = vunpack.c.l.b16 %v197
        %v264 = vunpack.c.l.b16 %v198
        %v265 = vunpack.c.l.b16 %v199
        %v266 = vunpack.c.l.b16 %v200
        %v267 = vunpack.c.l.b16 %v201
        %v268 = vunpack.c.l.b16 %v202
        %v269 = vunpack.c.l.b16 %v203
        %v270 = vunpack.c.l.b16 %v204
        %v271 = vunpack.c.l.b16 %v205
        %v272 = vunpack.c.l.b16 %v206
        %v273 = vunpack.c.l.b16 %v207
        %v274 = vunpack.c.l.b16 %v208
        %v275 = vunpack.c.l.b16 %v209
        %v276 = vunpack.c.l.b16 %v210
        %v277 = vunpack.c.l.b16 %v211
        %v278 = vunpack.c.l.b16 %v212
        %v279 = vunpack.c.l.b16 %v213
        %v280 = vunpack.c.l.b16 %v214
        %v281 = vunpack.c.l.b16 %v215
        %v282 = vpack.c.b16 %v251, %v250
        %v283 = vpack.c.b16 %v253, %v252
        %v284 = vpack.c.b16 %v255, %v254
        %v285 = vpack.c.b16 %v257, %v256
        %v286 = vpack.c.b16 %v259, %v258
        %v287 = vpack.c.b16 %v261, %v260
        %v288 = vpack.c.b16 %v263, %v262
        %v289 = vpack.c.b16 %v265, %v264
        %v290 = vpack.c.b16 %v267, %v266
        %v291 = vpack.c.b16 %v269, %v268
        %v292 = vpack.c.b16 %v271, %v270
        %v293 = vpack.c.b16 %v273, %v272
        %v294 = vpack.c.b16 %v275, %v274
        %v295 = vpack.c.b16 %v277, %v276
        %v296 = vpack.c.b16 %v279, %v278
        %v297 = vpack.c.b16 %v281, %v280
        %v300 = vunpack.c.l.b16 %v216
        %v301 = vunpack.c.l.b16 %v217
        %v302 = vpack.c.b16 %v301, %v300
        %vm304 = vcmask 130048
        %v306 = vsel %vm304, %v282, 0
        %v309 = vsel %vm304, %v283, 0
        %v312 = vsel %vm304, %v284, 0
        %v315 = vsel %vm304, %v285, 0
        %v318 = vsel %vm304, %v286, 0
        %v321 = vsel %vm304, %v287, 0
        %v324 = vsel %vm304, %v288, 0
        %v327 = vsel %vm304, %v289, 0
        %v330 = vsel %vm304, %v290, 0
        %v333 = vsel %vm304, %v291, 0
        %v336 = vsel %vm304, %v292, 0
        %v339 = vsel %vm304, %v293, 0
        %v342 = vsel %vm304, %v294, 0
        %v345 = vsel %vm304, %v295, 0
        %v348 = vsel %vm304, %v296, 0
        %v351 = vsel %vm304, %v297, 0
        %353 = vmatprep.subr.bf16.mxu0 0
        %354 = vmatpush1.bf16.msra.mxu0 %v302
        %355 = vmatprep.subr.bf16.mxu0 0
        %356 = vmatpush1.bf16.msra.mxu0 0
        %357 = vmatprep.subr.bf16.mxu0 0
        %358 = vmatpush1.bf16.msra.mxu0 0
        %359 = vmatprep.subr.bf16.mxu0 0
        %360 = vmatpush1.bf16.msra.mxu0 0
        %361 = vmatprep.subr.bf16.mxu0 0
        %362 = vmatpush1.bf16.msra.mxu0 0
        %363 = vmatprep.subr.bf16.mxu0 0
        %364 = vmatpush1.bf16.msra.mxu0 0
        %365 = vmatprep.subr.bf16.mxu0 0
        %366 = vmatpush1.bf16.msra.mxu0 0
        %367 = vmatprep.subr.bf16.mxu0 0
        %368 = vmatpush1.bf16.msra.mxu0 0
        %369 = vmatprep.subr.bf16.mxu0 0
        %370 = vmatpush1.bf16.msra.mxu0 0
        %371 = vmatprep.subr.bf16.mxu0 0
        %372 = vmatpush1.bf16.msra.mxu0 0
        %373 = vmatprep.subr.bf16.mxu0 0
        %374 = vmatpush1.bf16.msra.mxu0 0
        %375 = vmatprep.subr.bf16.mxu0 0
        %376 = vmatpush1.bf16.msra.mxu0 0
        %377 = vmatprep.subr.bf16.mxu0 0
        %378 = vmatpush1.bf16.msra.mxu0 0
        %379 = vmatprep.subr.bf16.mxu0 0
        %380 = vmatpush1.bf16.msra.mxu0 0
        %381 = vmatprep.subr.bf16.mxu0 0
        %382 = vmatpush1.bf16.msra.mxu0 0
        %383 = vmatprep.subr.bf16.mxu0 0
        %384 = vmatpush1.bf16.msra.mxu0 0
        %385 = vmatprep.mubr.bf16.mxu0 0
        %386 = vmatmul.mubr.bf16.gmra.mrb[0].mxu0 %v306
        %v387 = vpop.f32.mrb[0].mxu0
        %v388 = vadd.f32 0.0, %v387
        %v389 = vpop.f32.mrb[0].mxu0
        %v390 = vpop.f32.mrb[0].mxu0
        %v391 = vadd.f32 0.0, %v390
        %v392 = vpop.f32.mrb[0].mxu0
        %393 = vmatprep.mubr.bf16.mxu0 0
        %394 = vmatmul.mubr.bf16.gmra.mrb[0].mxu0 %v309
        %v395 = vpop.f32.mrb[0].mxu0
        %v396 = vadd.f32 0.0, %v395
        %v397 = vpop.f32.mrb[0].mxu0
        %v398 = vpop.f32.mrb[0].mxu0
        %v399 = vadd.f32 0.0, %v398
        %v400 = vpop.f32.mrb[0].mxu0
        %401 = vmatprep.mubr.bf16.mxu0 0
        %402 = vmatmul.mubr.bf16.gmra.mrb[0].mxu0 %v312
        %v403 = vpop.f32.mrb[0].mxu0
        %v404 = vadd.f32 0.0, %v403
        %v405 = vpop.f32.mrb[0].mxu0
        %v406 = vpop.f32.mrb[0].mxu0
        %v407 = vadd.f32 0.0, %v406
        %v408 = vpop.f32.mrb[0].mxu0
        %409 = vmatprep.mubr.bf16.mxu0 0
        %410 = vmatmul.mubr.bf16.gmra.mrb[0].mxu0 %v315
        %v411 = vpop.f32.mrb[0].mxu0
        %v412 = vadd.f32 0.0, %v411
        %v413 = vpop.f32.mrb[0].mxu0
        %v414 = vpop.f32.mrb[0].mxu0
        %v415 = vadd.f32 0.0, %v414
        %v416 = vpop.f32.mrb[0].mxu0
        %417 = vmatprep.mubr.bf16.mxu0 0
        %418 = vmatmul.mubr.bf16.gmra.mrb[0].mxu0 %v318
        %v419 = vpop.f32.mrb[0].mxu0
        %v420 = vadd.f32 0.0, %v419
        %v421 = vpop.f32.mrb[0].mxu0
        %v422 = vpop.f32.mrb[0].mxu0
        %v423 = vadd.f32 0.0, %v422
        %v424 = vpop.f32.mrb[0].mxu0
        %425 = vmatprep.mubr.bf16.mxu0 0
        %426 = vmatmul.mubr.bf16.gmra.mrb[0].mxu0 %v321
        %v427 = vpop.f32.mrb[0].mxu0
        %v428 = vadd.f32 0.0, %v427
        %v429 = vpop.f32.mrb[0].mxu0
        %v430 = vpop.f32.mrb[0].mxu0
        %v431 = vadd.f32 0.0, %v430
        %v432 = vpop.f32.mrb[0].mxu0
        %433 = vmatprep.mubr.bf16.mxu0 0
        %434 = vmatmul.mubr.bf16.gmra.mrb[0].mxu0 %v324
        %v435 = vpop.f32.mrb[0].mxu0
        %v436 = vadd.f32 0.0, %v435
        %v437 = vpop.f32.mrb[0].mxu0
        %v438 = vpop.f32.mrb[0].mxu0
        %v439 = vadd.f32 0.0, %v438
        %v440 = vpop.f32.mrb[0].mxu0
        %441 = vmatprep.mubr.bf16.mxu0 0
        %442 = vmatmul.mubr.bf16.gmra.mrb[0].mxu0 %v327
        %v443 = vpop.f32.mrb[0].mxu0
        %v444 = vadd.f32 0.0, %v443
        %v445 = vpop.f32.mrb[0].mxu0
        %v446 = vpop.f32.mrb[0].mxu0
        %v447 = vadd.f32 0.0, %v446
        %v448 = vpop.f32.mrb[0].mxu0
        %449 = vmatprep.mubr.bf16.mxu0 0
        %450 = vmatmul.mubr.bf16.gmra.mrb[0].mxu0 %v330
        %v451 = vpop.f32.mrb[0].mxu0
        %v452 = vadd.f32 0.0, %v451
        %v453 = vpop.f32.mrb[0].mxu0
        %v454 = vpop.f32.mrb[0].mxu0
        %v455 = vadd.f32 0.0, %v454
        %v456 = vpop.f32.mrb[0].mxu0
        %457 = vmatprep.mubr.bf16.mxu0 0
        %458 = vmatmul.mubr.bf16.gmra.mrb[0].mxu0 %v333
        %v459 = vpop.f32.mrb[0].mxu0
        %v460 = vadd.f32 0.0, %v459
        %v461 = vpop.f32.mrb[0].mxu0
        %v462 = vpop.f32.mrb[0].mxu0
        %v463 = vadd.f32 0.0, %v462
        %v464 = vpop.f32.mrb[0].mxu0
        %465 = vmatprep.mubr.bf16.mxu0 0
        %466 = vmatmul.mubr.bf16.gmra.mrb[0].mxu0 %v336
        %v467 = vpop.f32.mrb[0].mxu0
        %v468 = vadd.f32 0.0, %v467
        %v469 = vpop.f32.mrb[0].mxu0
        %v470 = vpop.f32.mrb[0].mxu0
        %v471 = vadd.f32 0.0, %v470
        %v472 = vpop.f32.mrb[0].mxu0
        %473 = vmatprep.mubr.bf16.mxu0 0
        %474 = vmatmul.mubr.bf16.gmra.mrb[0].mxu0 %v339
        %v475 = vpop.f32.mrb[0].mxu0
        %v476 = vadd.f32 0.0, %v475
        %v477 = vpop.f32.mrb[0].mxu0
        %v478 = vpop.f32.mrb[0].mxu0
        %v479 = vadd.f32 0.0, %v478
        %v480 = vpop.f32.mrb[0].mxu0
        %481 = vmatprep.mubr.bf16.mxu0 0
        %482 = vmatmul.mubr.bf16.gmra.mrb[0].mxu0 %v342
        %v483 = vpop.f32.mrb[0].mxu0
        %v484 = vadd.f32 0.0, %v483
        %v485 = vpop.f32.mrb[0].mxu0
        %v486 = vpop.f32.mrb[0].mxu0
        %v487 = vadd.f32 0.0, %v486
        %v488 = vpop.f32.mrb[0].mxu0
        %489 = vmatprep.mubr.bf16.mxu0 0
        %490 = vmatmul.mubr.bf16.gmra.mrb[0].mxu0 %v345
        %v491 = vpop.f32.mrb[0].mxu0
        %v492 = vadd.f32 0.0, %v491
        %v493 = vpop.f32.mrb[0].mxu0
        %v494 = vpop.f32.mrb[0].mxu0
        %v495 = vadd.f32 0.0, %v494
        %v496 = vpop.f32.mrb[0].mxu0
        %497 = vmatprep.mubr.bf16.mxu0 0
        %498 = vmatmul.mubr.bf16.gmra.mrb[0].mxu0 %v348
        %v499 = vpop.f32.mrb[0].mxu0
        %v500 = vadd.f32 0.0, %v499
        %v501 = vpop.f32.mrb[0].mxu0
        %v502 = vpop.f32.mrb[0].mxu0
        %v503 = vadd.f32 0.0, %v502
        %v504 = vpop.f32.mrb[0].mxu0
        %505 = vmatprep.mubr.bf16.mxu0 0
        %506 = vmatmul.mubr.bf16.gmra.mrb[0].mxu0 %v351
        %v507 = vpop.f32.mrb[0].mxu0
        %v508 = vadd.f32 0.0, %v507
        %v509 = vpop.f32.mrb[0].mxu0
        %v510 = vpop.f32.mrb[0].mxu0
        %v511 = vadd.f32 0.0, %v510
        %v512 = vpop.f32.mrb[0].mxu0
        %513 = vdwg.mxu0
        %v514 = vpack.c.bf16 %v391, %v388
        %v515 = vpack.c.bf16 %v399, %v396
        %v516 = vpack.c.bf16 %v407, %v404
        %v517 = vpack.c.bf16 %v415, %v412
        %v518 = vpack.c.bf16 %v423, %v420
        %v519 = vpack.c.bf16 %v431, %v428
        %v520 = vpack.c.bf16 %v439, %v436
        %v521 = vpack.c.bf16 %v447, %v444
        %v522 = vpack.c.bf16 %v455, %v452
        %v523 = vpack.c.bf16 %v463, %v460
        %v524 = vpack.c.bf16 %v471, %v468
        %v525 = vpack.c.bf16 %v479, %v476
        %v526 = vpack.c.bf16 %v487, %v484
        %v527 = vpack.c.bf16 %v495, %v492
        %v528 = vpack.c.bf16 %v503, %v500
        %v529 = vpack.c.bf16 %v511, %v508
        %v546 = vunpack.c.l.b16 %v514
        %v547 = vunpack.c.h.b16 %v514
        %v548 = vunpack.c.l.b16 %v515
        %v549 = vunpack.c.h.b16 %v515
        %v550 = vunpack.c.l.b16 %v516
        %v551 = vunpack.c.h.b16 %v516
        %v552 = vunpack.c.l.b16 %v517
        %v553 = vunpack.c.h.b16 %v517
        %v554 = vunpack.c.l.b16 %v518
        %v555 = vunpack.c.h.b16 %v518
        %v556 = vunpack.c.l.b16 %v519
        %v557 = vunpack.c.h.b16 %v519
        %v558 = vunpack.c.l.b16 %v520
        %v559 = vunpack.c.h.b16 %v520
        %v560 = vunpack.c.l.b16 %v521
        %v561 = vunpack.c.h.b16 %v521
        %v562 = vunpack.c.l.b16 %v522
        %v563 = vunpack.c.h.b16 %v522
        %v564 = vunpack.c.l.b16 %v523
        %v565 = vunpack.c.h.b16 %v523
        %v566 = vunpack.c.l.b16 %v524
        %v567 = vunpack.c.h.b16 %v524
        %v568 = vunpack.c.l.b16 %v525
        %v569 = vunpack.c.h.b16 %v525
        %v570 = vunpack.c.l.b16 %v526
        %v571 = vunpack.c.h.b16 %v526
        %v572 = vunpack.c.l.b16 %v527
        %v573 = vunpack.c.h.b16 %v527
        %v574 = vunpack.c.l.b16 %v528
        %v575 = vunpack.c.h.b16 %v528
        %v576 = vunpack.c.l.b16 %v529
        %v577 = vunpack.c.h.b16 %v529
        %v578 = vpack.c.b16 %v546, %v546
        %v579 = vpack.c.b16 %v547, %v547
        %v580 = vpack.c.b16 %v548, %v548
        %v581 = vpack.c.b16 %v549, %v549
        %v582 = vpack.c.b16 %v550, %v550
        %v583 = vpack.c.b16 %v551, %v551
        %v584 = vpack.c.b16 %v552, %v552
        %v585 = vpack.c.b16 %v553, %v553
        %v586 = vpack.c.b16 %v554, %v554
        %v587 = vpack.c.b16 %v555, %v555
        %v588 = vpack.c.b16 %v556, %v556
        %v589 = vpack.c.b16 %v557, %v557
        %v590 = vpack.c.b16 %v558, %v558
        %v591 = vpack.c.b16 %v559, %v559
        %v592 = vpack.c.b16 %v560, %v560
        %v593 = vpack.c.b16 %v561, %v561
        %v594 = vpack.c.b16 %v562, %v562
        %v595 = vpack.c.b16 %v563, %v563
        %v596 = vpack.c.b16 %v564, %v564
        %v597 = vpack.c.b16 %v565, %v565
        %v598 = vpack.c.b16 %v566, %v566
        %v599 = vpack.c.b16 %v567, %v567
        %v600 = vpack.c.b16 %v568, %v568
        %v601 = vpack.c.b16 %v569, %v569
        %v602 = vpack.c.b16 %v570, %v570
        %v603 = vpack.c.b16 %v571, %v571
        %v604 = vpack.c.b16 %v572, %v572
        %v605 = vpack.c.b16 %v573, %v573
        %v606 = vpack.c.b16 %v574, %v574
        %v607 = vpack.c.b16 %v575, %v575
        %v608 = vpack.c.b16 %v576, %v576
        %v609 = vpack.c.b16 %v577, %v577
        %vm642 = vcmask 60416
        %643 = vst.msk [vmem:[%s165] sm:$0xf] %vm642, %v578
        %644 = vst.msk [vmem:[%s165 + $0x4] sm:$0xf] %vm642, %v579
        %645 = vst.msk [vmem:[%s165 + $0x8] sm:$0xf] %vm642, %v580
        %646 = vst.msk [vmem:[%s165 + $0xc] sm:$0xf] %vm642, %v581
        %647 = vst.msk [vmem:[%s165 + $0x10] sm:$0xf] %vm642, %v582
        %648 = vst.msk [vmem:[%s165 + $0x14] sm:$0xf] %vm642, %v583
        %649 = vst.msk [vmem:[%s165 + $0x18] sm:$0xf] %vm642, %v584
        %650 = vst.msk [vmem:[%s165 + $0x1c] sm:$0xf] %vm642, %v585
        %651 = vst.msk [vmem:[%s165 + $0x20] sm:$0xf] %vm642, %v586
        %652 = vst.msk [vmem:[%s165 + $0x24] sm:$0xf] %vm642, %v587
        %653 = vst.msk [vmem:[%s165 + $0x28] sm:$0xf] %vm642, %v588
        %654 = vst.msk [vmem:[%s165 + $0x2c] sm:$0xf] %vm642, %v589
        %655 = vst.msk [vmem:[%s165 + $0x30] sm:$0xf] %vm642, %v590
        %656 = vst.msk [vmem:[%s165 + $0x34] sm:$0xf] %vm642, %v591
        %657 = vst.msk [vmem:[%s165 + $0x38] sm:$0xf] %vm642, %v592
        %658 = vst.msk [vmem:[%s165 + $0x3c] sm:$0xf] %vm642, %v593
        %659 = vst.msk [vmem:[%s165 + $0x40] sm:$0xf] %vm642, %v594
        %660 = vst.msk [vmem:[%s165 + $0x44] sm:$0xf] %vm642, %v595
        %661 = vst.msk [vmem:[%s165 + $0x48] sm:$0xf] %vm642, %v596
        %662 = vst.msk [vmem:[%s165 + $0x4c] sm:$0xf] %vm642, %v597
        %663 = vst.msk [vmem:[%s165 + $0x50] sm:$0xf] %vm642, %v598
        %664 = vst.msk [vmem:[%s165 + $0x54] sm:$0xf] %vm642, %v599
        %665 = vst.msk [vmem:[%s165 + $0x58] sm:$0xf] %vm642, %v600
        %666 = vst.msk [vmem:[%s165 + $0x5c] sm:$0xf] %vm642, %v601
        %667 = vst.msk [vmem:[%s165 + $0x60] sm:$0xf] %vm642, %v602
        %668 = vst.msk [vmem:[%s165 + $0x64] sm:$0xf] %vm642, %v603
        %669 = vst.msk [vmem:[%s165 + $0x68] sm:$0xf] %vm642, %v604
        %670 = vst.msk [vmem:[%s165 + $0x6c] sm:$0xf] %vm642, %v605
        %671 = vst.msk [vmem:[%s165 + $0x70] sm:$0xf] %vm642, %v606
        %672 = vst.msk [vmem:[%s165 + $0x74] sm:$0xf] %vm642, %v607
        %673 = vst.msk [vmem:[%s165 + $0x78] sm:$0xf] %vm642, %v608
        %674 = vst.msk [vmem:[%s165 + $0x7c] sm:$0xf] %vm642, %v609
        %vm675 = vcmask 64512
        %v676 = vsel %vm675, %v388, 0.0
        %v677 = vsel %vm675, %v391, 0.0
        %v678 = vadd.f32 %v676, %v677
        %v679 = vsel %vm675, %v396, 0.0
        %v680 = vadd.f32 %v678, %v679
        %v681 = vsel %vm675, %v399, 0.0
        %v682 = vadd.f32 %v680, %v681
        %v683 = vsel %vm675, %v404, 0.0
        %v684 = vadd.f32 %v682, %v683
        %v685 = vsel %vm675, %v407, 0.0
        %v686 = vadd.f32 %v684, %v685
        %v687 = vsel %vm675, %v412, 0.0
        %v688 = vadd.f32 %v686, %v687
        %v689 = vsel %vm675, %v415, 0.0
        %v690 = vadd.f32 %v688, %v689
        %v691 = vsel %vm675, %v420, 0.0
        %v692 = vadd.f32 %v690, %v691
        %v693 = vsel %vm675, %v423, 0.0
        %v694 = vadd.f32 %v692, %v693
        %v695 = vsel %vm675, %v428, 0.0
        %v696 = vadd.f32 %v694, %v695
        %v697 = vsel %vm675, %v431, 0.0
        %v698 = vadd.f32 %v696, %v697
        %v699 = vsel %vm675, %v436, 0.0
        %v700 = vadd.f32 %v698, %v699
        %v701 = vsel %vm675, %v439, 0.0
        %v702 = vadd.f32 %v700, %v701
        %v703 = vsel %vm675, %v444, 0.0
        %v704 = vadd.f32 %v702, %v703
        %v705 = vsel %vm675, %v447, 0.0
        %v706 = vadd.f32 %v704, %v705
        %v707 = vsel %vm675, %v452, 0.0
        %v708 = vadd.f32 %v706, %v707
        %v709 = vsel %vm675, %v455, 0.0
        %v710 = vadd.f32 %v708, %v709
        %v711 = vsel %vm675, %v460, 0.0
        %v712 = vadd.f32 %v710, %v711
        %v713 = vsel %vm675, %v463, 0.0
        %v714 = vadd.f32 %v712, %v713
        %v715 = vsel %vm675, %v468, 0.0
        %v716 = vadd.f32 %v714, %v715
        %v717 = vsel %vm675, %v471, 0.0
        %v718 = vadd.f32 %v716, %v717
        %v719 = vsel %vm675, %v476, 0.0
        %v720 = vadd.f32 %v718, %v719
        %v721 = vsel %vm675, %v479, 0.0
        %v722 = vadd.f32 %v720, %v721
        %v723 = vsel %vm675, %v484, 0.0
        %v724 = vadd.f32 %v722, %v723
        %v725 = vsel %vm675, %v487, 0.0
        %v726 = vadd.f32 %v724, %v725
        %v727 = vsel %vm675, %v492, 0.0
        %v728 = vadd.f32 %v726, %v727
        %v729 = vsel %vm675, %v495, 0.0
        %v730 = vadd.f32 %v728, %v729
        %v731 = vsel %vm675, %v500, 0.0
        %v732 = vadd.f32 %v730, %v731
        %v733 = vsel %vm675, %v503, 0.0
        %v734 = vadd.f32 %v732, %v733
        %v735 = vsel %vm675, %v508, 0.0
        %v736 = vadd.f32 %v734, %v735
        %v737 = vsel %vm675, %v511, 0.0
        %v738 = vadd.f32 %v736, %v737
        %v739 = vrot.slane %v738, 4
        %v740 = vadd.f32 %v738, %v739
        %v741 = vrot.slane %v740, 2
        %v742 = vadd.f32 %v740, %v741
        %v743 = vrot.slane %v742, 1
        %v744 = vadd.f32 %v742, %v743
        %v745 = vmul.f32 %v388, %v388
        %v746 = vmul.f32 %v391, %v391
        %v747 = vmul.f32 %v396, %v396
        %v748 = vmul.f32 %v399, %v399
        %v749 = vmul.f32 %v404, %v404
        %v750 = vmul.f32 %v407, %v407
        %v751 = vmul.f32 %v412, %v412
        %v752 = vmul.f32 %v415, %v415
        %v753 = vmul.f32 %v420, %v420
        %v754 = vmul.f32 %v423, %v423
        %v755 = vmul.f32 %v428, %v428
        %v756 = vmul.f32 %v431, %v431
        %v757 = vmul.f32 %v436, %v436
        %v758 = vmul.f32 %v439, %v439
        %v759 = vmul.f32 %v444, %v444
        %v760 = vmul.f32 %v447, %v447
        %v761 = vmul.f32 %v452, %v452
        %v762 = vmul.f32 %v455, %v455
        %v763 = vmul.f32 %v460, %v460
        %v764 = vmul.f32 %v463, %v463
        %v765 = vmul.f32 %v468, %v468
        %v766 = vmul.f32 %v471, %v471
        %v767 = vmul.f32 %v476, %v476
        %v768 = vmul.f32 %v479, %v479
        %v769 = vmul.f32 %v484, %v484
        %v770 = vmul.f32 %v487, %v487
        %v771 = vmul.f32 %v492, %v492
        %v772 = vmul.f32 %v495, %v495
        %v773 = vmul.f32 %v500, %v500
        %v774 = vmul.f32 %v503, %v503
        %v775 = vmul.f32 %v508, %v508
        %v776 = vmul.f32 %v511, %v511
        %v777 = vsel %vm675, %v745, 0.0
        %v778 = vsel %vm675, %v746, 0.0
        %v779 = vadd.f32 %v777, %v778
        %v780 = vsel %vm675, %v747, 0.0
        %v781 = vadd.f32 %v779, %v780
        %v782 = vsel %vm675, %v748, 0.0
        %v783 = vadd.f32 %v781, %v782
        %v784 = vsel %vm675, %v749, 0.0
        %v785 = vadd.f32 %v783, %v784
        %v786 = vsel %vm675, %v750, 0.0
        %v787 = vadd.f32 %v785, %v786
        %v788 = vsel %vm675, %v751, 0.0
        %v789 = vadd.f32 %v787, %v788
        %v790 = vsel %vm675, %v752, 0.0
        %v791 = vadd.f32 %v789, %v790
        %v792 = vsel %vm675, %v753, 0.0
        %v793 = vadd.f32 %v791, %v792
        %v794 = vsel %vm675, %v754, 0.0
        %v795 = vadd.f32 %v793, %v794
        %v796 = vsel %vm675, %v755, 0.0
        %v797 = vadd.f32 %v795, %v796
        %v798 = vsel %vm675, %v756, 0.0
        %v799 = vadd.f32 %v797, %v798
        %v800 = vsel %vm675, %v757, 0.0
        %v801 = vadd.f32 %v799, %v800
        %v802 = vsel %vm675, %v758, 0.0
        %v803 = vadd.f32 %v801, %v802
        %v804 = vsel %vm675, %v759, 0.0
        %v805 = vadd.f32 %v803, %v804
        %v806 = vsel %vm675, %v760, 0.0
        %v807 = vadd.f32 %v805, %v806
        %v808 = vsel %vm675, %v761, 0.0
        %v809 = vadd.f32 %v807, %v808
        %v810 = vsel %vm675, %v762, 0.0
        %v811 = vadd.f32 %v809, %v810
        %v812 = vsel %vm675, %v763, 0.0
        %v813 = vadd.f32 %v811, %v812
        %v814 = vsel %vm675, %v764, 0.0
        %v815 = vadd.f32 %v813, %v814
        %v816 = vsel %vm675, %v765, 0.0
        %v817 = vadd.f32 %v815, %v816
        %v818 = vsel %vm675, %v766, 0.0
        %v819 = vadd.f32 %v817, %v818
        %v820 = vsel %vm675, %v767, 0.0
        %v821 = vadd.f32 %v819, %v820
        %v822 = vsel %vm675, %v768, 0.0
        %v823 = vadd.f32 %v821, %v822
        %v824 = vsel %vm675, %v769, 0.0
        %v825 = vadd.f32 %v823, %v824
        %v826 = vsel %vm675, %v770, 0.0
        %v827 = vadd.f32 %v825, %v826
        %v828 = vsel %vm675, %v771, 0.0
        %v829 = vadd.f32 %v827, %v828
        %v830 = vsel %vm675, %v772, 0.0
        %v831 = vadd.f32 %v829, %v830
        %v832 = vsel %vm675, %v773, 0.0
        %v833 = vadd.f32 %v831, %v832
        %v834 = vsel %vm675, %v774, 0.0
        %v835 = vadd.f32 %v833, %v834
        %v836 = vsel %vm675, %v775, 0.0
        %v837 = vadd.f32 %v835, %v836
        %v838 = vsel %vm675, %v776, 0.0
        %v839 = vadd.f32 %v837, %v838
        %v840 = vrot.slane %v839, 4
        %v841 = vadd.f32 %v839, %v840
        %v842 = vrot.slane %v841, 2
        %v843 = vadd.f32 %v841, %v842
        %v844 = vrot.slane %v843, 1
        %v845 = vadd.f32 %v843, %v844
        %vm846 = vcmask 1040384
        %v847 = vsel %vm846, %v744, %v845
        %vm848 = vcmask 58368
        %849 = vst.msk [vmem:[%s182] sm:$0x3] %vm848, %v847
        %s850 = sand.u32 %s73, 1
        %s851 = scalar_lea.sflag [#allocation3], %s850
        %s852 = sand.u32 %s73, 1
        %s853 = smul.addr %s852, 128
        %s854 = scalar_lea.vmem [#allocation2], %s853
        %p855 = scmp.lt.s32.totalorder %s18, 1
        %s856 = scalar_select %p855, %s18, 1
        %s857 = smul.addr %s856, 2
        %s858 = scalar_lea.vmem %s3, %s857
        // Predicated region
        $region29: #{bottleneck_shuffle_forward.4} parent=27 // pred_check
          %p859 = pneg %p83
        $region30: #{bottleneck_shuffle_forward.4} parent=27 // pred_check_branch
          %861 = sbr.rel (%p859) target = $region32
        $region31: #{bottleneck_shuffle_forward.4} parent=27 // pred_region
          %s862 = smul.u32 32, %s18
          %s864 = ssub.s32 2048, 2048
          %865 = vsyncadd %s851, %s864
          %s866 = smul.addr %s862, 64
          %s867 = scalar_lea.hbm %s2, %s866
          %s868 = sshll.u32 %s854, 4
          %s869 = int_to_ptr.vmem [resolvable:$true] %s868
          %874 = dma.vmem_to_hbm [thread:$0]  %s869, 2048, %s867, %s851, 64, 64, 4
        $region32: #{bottleneck_shuffle_forward.4} parent=27 // pred_fallthru
          _
        // Predicated region
        $region33: #{bottleneck_shuffle_forward.4} parent=27 // pred_check
          %p875 = pneg %p109
        $region34: #{bottleneck_shuffle_forward.4} parent=27 // pred_check_branch
          %877 = sbr.rel (%p875) target = $region36
        $region35: #{bottleneck_shuffle_forward.4} parent=27 // pred_region
          _
        $region36: #{bottleneck_shuffle_forward.4} parent=27 // pred_fallthru
          _
      $region28: #{bottleneck_shuffle_forward.4} parent=5 // pred_fallthru
        _
      %p878 = scmp.le.s32.totalorder 2, %s13
      // Predicated region
      $region37: #{bottleneck_shuffle_forward.4} parent=5 // pred_check
        %p879 = pneg %p878
      $region38: #{bottleneck_shuffle_forward.4} parent=5 // pred_check_branch
        %881 = sbr.rel (%p879) target = $region40
      $region39: #{bottleneck_shuffle_forward.4} parent=5 // pred_region
        %s882 = ssub.s32 %s13, 2
        // Predicated region
        $region41: #{bottleneck_shuffle_forward.4} parent=39 // pred_check
          %p883 = pneg %p89
        $region42: #{bottleneck_shuffle_forward.4} parent=39 // pred_check_branch
          %885 = sbr.rel (%p883) target = $region44
        $region43: #{bottleneck_shuffle_forward.4} parent=39 // pred_region
          %s886 = sand.u32 %s74, 1
          %s887 = scalar_lea.sflag [#allocation3], %s886
          %s888 = sand.u32 %s74, 1
          %s889 = smul.addr %s888, 128
          %s890 = scalar_lea.vmem [#allocation2], %s889
          %891 = dma.done %s887, 2048
        $region44: #{bottleneck_shuffle_forward.4} parent=39 // pred_fallthru
          _
        // Predicated region
        $region45: #{bottleneck_shuffle_forward.4} parent=39 // pred_check
          %p892 = pneg %p115
        $region46: #{bottleneck_shuffle_forward.4} parent=39 // pred_check_branch
          %894 = sbr.rel (%p892) target = $region48
        $region47: #{bottleneck_shuffle_forward.4} parent=39 // pred_region
          %p895 = scmp.lt.s32.totalorder %s19, 1
          %s896 = scalar_select %p895, %s19, 1
          %s897 = smul.addr %s896, 2
          %s898 = scalar_lea.vmem %s3, %s897
        $region48: #{bottleneck_shuffle_forward.4} parent=39 // pred_fallthru
          _
      $region40: #{bottleneck_shuffle_forward.4} parent=5 // pred_fallthru
        _
    $region6: #{bottleneck_shuffle_forward.4} parent=1 // loop_footer
      %s17 = sadd.s32 1, %s13
    $region7: #{bottleneck_shuffle_forward.4} parent=1 // loop_footer_branch
      %12 = sbr.rel target = $region3
    $region8: #{bottleneck_shuffle_forward.4} parent=1 // loop_exit
      _
    %899 = vsyncpa [#allocation3], 1
    %s900 = scalar_lea.sflag [#allocation3], 1
    %901 = vsyncpa %s900, 1

// kernel: bottleneck_shuffle_forward.6
$region0: #{bottleneck_shuffle_forward.6}
  #allocation0 [shape = 'u32[]', space=smem, size = 0x4, offset = 0x4, fixed_abs, tag = 'smem constant byte address 0x4 - core index']
  #allocation1 [shape = 'u32[144,128]{1,0:T(1,128)}', space=vmem, size = 0x12000, scoped, tag = 'internal scratch']
  %s0 = inlined_call_operand.vmem [shape: bf16[128,8], index: 0, kind: input, shape index: {}]
  %s1 = inlined_call_operand.vmem [shape: f32[1,8], index: 1, kind: input, shape index: {}]
  %s2 = inlined_call_operand.vmem [shape: f32[1,8], index: 2, kind: input, shape index: {}]
  %s3 = inlined_call_operand.vmem [shape: bf16[128,16], index: 3, kind: input, shape index: {}]
  %s4 = inlined_call_operand.vmem [shape: bf16[8,16], index: 4, kind: input, shape index: {}]
  %s5 = inlined_call_operand.vmem [shape: bf16[16,16], index: 5, kind: input, shape index: {}]
  %s6 = inlined_call_operand.vmem [shape: bf16[128,32], index: 6, kind: output, shape index: {0}]
  %s7 = inlined_call_operand.vmem [shape: f32[2,2,32], index: 7, kind: output, shape index: {1}]
  %8 = xla_tuple %s6, %s7
  %s9 = sld [smem:[#allocation0]]
  $region65: #{bottleneck_shuffle_forward.6} parent=0
    _
  %s11 = ssub.s32 1, %s9
  %s12 = scalar_select 0, %s11, %s9
  loop: start=0, step=1, limit=4
  $region2: #{bottleneck_shuffle_forward.6} parent=0 // loop_pre_header
    _
  $region3: #{bottleneck_shuffle_forward.6} parent=0 // loop_header
    %s14 = sphi 0, %s18
    %p15 = scmp.ge.s32.totalorder %s14, 4
    %s24 = sphi 0, %s26
    %s27 = sphi 0, %s24
    %s28 = sphi 0, %s27
    %s44 = sphi 0, %s28
    %s48 = sphi 0, %s48
    %s50 = sphi 0, %s48
    %s51 = sphi 0, %s50
    %s65 = sphi 0, %s51
    %s69 = sphi 0, %s69
    %s71 = sphi 0, %s69
    %s72 = sphi 0, %s71
    %s86 = sphi 0, %s72
    %s92 = sphi 0, %s94
    %s95 = sphi 0, %s92
    %s96 = sphi 0, %s95
    %s112 = sphi 0, %s96
    %s116 = sphi 0, %s116
    %s118 = sphi 0, %s116
    %s119 = sphi 0, %s118
    %s133 = sphi 0, %s119
    %s137 = sphi 0, %s137
    %s139 = sphi 0, %s137
    %s140 = sphi 0, %s139
    %s154 = sphi 0, %s140
    %s160 = sphi 0, %s162
    %s163 = sphi 0, %s160
    %s164 = sphi 0, %s163
    %s180 = sphi 0, %s164
    %s186 = sphi 0, %s188
    %s189 = sphi 0, %s186
    %s190 = sphi 0, %s189
    %s206 = sphi 0, %s190
  $region4: #{bottleneck_shuffle_forward.6} parent=0 // loop_header_branch
    %17 = sbr.rel (%p15) target = $region8
  $region5: #{bottleneck_shuffle_forward.6} parent=0 // loop_body
    %s19 = ssub.s32 %s14, 1
    %s20 = ssub.s32 %s14, 2
    %s21 = sadd.s32 %s14, 1
    %s22 = ssub.s32 %s14, %s21
    %p23 = scmp.eq.s32.totalorder %s22, 0
    %s25 = sadd.s32 %s24, 1
    %s26 = scalar_select %p23, %s24, %s25
    %p29 = pneg %p23
    %p30 = scmp.eq.s32.totalorder %s14, 1
    %p31 = por %p29, %p30
    %p32 = scmp.ne.s32.totalorder %s24, %s27
    %p33 = scmp.eq.s32.totalorder %s14, 0
    %p34 = por %p32, %p33
    %p35 = scmp.ne.s32.totalorder %s24, %s27
    %p36 = scmp.eq.s32.totalorder %s19, 1
    %p37 = por %p35, %p36
    %p38 = scmp.ne.s32.totalorder %s27, %s28
    %p39 = scmp.eq.s32.totalorder %s19, 0
    %p40 = por %p38, %p39
    %p41 = scmp.ne.s32.totalorder %s27, %s28
    %p42 = scmp.eq.s32.totalorder %s20, 1
    %p43 = por %p41, %p42
    %p45 = scmp.ne.s32.totalorder %s28, %s44
    %p46 = scmp.eq.s32.totalorder %s20, 0
    %p47 = por %p45, %p46
    %s49 = sadd.s32 %s48, 1
    %p52 = scmp.eq.s32.totalorder %s14, 1
    %p53 = scmp.ne.s32.totalorder %s48, %s50
    %p54 = scmp.eq.s32.totalorder %s14, 0
    %p55 = por %p53, %p54
    %p56 = scmp.ne.s32.totalorder %s48, %s50
    %p57 = scmp.eq.s32.totalorder %s19, 1
    %p58 = por %p56, %p57
    %p59 = scmp.ne.s32.totalorder %s50, %s51
    %p60 = scmp.eq.s32.totalorder %s19, 0
    %p61 = por %p59, %p60
    %p62 = scmp.ne.s32.totalorder %s50, %s51
    %p63 = scmp.eq.s32.totalorder %s20, 1
    %p64 = por %p62, %p63
    %p66 = scmp.ne.s32.totalorder %s51, %s65
    %p67 = scmp.eq.s32.totalorder %s20, 0
    %p68 = por %p66, %p67
    %s70 = sadd.s32 %s69, 1
    %p73 = scmp.eq.s32.totalorder %s14, 1
    %p74 = scmp.ne.s32.totalorder %s69, %s71
    %p75 = scmp.eq.s32.totalorder %s14, 0
    %p76 = por %p74, %p75
    %p77 = scmp.ne.s32.totalorder %s69, %s71
    %p78 = scmp.eq.s32.totalorder %s19, 1
    %p79 = por %p77, %p78
    %p80 = scmp.ne.s32.totalorder %s71, %s72
    %p81 = scmp.eq.s32.totalorder %s19, 0
    %p82 = por %p80, %p81
    %p83 = scmp.ne.s32.totalorder %s71, %s72
    %p84 = scmp.eq.s32.totalorder %s20, 1
    %p85 = por %p83, %p84
    %p87 = scmp.ne.s32.totalorder %s72, %s86
    %p88 = scmp.eq.s32.totalorder %s20, 0
    %p89 = por %p87, %p88
    %s90 = ssub.s32 %s14, %s21
    %p91 = scmp.eq.s32.totalorder %s90, 0
    %s93 = sadd.s32 %s92, 1
    %s94 = scalar_select %p91, %s92, %s93
    %p97 = pneg %p91
    %p98 = scmp.eq.s32.totalorder %s14, 1
    %p99 = por %p97, %p98
    %p100 = scmp.ne.s32.totalorder %s92, %s95
    %p101 = scmp.eq.s32.totalorder %s14, 0
    %p102 = por %p100, %p101
    %p103 = scmp.ne.s32.totalorder %s92, %s95
    %p104 = scmp.eq.s32.totalorder %s19, 1
    %p105 = por %p103, %p104
    %p106 = scmp.ne.s32.totalorder %s95, %s96
    %p107 = scmp.eq.s32.totalorder %s19, 0
    %p108 = por %p106, %p107
    %p109 = scmp.ne.s32.totalorder %s95, %s96
    %p110 = scmp.eq.s32.totalorder %s20, 1
    %p111 = por %p109, %p110
    %p113 = scmp.ne.s32.totalorder %s96, %s112
    %p114 = scmp.eq.s32.totalorder %s20, 0
    %p115 = por %p113, %p114
    %s117 = sadd.s32 %s116, 1
    %p120 = scmp.eq.s32.totalorder %s14, 1
    %p121 = scmp.ne.s32.totalorder %s116, %s118
    %p122 = scmp.eq.s32.totalorder %s14, 0
    %p123 = por %p121, %p122
    %p124 = scmp.ne.s32.totalorder %s116, %s118
    %p125 = scmp.eq.s32.totalorder %s19, 1
    %p126 = por %p124, %p125
    %p127 = scmp.ne.s32.totalorder %s118, %s119
    %p128 = scmp.eq.s32.totalorder %s19, 0
    %p129 = por %p127, %p128
    %p130 = scmp.ne.s32.totalorder %s118, %s119
    %p131 = scmp.eq.s32.totalorder %s20, 1
    %p132 = por %p130, %p131
    %p134 = scmp.ne.s32.totalorder %s119, %s133
    %p135 = scmp.eq.s32.totalorder %s20, 0
    %p136 = por %p134, %p135
    %s138 = sadd.s32 %s137, 1
    %p141 = scmp.eq.s32.totalorder %s14, 1
    %p142 = scmp.ne.s32.totalorder %s137, %s139
    %p143 = scmp.eq.s32.totalorder %s14, 0
    %p144 = por %p142, %p143
    %p145 = scmp.ne.s32.totalorder %s137, %s139
    %p146 = scmp.eq.s32.totalorder %s19, 1
    %p147 = por %p145, %p146
    %p148 = scmp.ne.s32.totalorder %s139, %s140
    %p149 = scmp.eq.s32.totalorder %s19, 0
    %p150 = por %p148, %p149
    %p151 = scmp.ne.s32.totalorder %s139, %s140
    %p152 = scmp.eq.s32.totalorder %s20, 1
    %p153 = por %p151, %p152
    %p155 = scmp.ne.s32.totalorder %s140, %s154
    %p156 = scmp.eq.s32.totalorder %s20, 0
    %p157 = por %p155, %p156
    %s158 = ssub.s32 %s14, %s21
    %p159 = scmp.eq.s32.totalorder %s158, 0
    %s161 = sadd.s32 %s160, 1
    %s162 = scalar_select %p159, %s160, %s161
    %p165 = pneg %p159
    %p166 = scmp.eq.s32.totalorder %s14, 1
    %p167 = por %p165, %p166
    %p168 = scmp.ne.s32.totalorder %s160, %s163
    %p169 = scmp.eq.s32.totalorder %s14, 0
    %p170 = por %p168, %p169
    %p171 = scmp.ne.s32.totalorder %s160, %s163
    %p172 = scmp.eq.s32.totalorder %s19, 1
    %p173 = por %p171, %p172
    %p174 = scmp.ne.s32.totalorder %s163, %s164
    %p175 = scmp.eq.s32.totalorder %s19, 0
    %p176 = por %p174, %p175
    %p177 = scmp.ne.s32.totalorder %s163, %s164
    %p178 = scmp.eq.s32.totalorder %s20, 1
    %p179 = por %p177, %p178
    %p181 = scmp.ne.s32.totalorder %s164, %s180
    %p182 = scmp.eq.s32.totalorder %s20, 0
    %p183 = por %p181, %p182
    %s184 = ssub.s32 %s14, %s21
    %p185 = scmp.eq.s32.totalorder %s184, 0
    %s187 = sadd.s32 %s186, 1
    %s188 = scalar_select %p185, %s186, %s187
    %p191 = pneg %p185
    %p192 = scmp.eq.s32.totalorder %s14, 1
    %p193 = por %p191, %p192
    %p194 = scmp.ne.s32.totalorder %s186, %s189
    %p195 = scmp.eq.s32.totalorder %s14, 0
    %p196 = por %p194, %p195
    %p197 = scmp.ne.s32.totalorder %s186, %s189
    %p198 = scmp.eq.s32.totalorder %s19, 1
    %p199 = por %p197, %p198
    %p200 = scmp.ne.s32.totalorder %s189, %s190
    %p201 = scmp.eq.s32.totalorder %s19, 0
    %p202 = por %p200, %p201
    %p203 = scmp.ne.s32.totalorder %s189, %s190
    %p204 = scmp.eq.s32.totalorder %s20, 1
    %p205 = por %p203, %p204
    %p207 = scmp.ne.s32.totalorder %s190, %s206
    %p208 = scmp.eq.s32.totalorder %s20, 0
    %p209 = por %p207, %p208
    %p210 = scmp.le.s32.totalorder 1, %s14
    %p211 = scmp.lt.s32.totalorder %s14, 3
    %p212 = pnand %p210, %p211
    %p213 = pneg %p212
    // Predicated region
    $region9: #{bottleneck_shuffle_forward.6} parent=5 // pred_check
      _
    $region10: #{bottleneck_shuffle_forward.6} parent=5 // pred_check_branch
      %215 = sbr.rel (%p212) target = $region12
    $region11: #{bottleneck_shuffle_forward.6} parent=5 // pred_region
      %s216 = ssub.s32 %s14, 1
      // Predicated region
      $region13: #{bottleneck_shuffle_forward.6} parent=11 // pred_check
        %p217 = pneg %p61
      $region14: #{bottleneck_shuffle_forward.6} parent=11 // pred_check_branch
        %219 = sbr.rel (%p217) target = $region16
      $region15: #{bottleneck_shuffle_forward.6} parent=11 // pred_region
        _
      $region16: #{bottleneck_shuffle_forward.6} parent=11 // pred_fallthru
        _
      // Predicated region
      $region17: #{bottleneck_shuffle_forward.6} parent=11 // pred_check
        %p220 = pneg %p82
      $region18: #{bottleneck_shuffle_forward.6} parent=11 // pred_check_branch
        %222 = sbr.rel (%p220) target = $region20
      $region19: #{bottleneck_shuffle_forward.6} parent=11 // pred_region
        _
      $region20: #{bottleneck_shuffle_forward.6} parent=11 // pred_fallthru
        _
      // Predicated region
      $region21: #{bottleneck_shuffle_forward.6} parent=11 // pred_check
        %p223 = pneg %p129
      $region22: #{bottleneck_shuffle_forward.6} parent=11 // pred_check_branch
        %225 = sbr.rel (%p223) target = $region24
      $region23: #{bottleneck_shuffle_forward.6} parent=11 // pred_region
        _
      $region24: #{bottleneck_shuffle_forward.6} parent=11 // pred_fallthru
        _
      // Predicated region
      $region25: #{bottleneck_shuffle_forward.6} parent=11 // pred_check
        %p226 = pneg %p150
      $region26: #{bottleneck_shuffle_forward.6} parent=11 // pred_check_branch
        %228 = sbr.rel (%p226) target = $region28
      $region27: #{bottleneck_shuffle_forward.6} parent=11 // pred_region
        _
      $region28: #{bottleneck_shuffle_forward.6} parent=11 // pred_fallthru
        _
    $region12: #{bottleneck_shuffle_forward.6} parent=5 // pred_fallthru
      _
    %p229 = scmp.lt.s32.totalorder %s14, 2
    // Predicated region
    $region29: #{bottleneck_shuffle_forward.6} parent=5 // pred_check
      %p230 = pneg %p229
    $region30: #{bottleneck_shuffle_forward.6} parent=5 // pred_check_branch
      %232 = sbr.rel (%p230) target = $region32
    $region31: #{bottleneck_shuffle_forward.6} parent=5 // pred_region
      // Predicated region
      $region33: #{bottleneck_shuffle_forward.6} parent=31 // pred_check
        %p233 = pneg %p34
      $region34: #{bottleneck_shuffle_forward.6} parent=31 // pred_check_branch
        %235 = sbr.rel (%p233) target = $region36
      $region35: #{bottleneck_shuffle_forward.6} parent=31 // pred_region
        %s236 = smul.u32 8, %s14
        %p237 = scmp.lt.s32.totalorder %s236, 15
        %s238 = scalar_select %p237, %s236, 15
        %s239 = smul.addr %s238, 4
        %s240 = scalar_lea.vmem %s0, %s239
        %s241 = smul.u32 8, %s14
      $region36: #{bottleneck_shuffle_forward.6} parent=31 // pred_fallthru
        _
      // Predicated region
      $region37: #{bottleneck_shuffle_forward.6} parent=31 // pred_check
        %p242 = pneg %p102
      $region38: #{bottleneck_shuffle_forward.6} parent=31 // pred_check_branch
        %244 = sbr.rel (%p242) target = $region40
      $region39: #{bottleneck_shuffle_forward.6} parent=31 // pred_region
        %s245 = smul.u32 8, %s14
        %p246 = scmp.lt.s32.totalorder %s245, 15
        %s247 = scalar_select %p246, %s245, 15
        %s248 = smul.addr %s247, 4
        %s249 = scalar_lea.vmem %s3, %s248
        %s250 = smul.u32 8, %s14
      $region40: #{bottleneck_shuffle_forward.6} parent=31 // pred_fallthru
        _
    $region32: #{bottleneck_shuffle_forward.6} parent=5 // pred_fallthru
      _
    %p251 = scmp.le.s32.totalorder 1, %s14
    %p252 = scmp.lt.s32.totalorder %s14, 3
    %p253 = pnand %p251, %p252
    %p254 = pneg %p253
    // Predicated region
    $region41: #{bottleneck_shuffle_forward.6} parent=5 // pred_check
      _
    $region42: #{bottleneck_shuffle_forward.6} parent=5 // pred_check_branch
      %256 = sbr.rel (%p253) target = $region44
    $region43: #{bottleneck_shuffle_forward.6} parent=5 // pred_region
      %s257 = ssub.s32 %s14, 1
      %s258 = smul.u32 8, %s19
      %p259 = scmp.lt.s32.totalorder %s258, 15
      %s260 = scalar_select %p259, %s258, 15
      %s261 = smul.addr %s260, 4
      %s262 = scalar_lea.vmem %s0, %s261
      %p263 = pneg %p40
      %p264 = pneg %p37
      %p265 = pneg %p61
      %p266 = pneg %p58
      %p267 = pneg %p82
      %p268 = pneg %p79
      %s269 = smul.u32 8, %s19
      %p270 = scmp.lt.s32.totalorder %s269, 15
      %s271 = scalar_select %p270, %s269, 15
      %s272 = smul.addr %s271, 4
      %s273 = scalar_lea.vmem %s3, %s272
      %p274 = pneg %p108
      %p275 = pneg %p105
      %p276 = pneg %p129
      %p277 = pneg %p126
      %p278 = pneg %p150
      %p279 = pneg %p147
      %p280 = pneg %p176
      %p281 = pneg %p173
      %s282 = smul.u32 8, %s19
      %p283 = scmp.lt.s32.totalorder %s282, 15
      %s284 = scalar_select %p283, %s282, 15
      %s285 = smul.addr %s284, 4
      %s286 = scalar_lea.vmem %s6, %s285
      %p287 = pneg %p202
      %p288 = pneg %p199
      %p289 = scmp.lt.s32.totalorder %s19, 1
      %s290 = scalar_select %p289, %s19, 1
      %s291 = smul.addr %s290, 2
      %s292 = scalar_lea.vmem %s7, %s291
      %s293 = smul.u32 8, %s19
      %p294 = scmp.lt.s32.totalorder %s293, 15
      %s295 = scalar_select %p294, %s293, 15
      %s296 = smul.addr %s295, 4
      %s297 = scalar_lea.vmem %s0, %s296
      %s298 = smul.u32 8, %s19
      %s299 = smul.u32 8, %s19
      %p300 = scmp.lt.s32.totalorder %s299, 15
      %s301 = scalar_select %p300, %s299, 15
      %s302 = smul.addr %s301, 4
      %s303 = scalar_lea.vmem %s3, %s302
      %s304 = smul.u32 8, %s19
      %s305 = smul.u32 8, %s19
      %p306 = scmp.lt.s32.totalorder %s305, 15
      %s307 = scalar_select %p306, %s305, 15
      %s308 = smul.addr %s307, 4
      %s309 = scalar_lea.vmem %s6, %s308
      %s310 = smul.u32 8, %s19
      %p311 = scmp.lt.s32.totalorder %s19, 1
      %s312 = scalar_select %p311, %s19, 1
      %s313 = smul.addr %s312, 2
      %s314 = scalar_lea.vmem %s7, %s313
      %v316 = vld [vmem:[%s297] sm:$0xf]
      %v317 = vld [vmem:[%s297 + $0x4] sm:$0xf]
      %v318 = vld [vmem:[%s297 + $0x8] sm:$0xf]
      %v319 = vld [vmem:[%s297 + $0xc] sm:$0xf]
      %v320 = vld [vmem:[%s297 + $0x10] sm:$0xf]
      %v321 = vld [vmem:[%s297 + $0x14] sm:$0xf]
      %v322 = vld [vmem:[%s297 + $0x18] sm:$0xf]
      %v323 = vld [vmem:[%s297 + $0x1c] sm:$0xf]
      %v324 = vunpack.c.l.bf16 %v316
      %v325 = vunpack.c.l.bf16 %v317
      %v326 = vunpack.c.l.bf16 %v318
      %v327 = vunpack.c.l.bf16 %v319
      %v328 = vunpack.c.l.bf16 %v320
      %v329 = vunpack.c.l.bf16 %v321
      %v330 = vunpack.c.l.bf16 %v322
      %v331 = vunpack.c.l.bf16 %v323
      %v332 = vld [vmem:[%s1] sm:$0x1]
      %v334 = vlaneseq
      %v335 = vshrl.u32 %v334, 7
      %v336 = vsub.s32 0, %v335
      %v337 = vrot.slane %v332, %v336
      %v339 = vmul.f32 %v324, %v337
      %v340 = vmul.f32 %v325, %v337
      %v341 = vmul.f32 %v326, %v337
      %v342 = vmul.f32 %v327, %v337
      %v343 = vmul.f32 %v328, %v337
      %v344 = vmul.f32 %v329, %v337
      %v345 = vmul.f32 %v330, %v337
      %v346 = vmul.f32 %v331, %v337
      %v347 = vld [vmem:[%s2] sm:$0x1]
      %v349 = vlaneseq
      %v350 = vshrl.u32 %v349, 7
      %v351 = vsub.s32 0, %v350
      %v352 = vrot.slane %v347, %v351
      %v354 = vadd.f32 %v339, %v352
      %v355 = vadd.f32 %v340, %v352
      %v356 = vadd.f32 %v341, %v352
      %v357 = vadd.f32 %v342, %v352
      %v358 = vadd.f32 %v343, %v352
      %v359 = vadd.f32 %v344, %v352
      %v360 = vadd.f32 %v345, %v352
      %v361 = vadd.f32 %v346, %v352
      %v362 = vmax.f32 %v354, 0.0
      %v363 = vmax.f32 %v355, 0.0
      %v364 = vmax.f32 %v356, 0.0
      %v365 = vmax.f32 %v357, 0.0
      %v366 = vmax.f32 %v358, 0.0
      %v367 = vmax.f32 %v359, 0.0
      %v368 = vmax.f32 %v360, 0.0
      %v369 = vmax.f32 %v361, 0.0
      %v370 = vpack.c.bf16 %v363, %v362
      %v371 = vpack.c.bf16 %v365, %v364
      %v372 = vpack.c.bf16 %v367, %v366
      %v373 = vpack.c.bf16 %v369, %v368
      %v374 = vld [vmem:[%s4] sm:$0xf]
      %vm375 = vcmask 64512
      %v377 = vsel %vm375, %v370, 0
      %v380 = vsel %vm375, %v371, 0
      %v383 = vsel %vm375, %v372, 0
      %v386 = vsel %vm375, %v373, 0
      %vm388 = vcmask 1043456
      %v390 = vsel %vm388, %v374, 0
      %392 = vmatprep.subr.bf16.mxu0 0
      %393 = vmatpush1.bf16.msra.mxu0 %v390
      %394 = vmatprep.subr.bf16.mxu0 0
      %395 = vmatpush1.bf16.msra.mxu0 0
      %396 = vmatprep.subr.bf16.mxu0 0
      %397 = vmatpush1.bf16.msra.mxu0 0
      %398 = vmatprep.subr.bf16.mxu0 0
      %399 = vmatpush1.bf16.msra.mxu0 0
      %400 = vmatprep.subr.bf16.mxu0 0
      %401 = vmatpush1.bf16.msra.mxu0 0
      %402 = vmatprep.subr.bf16.mxu0 0
      %403 = vmatpush1.bf16.msra.mxu0 0
      %404 = vmatprep.subr.bf16.mxu0 0
      %405 = vmatpush1.bf16.msra.mxu0 0
      %406 = vmatprep.subr.bf16.mxu0 0
      %407 = vmatpush1.bf16.msra.mxu0 0
      %408 = vmatprep.subr.bf16.mxu0 0
      %409 = vmatpush1.bf16.msra.mxu0 0
      %410 = vmatprep.subr.bf16.mxu0 0
      %411 = vmatpush1.bf16.msra.mxu0 0
      %412 = vmatprep.subr.bf16.mxu0 0
      %413 = vmatpush1.bf16.msra.mxu0 0
      %414 = vmatprep.subr.bf16.mxu0 0
      %415 = vmatpush1.bf16.msra.mxu0 0
      %416 = vmatprep.subr.bf16.mxu0 0
      %417 = vmatpush1.bf16.msra.mxu0 0
      %418 = vmatprep.subr.bf16.mxu0 0
      %419 = vmatpush1.bf16.msra.mxu0 0
      %420 = vmatprep.subr.bf16.mxu0 0
      %421 = vmatpush1.bf16.msra.mxu0 0
      %422 = vmatprep.subr.bf16.mxu0 0
      %423 = vmatpush1.bf16.msra.mxu0 0
      %424 = vmatprep.mubr.bf16.mxu0 0
      %425 = vmatmul.mubr.bf16.gmra.mrb[0].mxu0 %v377
      %v426 = vpop.f32.mrb[0].mxu0
      %v427 = vadd.f32 0.0, %v426
      %v428 = vpop.f32.mrb[0].mxu0
      %v429 = vpop.f32.mrb[0].mxu0
      %v430 = vadd.f32 0.0, %v429
      %v431 = vpop.f32.mrb[0].mxu0
      %432 = vmatprep.mubr.bf16.mxu0 0
      %433 = vmatmul.mubr.bf16.gmra.mrb[0].mxu0 %v380
      %v434 = vpop.f32.mrb[0].mxu0
      %v435 = vadd.f32 0.0, %v434
      %v436 = vpop.f32.mrb[0].mxu0
      %v437 = vpop.f32.mrb[0].mxu0
      %v438 = vadd.f32 0.0, %v437
      %v439 = vpop.f32.mrb[0].mxu0
      %440 = vmatprep.mubr.bf16.mxu0 0
      %441 = vmatmul.mubr.bf16.gmra.mrb[0].mxu0 %v383
      %v442 = vpop.f32.mrb[0].mxu0
      %v443 = vadd.f32 0.0, %v442
      %v444 = vpop.f32.mrb[0].mxu0
      %v445 = vpop.f32.mrb[0].mxu0
      %v446 = vadd.f32 0.0, %v445
      %v447 = vpop.f32.mrb[0].mxu0
      %448 = vmatprep.mubr.bf16.mxu0 0
      %449 = vmatmul.mubr.bf16.gmra.mrb[0].mxu0 %v386
      %v450 = vpop.f32.mrb[0].mxu0
      %v451 = vadd.f32 0.0, %v450
      %v452 = vpop.f32.mrb[0].mxu0
      %v453 = vpop.f32.mrb[0].mxu0
      %v454 = vadd.f32 0.0, %v453
      %v455 = vpop.f32.mrb[0].mxu0
      %456 = vdwg.mxu0
      %v457 = vld [vmem:[%s303] sm:$0xf]
      %v458 = vld [vmem:[%s303 + $0x4] sm:$0xf]
      %v459 = vld [vmem:[%s303 + $0x8] sm:$0xf]
      %v460 = vld [vmem:[%s303 + $0xc] sm:$0xf]
      %v461 = vld [vmem:[%s303 + $0x10] sm:$0xf]
      %v462 = vld [vmem:[%s303 + $0x14] sm:$0xf]
      %v463 = vld [vmem:[%s303 + $0x18] sm:$0xf]
      %v464 = vld [vmem:[%s303 + $0x1c] sm:$0xf]
      %v465 = vld [vmem:[%s5] sm:$0xf]
      %v466 = vld [vmem:[%s5 + $0x4] sm:$0xf]
      %v475 = vunpack.c.l.b16 %v457
      %v476 = vunpack.c.l.b16 %v458
      %v477 = vunpack.c.l.b16 %v459
      %v478 = vunpack.c.l.b16 %v460
      %v479 = vunpack.c.l.b16 %v461
      %v480 = vunpack.c.l.b16 %v462
      %v481 = vunpack.c.l.b16 %v463
      %v482 = vunpack.c.l.b16 %v464
      %v483 = vpack.c.b16 %v476, %v475
      %v484 = vpack.c.b16 %v478, %v477
      %v485 = vpack.c.b16 %v480, %v479
      %v486 = vpack.c.b16 %v482, %v481
      %v489 = vunpack.c.l.b16 %v465
      %v490 = vunpack.c.l.b16 %v466
      %v491 = vpack.c.b16 %v490, %v489
      %vm493 = vcmask 130048
      %v495 = vsel %vm493, %v483, 0
      %v498 = vsel %vm493, %v484, 0
      %v501 = vsel %vm493, %v485, 0
      %v504 = vsel %vm493, %v486, 0
      %506 = vmatprep.subr.bf16.mxu0 0
      %507 = vmatpush1.bf16.msra.mxu0 %v491
      %508 = vmatprep.subr.bf16.mxu0 0
      %509 = vmatpush1.bf16.msra.mxu0 0
      %510 = vmatprep.subr.bf16.mxu0 0
      %511 = vmatpush1.bf16.msra.mxu0 0
      %512 = vmatprep.subr.bf16.mxu0 0
      %513 = vmatpush1.bf16.msra.mxu0 0
      %514 = vmatprep.subr.bf16.mxu0 0
      %515 = vmatpush1.bf16.msra.mxu0 0
      %516 = vmatprep.subr.bf16.mxu0 0
      %517 = vmatpush1.bf16.msra.mxu0 0
      %518 = vmatprep.subr.bf16.mxu0 0
      %519 = vmatpush1.bf16.msra.mxu0 0
      %520 = vmatprep.subr.bf16.mxu0 0
      %521 = vmatpush1.bf16.msra.mxu0 0
      %522 = vmatprep.subr.bf16.mxu0 0
      %523 = vmatpush1.bf16.msra.mxu0 0
      %524 = vmatprep.subr.bf16.mxu0 0
      %525 = vmatpush1.bf16.msra.mxu0 0
      %526 = vmatprep.subr.bf16.mxu0 0
      %527 = vmatpush1.bf16.msra.mxu0 0
      %528 = vmatprep.subr.bf16.mxu0 0
      %529 = vmatpush1.bf16.msra.mxu0 0
      %530 = vmatprep.subr.bf16.mxu0 0
      %531 = vmatpush1.bf16.msra.mxu0 0
      %532 = vmatprep.subr.bf16.mxu0 0
      %533 = vmatpush1.bf16.msra.mxu0 0
      %534 = vmatprep.subr.bf16.mxu0 0
      %535 = vmatpush1.bf16.msra.mxu0 0
      %536 = vmatprep.subr.bf16.mxu0 0
      %537 = vmatpush1.bf16.msra.mxu0 0
      %538 = vmatprep.mubr.bf16.mxu0 0
      %539 = vmatmul.mubr.bf16.gmra.mrb[0].mxu0 %v495
      %v540 = vpop.f32.mrb[0].mxu0
      %v541 = vadd.f32 0.0, %v540
      %v542 = vpop.f32.mrb[0].mxu0
      %v543 = vpop.f32.mrb[0].mxu0
      %v544 = vadd.f32 0.0, %v543
      %v545 = vpop.f32.mrb[0].mxu0
      %546 = vmatprep.mubr.bf16.mxu0 0
      %547 = vmatmul.mubr.bf16.gmra.mrb[0].mxu0 %v498
      %v548 = vpop.f32.mrb[0].mxu0
      %v549 = vadd.f32 0.0, %v548
      %v550 = vpop.f32.mrb[0].mxu0
      %v551 = vpop.f32.mrb[0].mxu0
      %v552 = vadd.f32 0.0, %v551
      %v553 = vpop.f32.mrb[0].mxu0
      %554 = vmatprep.mubr.bf16.mxu0 0
      %555 = vmatmul.mubr.bf16.gmra.mrb[0].mxu0 %v501
      %v556 = vpop.f32.mrb[0].mxu0
      %v557 = vadd.f32 0.0, %v556
      %v558 = vpop.f32.mrb[0].mxu0
      %v559 = vpop.f32.mrb[0].mxu0
      %v560 = vadd.f32 0.0, %v559
      %v561 = vpop.f32.mrb[0].mxu0
      %562 = vmatprep.mubr.bf16.mxu0 0
      %563 = vmatmul.mubr.bf16.gmra.mrb[0].mxu0 %v504
      %v564 = vpop.f32.mrb[0].mxu0
      %v565 = vadd.f32 0.0, %v564
      %v566 = vpop.f32.mrb[0].mxu0
      %v567 = vpop.f32.mrb[0].mxu0
      %v568 = vadd.f32 0.0, %v567
      %v569 = vpop.f32.mrb[0].mxu0
      %570 = vdwg.mxu0
      %579 = vrot.lane.b32.xlu0 %v541, 16
      %v580 = vpop.permute.xlu0 %579
      %581 = vrot.lane.b32.xlu0 %v544, 16
      %v582 = vpop.permute.xlu0 %581
      %583 = vrot.lane.b32.xlu0 %v549, 16
      %v584 = vpop.permute.xlu0 %583
      %585 = vrot.lane.b32.xlu0 %v552, 16
      %v586 = vpop.permute.xlu0 %585
      %587 = vrot.lane.b32.xlu0 %v557, 16
      %v588 = vpop.permute.xlu0 %587
      %589 = vrot.lane.b32.xlu0 %v560, 16
      %v590 = vpop.permute.xlu0 %589
      %591 = vrot.lane.b32.xlu0 %v565, 16
      %v592 = vpop.permute.xlu0 %591
      %593 = vrot.lane.b32.xlu0 %v568, 16
      %v594 = vpop.permute.xlu0 %593
      %v603 = vsel %vm493, %v427, %v580
      %v604 = vsel %vm493, %v430, %v582
      %v605 = vsel %vm493, %v435, %v584
      %v606 = vsel %vm493, %v438, %v586
      %v607 = vsel %vm493, %v443, %v588
      %v608 = vsel %vm493, %v446, %v590
      %v609 = vsel %vm493, %v451, %v592
      %v610 = vsel %vm493, %v454, %v594
      %v611 = vpack.c.bf16 %v604, %v603
      %v612 = vpack.c.bf16 %v606, %v605
      %v613 = vpack.c.bf16 %v608, %v607
      %v614 = vpack.c.bf16 %v610, %v609
      %v619 = vunpack.c.l.b16 %v611
      %v620 = vunpack.c.h.b16 %v611
      %v621 = vunpack.c.l.b16 %v612
      %v622 = vunpack.c.h.b16 %v612
      %v623 = vunpack.c.l.b16 %v613
      %v624 = vunpack.c.h.b16 %v613
      %v625 = vunpack.c.l.b16 %v614
      %v626 = vunpack.c.h.b16 %v614
      %v627 = vpack.c.b16 %v619, %v619
      %v628 = vpack.c.b16 %v620, %v620
      %v629 = vpack.c.b16 %v621, %v621
      %v630 = vpack.c.b16 %v622, %v622
      %v631 = vpack.c.b16 %v623, %v623
      %v632 = vpack.c.b16 %v624, %v624
      %v633 = vpack.c.b16 %v625, %v625
      %v634 = vpack.c.b16 %v626, %v626
      %vm643 = vcmask 257024
      %644 = vst.msk [vmem:[%s309] sm:$0xf] %vm643, %v627
      %645 = vst.msk [vmem:[%s309 + $0x4] sm:$0xf] %vm643, %v628
      %646 = vst.msk [vmem:[%s309 + $0x8] sm:$0xf] %vm643, %v629
      %647 = vst.msk [vmem:[%s309 + $0xc] sm:$0xf] %vm643, %v630
      %648 = vst.msk [vmem:[%s309 + $0x10] sm:$0xf] %vm643, %v631
      %649 = vst.msk [vmem:[%s309 + $0x14] sm:$0xf] %vm643, %v632
      %650 = vst.msk [vmem:[%s309 + $0x18] sm:$0xf] %vm643, %v633
      %651 = vst.msk [vmem:[%s309 + $0x1c] sm:$0xf] %vm643, %v634
      %vm652 = vcmask 261120
      %v653 = vsel %vm652, %v603, 0.0
      %v654 = vsel %vm652, %v604, 0.0
      %v655 = vadd.f32 %v653, %v654
      %v656 = vsel %vm652, %v605, 0.0
      %v657 = vadd.f32 %v655, %v656
      %v658 = vsel %vm652, %v606, 0.0
      %v659 = vadd.f32 %v657, %v658
      %v660 = vsel %vm652, %v607, 0.0
      %v661 = vadd.f32 %v659, %v660
      %v662 = vsel %vm652, %v608, 0.0
      %v663 = vadd.f32 %v661, %v662
      %v664 = vsel %vm652, %v609, 0.0
      %v665 = vadd.f32 %v663, %v664
      %v666 = vsel %vm652, %v610, 0.0
      %v667 = vadd.f32 %v665, %v666
      %v668 = vrot.slane %v667, 4
      %v669 = vadd.f32 %v667, %v668
      %v670 = vrot.slane %v669, 2
      %v671 = vadd.f32 %v669, %v670
      %v672 = vrot.slane %v671, 1
      %v673 = vadd.f32 %v671, %v672
      %v674 = vmul.f32 %v603, %v603
      %v675 = vmul.f32 %v604, %v604
      %v676 = vmul.f32 %v605, %v605
      %v677 = vmul.f32 %v606, %v606
      %v678 = vmul.f32 %v607, %v607
      %v679 = vmul.f32 %v608, %v608
      %v680 = vmul.f32 %v609, %v609
      %v681 = vmul.f32 %v610, %v610
      %v682 = vsel %vm652, %v674, 0.0
      %v683 = vsel %vm652, %v675, 0.0
      %v684 = vadd.f32 %v682, %v683
      %v685 = vsel %vm652, %v676, 0.0
      %v686 = vadd.f32 %v684, %v685
      %v687 = vsel %vm652, %v677, 0.0
      %v688 = vadd.f32 %v686, %v687
      %v689 = vsel %vm652, %v678, 0.0
      %v690 = vadd.f32 %v688, %v689
      %v691 = vsel %vm652, %v679, 0.0
      %v692 = vadd.f32 %v690, %v691
      %v693 = vsel %vm652, %v680, 0.0
      %v694 = vadd.f32 %v692, %v693
      %v695 = vsel %vm652, %v681, 0.0
      %v696 = vadd.f32 %v694, %v695
      %v697 = vrot.slane %v696, 4
      %v698 = vadd.f32 %v696, %v697
      %v699 = vrot.slane %v698, 2
      %v700 = vadd.f32 %v698, %v699
      %v701 = vrot.slane %v700, 1
      %v702 = vadd.f32 %v700, %v701
      %vm703 = vcmask 1040384
      %v704 = vsel %vm703, %v673, %v702
      %vm705 = vcmask 254976
      %706 = vst.msk [vmem:[%s314] sm:$0x3] %vm705, %v704
      %s707 = smul.u32 8, %s19
      %p708 = scmp.lt.s32.totalorder %s707, 15
      %s709 = scalar_select %p708, %s707, 15
      %s710 = smul.addr %s709, 4
      %s711 = scalar_lea.vmem %s6, %s710
      %p712 = scmp.lt.s32.totalorder %s19, 1
      %s713 = scalar_select %p712, %s19, 1
      %s714 = smul.addr %s713, 2
      %s715 = scalar_lea.vmem %s7, %s714
      // Predicated region
      $region45: #{bottleneck_shuffle_forward.6} parent=43 // pred_check
        %p716 = pneg %p173
      $region46: #{bottleneck_shuffle_forward.6} parent=43 // pred_check_branch
        %718 = sbr.rel (%p716) target = $region48
      $region47: #{bottleneck_shuffle_forward.6} parent=43 // pred_region
        %s719 = smul.u32 8, %s19
      $region48: #{bottleneck_shuffle_forward.6} parent=43 // pred_fallthru
        _
      // Predicated region
      $region49: #{bottleneck_shuffle_forward.6} parent=43 // pred_check
        %p720 = pneg %p199
      $region50: #{bottleneck_shuffle_forward.6} parent=43 // pred_check_branch
        %722 = sbr.rel (%p720) target = $region52
      $region51: #{bottleneck_shuffle_forward.6} parent=43 // pred_region
        _
      $region52: #{bottleneck_shuffle_forward.6} parent=43 // pred_fallthru
        _
    $region44: #{bottleneck_shuffle_forward.6} parent=5 // pred_fallthru
      _
    %p723 = scmp.le.s32.totalorder 2, %s14
    // Predicated region
    $region53: #{bottleneck_shuffle_forward.6} parent=5 // pred_check
      %p724 = pneg %p723
    $region54: #{bottleneck_shuffle_forward.6} parent=5 // pred_check_branch
      %726 = sbr.rel (%p724) target = $region56
    $region55: #{bottleneck_shuffle_forward.6} parent=5 // pred_region
      %s727 = ssub.s32 %s14, 2
      // Predicated region
      $region57: #{bottleneck_shuffle_forward.6} parent=55 // pred_check
        %p728 = pneg %p179
      $region58: #{bottleneck_shuffle_forward.6} parent=55 // pred_check_branch
        %730 = sbr.rel (%p728) target = $region60
      $region59: #{bottleneck_shuffle_forward.6} parent=55 // pred_region
        %s731 = smul.u32 8, %s20
        %p732 = scmp.lt.s32.totalorder %s731, 15
        %s733 = scalar_select %p732, %s731, 15
        %s734 = smul.addr %s733, 4
        %s735 = scalar_lea.vmem %s6, %s734
      $region60: #{bottleneck_shuffle_forward.6} parent=55 // pred_fallthru
        _
      // Predicated region
      $region61: #{bottleneck_shuffle_forward.6} parent=55 // pred_check
        %p736 = pneg %p205
      $region62: #{bottleneck_shuffle_forward.6} parent=55 // pred_check_branch
        %738 = sbr.rel (%p736) target = $region64
      $region63: #{bottleneck_shuffle_forward.6} parent=55 // pred_region
        %p739 = scmp.lt.s32.totalorder %s20, 1
        %s740 = scalar_select %p739, %s20, 1
        %s741 = smul.addr %s740, 2
        %s742 = scalar_lea.vmem %s7, %s741
      $region64: #{bottleneck_shuffle_forward.6} parent=55 // pred_fallthru
        _
    $region56: #{bottleneck_shuffle_forward.6} parent=5 // pred_fallthru
      _
  $region6: #{bottleneck_shuffle_forward.6} parent=0 // loop_footer
    %s18 = sadd.s32 1, %s14
  $region7: #{bottleneck_shuffle_forward.6} parent=0 // loop_footer_branch
    %13 = sbr.rel target = $region3
  $region8: #{bottleneck_shuffle_forward.6} parent=0 // loop_exit
    _

// kernel: bottleneck_shuffle_forward.7
$region0: #{bottleneck_shuffle_forward.7}
  #allocation0 [shape = 'u32[]', space=smem, size = 0x4, offset = 0x4, fixed_abs, tag = 'smem constant byte address 0x4 - core index']
  #allocation1 [shape = 'u32[144,128]{1,0:T(1,128)}', space=vmem, size = 0x12000, scoped, tag = 'internal scratch']
  %s0 = inlined_call_operand.vmem [shape: bf16[128,32], index: 0, kind: input, shape index: {}]
  %s1 = inlined_call_operand.vmem [shape: f32[1,32], index: 1, kind: input, shape index: {}]
  %s2 = inlined_call_operand.vmem [shape: f32[1,32], index: 2, kind: input, shape index: {}]
  %s3 = inlined_call_operand.hbm [shape: f32[128,16], index: 3, kind: output, shape index: {}]
  %s4 = sld [smem:[#allocation0]]
  $region45: #{bottleneck_shuffle_forward.7} parent=0
    _
  %s6 = ssub.s32 1, %s4
  %s7 = scalar_select 0, %s6, %s4
  $region1: #{bottleneck_shuffle_forward.7} parent=0
    #allocation2 [shape = 'u8[65536]{0}', space=vmem, size = 0x10000, scoped, tag = 'output window, operand 0']
    #allocation3 [shape = 's32[2]{0}', space=sflag, size = 0x8, scoped, tag = 'scoped memory for bottleneck_shuffle_forward.7']
    %8 = vsyncpa [#allocation3], 0
    %s9 = scalar_lea.sflag [#allocation3], 1
    %10 = vsyncpa %s9, 0
    loop: start=0, step=1, limit=4
    $region2: #{bottleneck_shuffle_forward.7} parent=1 // loop_pre_header
      _
    $region3: #{bottleneck_shuffle_forward.7} parent=1 // loop_header
      %s12 = sphi 0, %s16
      %p13 = scmp.ge.s32.totalorder %s12, 4
      %s22 = sphi 0, %s24
      %s25 = sphi 0, %s22
      %s26 = sphi 0, %s25
      %s42 = sphi 0, %s26
      %s46 = sphi 0, %s46
      %s48 = sphi 0, %s46
      %s49 = sphi 0, %s48
      %s63 = sphi 0, %s49
      %s67 = sphi 0, %s67
      %s69 = sphi 0, %s67
      %s70 = sphi 0, %s69
      %s84 = sphi 0, %s70
      %s90 = sphi 0, %s92
      %s93 = sphi 0, %s90
      %s94 = sphi 0, %s93
      %s110 = sphi 0, %s94
    $region4: #{bottleneck_shuffle_forward.7} parent=1 // loop_header_branch
      %15 = sbr.rel (%p13) target = $region8
    $region5: #{bottleneck_shuffle_forward.7} parent=1 // loop_body
      %s17 = ssub.s32 %s12, 1
      %s18 = ssub.s32 %s12, 2
      %s19 = sadd.s32 %s12, 1
      %s20 = ssub.s32 %s12, %s19
      %p21 = scmp.eq.s32.totalorder %s20, 0
      %s23 = sadd.s32 %s22, 1
      %s24 = scalar_select %p21, %s22, %s23
      %p27 = pneg %p21
      %p28 = scmp.eq.s32.totalorder %s12, 1
      %p29 = por %p27, %p28
      %p30 = scmp.ne.s32.totalorder %s22, %s25
      %p31 = scmp.eq.s32.totalorder %s12, 0
      %p32 = por %p30, %p31
      %p33 = scmp.ne.s32.totalorder %s22, %s25
      %p34 = scmp.eq.s32.totalorder %s17, 1
      %p35 = por %p33, %p34
      %p36 = scmp.ne.s32.totalorder %s25, %s26
      %p37 = scmp.eq.s32.totalorder %s17, 0
      %p38 = por %p36, %p37
      %p39 = scmp.ne.s32.totalorder %s25, %s26
      %p40 = scmp.eq.s32.totalorder %s18, 1
      %p41 = por %p39, %p40
      %p43 = scmp.ne.s32.totalorder %s26, %s42
      %p44 = scmp.eq.s32.totalorder %s18, 0
      %p45 = por %p43, %p44
      %s47 = sadd.s32 %s46, 1
      %p50 = scmp.eq.s32.totalorder %s12, 1
      %p51 = scmp.ne.s32.totalorder %s46, %s48
      %p52 = scmp.eq.s32.totalorder %s12, 0
      %p53 = por %p51, %p52
      %p54 = scmp.ne.s32.totalorder %s46, %s48
      %p55 = scmp.eq.s32.totalorder %s17, 1
      %p56 = por %p54, %p55
      %p57 = scmp.ne.s32.totalorder %s48, %s49
      %p58 = scmp.eq.s32.totalorder %s17, 0
      %p59 = por %p57, %p58
      %p60 = scmp.ne.s32.totalorder %s48, %s49
      %p61 = scmp.eq.s32.totalorder %s18, 1
      %p62 = por %p60, %p61
      %p64 = scmp.ne.s32.totalorder %s49, %s63
      %p65 = scmp.eq.s32.totalorder %s18, 0
      %p66 = por %p64, %p65
      %s68 = sadd.s32 %s67, 1
      %p71 = scmp.eq.s32.totalorder %s12, 1
      %p72 = scmp.ne.s32.totalorder %s67, %s69
      %p73 = scmp.eq.s32.totalorder %s12, 0
      %p74 = por %p72, %p73
      %p75 = scmp.ne.s32.totalorder %s67, %s69
      %p76 = scmp.eq.s32.totalorder %s17, 1
      %p77 = por %p75, %p76
      %p78 = scmp.ne.s32.totalorder %s69, %s70
      %p79 = scmp.eq.s32.totalorder %s17, 0
      %p80 = por %p78, %p79
      %p81 = scmp.ne.s32.totalorder %s69, %s70
      %p82 = scmp.eq.s32.totalorder %s18, 1
      %p83 = por %p81, %p82
      %p85 = scmp.ne.s32.totalorder %s70, %s84
      %p86 = scmp.eq.s32.totalorder %s18, 0
      %p87 = por %p85, %p86
      %s88 = ssub.s32 %s12, %s19
      %p89 = scmp.eq.s32.totalorder %s88, 0
      %s91 = sadd.s32 %s90, 1
      %s92 = scalar_select %p89, %s90, %s91
      %p95 = pneg %p89
      %p96 = scmp.eq.s32.totalorder %s12, 1
      %p97 = por %p95, %p96
      %p98 = scmp.ne.s32.totalorder %s90, %s93
      %p99 = scmp.eq.s32.totalorder %s12, 0
      %p100 = por %p98, %p99
      %p101 = scmp.ne.s32.totalorder %s90, %s93
      %p102 = scmp.eq.s32.totalorder %s17, 1
      %p103 = por %p101, %p102
      %p104 = scmp.ne.s32.totalorder %s93, %s94
      %p105 = scmp.eq.s32.totalorder %s17, 0
      %p106 = por %p104, %p105
      %p107 = scmp.ne.s32.totalorder %s93, %s94
      %p108 = scmp.eq.s32.totalorder %s18, 1
      %p109 = por %p107, %p108
      %p111 = scmp.ne.s32.totalorder %s94, %s110
      %p112 = scmp.eq.s32.totalorder %s18, 0
      %p113 = por %p111, %p112
      %p114 = scmp.le.s32.totalorder 1, %s12
      %p115 = scmp.lt.s32.totalorder %s12, 3
      %p116 = pnand %p114, %p115
      %p117 = pneg %p116
      // Predicated region
      $region9: #{bottleneck_shuffle_forward.7} parent=5 // pred_check
        _
      $region10: #{bottleneck_shuffle_forward.7} parent=5 // pred_check_branch
        %119 = sbr.rel (%p116) target = $region12
      $region11: #{bottleneck_shuffle_forward.7} parent=5 // pred_region
        %s120 = ssub.s32 %s12, 1
        // Predicated region
        $region13: #{bottleneck_shuffle_forward.7} parent=11 // pred_check
          %p121 = pneg %p59
        $region14: #{bottleneck_shuffle_forward.7} parent=11 // pred_check_branch
          %123 = sbr.rel (%p121) target = $region16
        $region15: #{bottleneck_shuffle_forward.7} parent=11 // pred_region
          _
        $region16: #{bottleneck_shuffle_forward.7} parent=11 // pred_fallthru
          _
        // Predicated region
        $region17: #{bottleneck_shuffle_forward.7} parent=11 // pred_check
          %p124 = pneg %p80
        $region18: #{bottleneck_shuffle_forward.7} parent=11 // pred_check_branch
          %126 = sbr.rel (%p124) target = $region20
        $region19: #{bottleneck_shuffle_forward.7} parent=11 // pred_region
          _
        $region20: #{bottleneck_shuffle_forward.7} parent=11 // pred_fallthru
          _
      $region12: #{bottleneck_shuffle_forward.7} parent=5 // pred_fallthru
        _
      %p127 = scmp.lt.s32.totalorder %s12, 2
      // Predicated region
      $region21: #{bottleneck_shuffle_forward.7} parent=5 // pred_check
        %p128 = pneg %p127
      $region22: #{bottleneck_shuffle_forward.7} parent=5 // pred_check_branch
        %130 = sbr.rel (%p128) target = $region24
      $region23: #{bottleneck_shuffle_forward.7} parent=5 // pred_region
        // Predicated region
        $region25: #{bottleneck_shuffle_forward.7} parent=23 // pred_check
          %p131 = pneg %p32
        $region26: #{bottleneck_shuffle_forward.7} parent=23 // pred_check_branch
          %133 = sbr.rel (%p131) target = $region28
        $region27: #{bottleneck_shuffle_forward.7} parent=23 // pred_region
          %s134 = smul.u32 8, %s12
          %p135 = scmp.lt.s32.totalorder %s134, 15
          %s136 = scalar_select %p135, %s134, 15
          %s137 = smul.addr %s136, 4
          %s138 = scalar_lea.vmem %s0, %s137
          %s139 = smul.u32 8, %s12
        $region28: #{bottleneck_shuffle_forward.7} parent=23 // pred_fallthru
          _
      $region24: #{bottleneck_shuffle_forward.7} parent=5 // pred_fallthru
        _
      %p140 = scmp.le.s32.totalorder 1, %s12
      %p141 = scmp.lt.s32.totalorder %s12, 3
      %p142 = pnand %p140, %p141
      %p143 = pneg %p142
      // Predicated region
      $region29: #{bottleneck_shuffle_forward.7} parent=5 // pred_check
        _
      $region30: #{bottleneck_shuffle_forward.7} parent=5 // pred_check_branch
        %145 = sbr.rel (%p142) target = $region32
      $region31: #{bottleneck_shuffle_forward.7} parent=5 // pred_region
        %s146 = ssub.s32 %s12, 1
        %s147 = smul.u32 8, %s17
        %p148 = scmp.lt.s32.totalorder %s147, 15
        %s149 = scalar_select %p148, %s147, 15
        %s150 = smul.addr %s149, 4
        %s151 = scalar_lea.vmem %s0, %s150
        %p152 = pneg %p38
        %p153 = pneg %p35
        %p154 = pneg %p59
        %p155 = pneg %p56
        %p156 = pneg %p80
        %p157 = pneg %p77
        %p158 = pneg %p106
        %p159 = pneg %p103
        %s160 = sand.u32 %s93, 1
        %s161 = scalar_lea.sflag [#allocation3], %s160
        %s162 = sand.u32 %s93, 1
        %s163 = smul.addr %s162, 64
        %s164 = scalar_lea.vmem [#allocation2], %s163
        %s165 = smul.u32 8, %s17
        %p166 = scmp.lt.s32.totalorder %s165, 15
        %s167 = scalar_select %p166, %s165, 15
        %s168 = smul.addr %s167, 4
        %s169 = scalar_lea.vmem %s0, %s168
        %s170 = smul.u32 8, %s17
        %s171 = smul.u32 8, %s17
        %v172 = vld [vmem:[%s169] sm:$0xf]
        %v173 = vld [vmem:[%s169 + $0x4] sm:$0xf]
        %v174 = vld [vmem:[%s169 + $0x8] sm:$0xf]
        %v175 = vld [vmem:[%s169 + $0xc] sm:$0xf]
        %v176 = vld [vmem:[%s169 + $0x10] sm:$0xf]
        %v177 = vld [vmem:[%s169 + $0x14] sm:$0xf]
        %v178 = vld [vmem:[%s169 + $0x18] sm:$0xf]
        %v179 = vld [vmem:[%s169 + $0x1c] sm:$0xf]
        %v180 = vunpack.c.l.bf16 %v172
        %v181 = vunpack.c.l.bf16 %v173
        %v182 = vunpack.c.l.bf16 %v174
        %v183 = vunpack.c.l.bf16 %v175
        %v184 = vunpack.c.l.bf16 %v176
        %v185 = vunpack.c.l.bf16 %v177
        %v186 = vunpack.c.l.bf16 %v178
        %v187 = vunpack.c.l.bf16 %v179
        %v188 = vld [vmem:[%s1] sm:$0x1]
        %v190 = vlaneseq
        %v191 = vshrl.u32 %v190, 7
        %v192 = vsub.s32 0, %v191
        %v193 = vrot.slane %v188, %v192
        %v195 = vmul.f32 %v180, %v193
        %v196 = vmul.f32 %v181, %v193
        %v197 = vmul.f32 %v182, %v193
        %v198 = vmul.f32 %v183, %v193
        %v199 = vmul.f32 %v184, %v193
        %v200 = vmul.f32 %v185, %v193
        %v201 = vmul.f32 %v186, %v193
        %v202 = vmul.f32 %v187, %v193
        %v203 = vld [vmem:[%s2] sm:$0x1]
        %v205 = vlaneseq
        %v206 = vshrl.u32 %v205, 7
        %v207 = vsub.s32 0, %v206
        %v208 = vrot.slane %v203, %v207
        %v210 = vadd.f32 %v195, %v208
        %v211 = vadd.f32 %v196, %v208
        %v212 = vadd.f32 %v197, %v208
        %v213 = vadd.f32 %v198, %v208
        %v214 = vadd.f32 %v199, %v208
        %v215 = vadd.f32 %v200, %v208
        %v216 = vadd.f32 %v201, %v208
        %v217 = vadd.f32 %v202, %v208
        %226 = vrot.lane.b32.xlu0 %v210, 112
        %v227 = vpop.permute.xlu0 %226
        %228 = vrot.lane.b32.xlu0 %v211, 112
        %v229 = vpop.permute.xlu0 %228
        %230 = vrot.lane.b32.xlu0 %v212, 112
        %v231 = vpop.permute.xlu0 %230
        %232 = vrot.lane.b32.xlu0 %v213, 112
        %v233 = vpop.permute.xlu0 %232
        %234 = vrot.lane.b32.xlu0 %v214, 112
        %v235 = vpop.permute.xlu0 %234
        %236 = vrot.lane.b32.xlu0 %v215, 112
        %v237 = vpop.permute.xlu0 %236
        %238 = vrot.lane.b32.xlu0 %v216, 112
        %v239 = vpop.permute.xlu0 %238
        %240 = vrot.lane.b32.xlu0 %v217, 112
        %v241 = vpop.permute.xlu0 %240
        %v250 = vadd.f32 %v210, %v227
        %v251 = vadd.f32 %v211, %v229
        %v252 = vadd.f32 %v212, %v231
        %v253 = vadd.f32 %v213, %v233
        %v254 = vadd.f32 %v214, %v235
        %v255 = vadd.f32 %v215, %v237
        %v256 = vadd.f32 %v216, %v239
        %v257 = vadd.f32 %v217, %v241
        %v258 = vmax.f32 %v250, 0.0
        %v259 = vmax.f32 %v251, 0.0
        %v260 = vmax.f32 %v252, 0.0
        %v261 = vmax.f32 %v253, 0.0
        %v262 = vmax.f32 %v254, 0.0
        %v263 = vmax.f32 %v255, 0.0
        %v264 = vmax.f32 %v256, 0.0
        %v265 = vmax.f32 %v257, 0.0
        %vm266 = vcmask 130048
        %267 = vst.msk [vmem:[%s164] sm:$0xff] %vm266, %v258
        %268 = vst.msk [vmem:[%s164 + $0x8] sm:$0xff] %vm266, %v259
        %269 = vst.msk [vmem:[%s164 + $0x10] sm:$0xff] %vm266, %v260
        %270 = vst.msk [vmem:[%s164 + $0x18] sm:$0xff] %vm266, %v261
        %271 = vst.msk [vmem:[%s164 + $0x20] sm:$0xff] %vm266, %v262
        %272 = vst.msk [vmem:[%s164 + $0x28] sm:$0xff] %vm266, %v263
        %273 = vst.msk [vmem:[%s164 + $0x30] sm:$0xff] %vm266, %v264
        %274 = vst.msk [vmem:[%s164 + $0x38] sm:$0xff] %vm266, %v265
        %s275 = sand.u32 %s93, 1
        %s276 = scalar_lea.sflag [#allocation3], %s275
        %s277 = sand.u32 %s93, 1
        %s278 = smul.addr %s277, 64
        %s279 = scalar_lea.vmem [#allocation2], %s278
        // Predicated region
        $region33: #{bottleneck_shuffle_forward.7} parent=31 // pred_check
          %p280 = pneg %p103
        $region34: #{bottleneck_shuffle_forward.7} parent=31 // pred_check_branch
          %282 = sbr.rel (%p280) target = $region36
        $region35: #{bottleneck_shuffle_forward.7} parent=31 // pred_region
          %s283 = smul.u32 8, %s17
          %s285 = ssub.s32 1024, 1024
          %286 = vsyncadd %s276, %s285
          %s287 = smul.addr %s283, 128
          %s288 = scalar_lea.hbm %s3, %s287
          %s289 = sshll.u32 %s279, 4
          %s290 = int_to_ptr.vmem [resolvable:$true] %s289
          %295 = dma.vmem_to_hbm [thread:$0]  %s290, 1024, %s288, %s276, 128, 128, 8
        $region36: #{bottleneck_shuffle_forward.7} parent=31 // pred_fallthru
          _
      $region32: #{bottleneck_shuffle_forward.7} parent=5 // pred_fallthru
        _
      %p296 = scmp.le.s32.totalorder 2, %s12
      // Predicated region
      $region37: #{bottleneck_shuffle_forward.7} parent=5 // pred_check
        %p297 = pneg %p296
      $region38: #{bottleneck_shuffle_forward.7} parent=5 // pred_check_branch
        %299 = sbr.rel (%p297) target = $region40
      $region39: #{bottleneck_shuffle_forward.7} parent=5 // pred_region
        %s300 = ssub.s32 %s12, 2
        // Predicated region
        $region41: #{bottleneck_shuffle_forward.7} parent=39 // pred_check
          %p301 = pneg %p109
        $region42: #{bottleneck_shuffle_forward.7} parent=39 // pred_check_branch
          %303 = sbr.rel (%p301) target = $region44
        $region43: #{bottleneck_shuffle_forward.7} parent=39 // pred_region
          %s304 = sand.u32 %s94, 1
          %s305 = scalar_lea.sflag [#allocation3], %s304
          %s306 = sand.u32 %s94, 1
          %s307 = smul.addr %s306, 64
          %s308 = scalar_lea.vmem [#allocation2], %s307
          %309 = dma.done %s305, 1024
        $region44: #{bottleneck_shuffle_forward.7} parent=39 // pred_fallthru
          _
      $region40: #{bottleneck_shuffle_forward.7} parent=5 // pred_fallthru
        _
    $region6: #{bottleneck_shuffle_forward.7} parent=1 // loop_footer
      %s16 = sadd.s32 1, %s12
    $region7: #{bottleneck_shuffle_forward.7} parent=1 // loop_footer_branch
      %11 = sbr.rel target = $region3
    $region8: #{bottleneck_shuffle_forward.7} parent=1 // loop_exit
      _
    %310 = vsyncpa [#allocation3], 1
    %s311 = scalar_lea.sflag [#allocation3], 1
    %312 = vsyncpa %s311, 1

// kernel: bottleneck_shuffle_forward.5
$region0: #{bottleneck_shuffle_forward.5}
  #allocation0 [shape = 'u32[]', space=smem, size = 0x4, offset = 0x4, fixed_abs, tag = 'smem constant byte address 0x4 - core index']
  #allocation1 [shape = 'u32[144,128]{1,0:T(1,128)}', space=vmem, size = 0x12000, scoped, tag = 'internal scratch']
  %s0 = inlined_call_operand.vmem [shape: bf16[2,9,9,32], index: 0, kind: input, shape index: {}]
  %s1 = inlined_call_operand.vmem [shape: bf16[4,32,8], index: 1, kind: input, shape index: {}]
  %s2 = inlined_call_operand.vmem [shape: bf16[128,8], index: 2, kind: output, shape index: {0}]
  %s3 = inlined_call_operand.vmem [shape: f32[2,2,8], index: 3, kind: output, shape index: {1}]
  %4 = xla_tuple %s2, %s3
  %s5 = sld [smem:[#allocation0]]
  $region49: #{bottleneck_shuffle_forward.5} parent=0
    _
  %s7 = ssub.s32 1, %s5
  %s8 = scalar_select 0, %s7, %s5
  loop: start=0, step=1, limit=4
  $region2: #{bottleneck_shuffle_forward.5} parent=0 // loop_pre_header
    _
  $region3: #{bottleneck_shuffle_forward.5} parent=0 // loop_header
    %s10 = sphi 0, %s14
    %p11 = scmp.ge.s32.totalorder %s10, 4
    %s20 = sphi 0, %s22
    %s23 = sphi 0, %s20
    %s24 = sphi 0, %s23
    %s40 = sphi 0, %s24
    %s44 = sphi 0, %s44
    %s46 = sphi 0, %s44
    %s47 = sphi 0, %s46
    %s61 = sphi 0, %s47
    %s67 = sphi 0, %s69
    %s70 = sphi 0, %s67
    %s71 = sphi 0, %s70
    %s87 = sphi 0, %s71
    %s93 = sphi 0, %s95
    %s96 = sphi 0, %s93
    %s97 = sphi 0, %s96
    %s113 = sphi 0, %s97
  $region4: #{bottleneck_shuffle_forward.5} parent=0 // loop_header_branch
    %13 = sbr.rel (%p11) target = $region8
  $region5: #{bottleneck_shuffle_forward.5} parent=0 // loop_body
    %s15 = ssub.s32 %s10, 1
    %s16 = ssub.s32 %s10, 2
    %s17 = sadd.s32 %s10, 1
    %s18 = ssub.s32 %s10, %s17
    %p19 = scmp.eq.s32.totalorder %s18, 0
    %s21 = sadd.s32 %s20, 1
    %s22 = scalar_select %p19, %s20, %s21
    %p25 = pneg %p19
    %p26 = scmp.eq.s32.totalorder %s10, 1
    %p27 = por %p25, %p26
    %p28 = scmp.ne.s32.totalorder %s20, %s23
    %p29 = scmp.eq.s32.totalorder %s10, 0
    %p30 = por %p28, %p29
    %p31 = scmp.ne.s32.totalorder %s20, %s23
    %p32 = scmp.eq.s32.totalorder %s15, 1
    %p33 = por %p31, %p32
    %p34 = scmp.ne.s32.totalorder %s23, %s24
    %p35 = scmp.eq.s32.totalorder %s15, 0
    %p36 = por %p34, %p35
    %p37 = scmp.ne.s32.totalorder %s23, %s24
    %p38 = scmp.eq.s32.totalorder %s16, 1
    %p39 = por %p37, %p38
    %p41 = scmp.ne.s32.totalorder %s24, %s40
    %p42 = scmp.eq.s32.totalorder %s16, 0
    %p43 = por %p41, %p42
    %s45 = sadd.s32 %s44, 1
    %p48 = scmp.eq.s32.totalorder %s10, 1
    %p49 = scmp.ne.s32.totalorder %s44, %s46
    %p50 = scmp.eq.s32.totalorder %s10, 0
    %p51 = por %p49, %p50
    %p52 = scmp.ne.s32.totalorder %s44, %s46
    %p53 = scmp.eq.s32.totalorder %s15, 1
    %p54 = por %p52, %p53
    %p55 = scmp.ne.s32.totalorder %s46, %s47
    %p56 = scmp.eq.s32.totalorder %s15, 0
    %p57 = por %p55, %p56
    %p58 = scmp.ne.s32.totalorder %s46, %s47
    %p59 = scmp.eq.s32.totalorder %s16, 1
    %p60 = por %p58, %p59
    %p62 = scmp.ne.s32.totalorder %s47, %s61
    %p63 = scmp.eq.s32.totalorder %s16, 0
    %p64 = por %p62, %p63
    %s65 = ssub.s32 %s10, %s17
    %p66 = scmp.eq.s32.totalorder %s65, 0
    %s68 = sadd.s32 %s67, 1
    %s69 = scalar_select %p66, %s67, %s68
    %p72 = pneg %p66
    %p73 = scmp.eq.s32.totalorder %s10, 1
    %p74 = por %p72, %p73
    %p75 = scmp.ne.s32.totalorder %s67, %s70
    %p76 = scmp.eq.s32.totalorder %s10, 0
    %p77 = por %p75, %p76
    %p78 = scmp.ne.s32.totalorder %s67, %s70
    %p79 = scmp.eq.s32.totalorder %s15, 1
    %p80 = por %p78, %p79
    %p81 = scmp.ne.s32.totalorder %s70, %s71
    %p82 = scmp.eq.s32.totalorder %s15, 0
    %p83 = por %p81, %p82
    %p84 = scmp.ne.s32.totalorder %s70, %s71
    %p85 = scmp.eq.s32.totalorder %s16, 1
    %p86 = por %p84, %p85
    %p88 = scmp.ne.s32.totalorder %s71, %s87
    %p89 = scmp.eq.s32.totalorder %s16, 0
    %p90 = por %p88, %p89
    %s91 = ssub.s32 %s10, %s17
    %p92 = scmp.eq.s32.totalorder %s91, 0
    %s94 = sadd.s32 %s93, 1
    %s95 = scalar_select %p92, %s93, %s94
    %p98 = pneg %p92
    %p99 = scmp.eq.s32.totalorder %s10, 1
    %p100 = por %p98, %p99
    %p101 = scmp.ne.s32.totalorder %s93, %s96
    %p102 = scmp.eq.s32.totalorder %s10, 0
    %p103 = por %p101, %p102
    %p104 = scmp.ne.s32.totalorder %s93, %s96
    %p105 = scmp.eq.s32.totalorder %s15, 1
    %p106 = por %p104, %p105
    %p107 = scmp.ne.s32.totalorder %s96, %s97
    %p108 = scmp.eq.s32.totalorder %s15, 0
    %p109 = por %p107, %p108
    %p110 = scmp.ne.s32.totalorder %s96, %s97
    %p111 = scmp.eq.s32.totalorder %s16, 1
    %p112 = por %p110, %p111
    %p114 = scmp.ne.s32.totalorder %s97, %s113
    %p115 = scmp.eq.s32.totalorder %s16, 0
    %p116 = por %p114, %p115
    %p117 = scmp.le.s32.totalorder 1, %s10
    %p118 = scmp.lt.s32.totalorder %s10, 3
    %p119 = pnand %p117, %p118
    %p120 = pneg %p119
    // Predicated region
    $region9: #{bottleneck_shuffle_forward.5} parent=5 // pred_check
      _
    $region10: #{bottleneck_shuffle_forward.5} parent=5 // pred_check_branch
      %122 = sbr.rel (%p119) target = $region12
    $region11: #{bottleneck_shuffle_forward.5} parent=5 // pred_region
      %s123 = ssub.s32 %s10, 1
      // Predicated region
      $region13: #{bottleneck_shuffle_forward.5} parent=11 // pred_check
        %p124 = pneg %p57
      $region14: #{bottleneck_shuffle_forward.5} parent=11 // pred_check_branch
        %126 = sbr.rel (%p124) target = $region16
      $region15: #{bottleneck_shuffle_forward.5} parent=11 // pred_region
        _
      $region16: #{bottleneck_shuffle_forward.5} parent=11 // pred_fallthru
        _
    $region12: #{bottleneck_shuffle_forward.5} parent=5 // pred_fallthru
      _
    %p127 = scmp.lt.s32.totalorder %s10, 2
    // Predicated region
    $region17: #{bottleneck_shuffle_forward.5} parent=5 // pred_check
      %p128 = pneg %p127
    $region18: #{bottleneck_shuffle_forward.5} parent=5 // pred_check_branch
      %130 = sbr.rel (%p128) target = $region20
    $region19: #{bottleneck_shuffle_forward.5} parent=5 // pred_region
      // Predicated region
      $region21: #{bottleneck_shuffle_forward.5} parent=19 // pred_check
        %p131 = pneg %p30
      $region22: #{bottleneck_shuffle_forward.5} parent=19 // pred_check_branch
        %133 = sbr.rel (%p131) target = $region24
      $region23: #{bottleneck_shuffle_forward.5} parent=19 // pred_region
        %p134 = scmp.lt.s32.totalorder %s10, 1
        %s135 = scalar_select %p134, %s10, 1
        %s136 = smul.addr %s135, 18
        %s137 = smul.addr %s136, 4
        %s138 = scalar_lea.vmem %s0, %s137
      $region24: #{bottleneck_shuffle_forward.5} parent=19 // pred_fallthru
        _
    $region20: #{bottleneck_shuffle_forward.5} parent=5 // pred_fallthru
      _
    %p139 = scmp.le.s32.totalorder 1, %s10
    %p140 = scmp.lt.s32.totalorder %s10, 3
    %p141 = pnand %p139, %p140
    %p142 = pneg %p141
    // Predicated region
    $region25: #{bottleneck_shuffle_forward.5} parent=5 // pred_check
      _
    $region26: #{bottleneck_shuffle_forward.5} parent=5 // pred_check_branch
      %144 = sbr.rel (%p141) target = $region28
    $region27: #{bottleneck_shuffle_forward.5} parent=5 // pred_region
      %s145 = ssub.s32 %s10, 1
      %p146 = scmp.lt.s32.totalorder %s15, 1
      %s147 = scalar_select %p146, %s15, 1
      %s148 = smul.addr %s147, 18
      %s149 = smul.addr %s148, 4
      %s150 = scalar_lea.vmem %s0, %s149
      %p151 = pneg %p36
      %p152 = pneg %p33
      %p153 = pneg %p57
      %p154 = pneg %p54
      %p155 = pneg %p83
      %p156 = pneg %p80
      %s157 = smul.u32 8, %s15
      %p158 = scmp.lt.s32.totalorder %s157, 15
      %s159 = scalar_select %p158, %s157, 15
      %s160 = smul.addr %s159, 4
      %s161 = scalar_lea.vmem %s2, %s160
      %p162 = pneg %p109
      %p163 = pneg %p106
      %p164 = scmp.lt.s32.totalorder %s15, 1
      %s165 = scalar_select %p164, %s15, 1
      %s166 = smul.addr %s165, 2
      %s167 = scalar_lea.vmem %s3, %s166
      %p168 = scmp.lt.s32.totalorder %s15, 1
      %s169 = scalar_select %p168, %s15, 1
      %s170 = smul.addr %s169, 18
      %s171 = smul.addr %s170, 4
      %s172 = scalar_lea.vmem %s0, %s171
      %s173 = smul.u32 8, %s15
      %p174 = scmp.lt.s32.totalorder %s173, 15
      %s175 = scalar_select %p174, %s173, 15
      %s176 = smul.addr %s175, 4
      %s177 = scalar_lea.vmem %s2, %s176
      %s178 = smul.u32 8, %s15
      %p179 = scmp.lt.s32.totalorder %s15, 1
      %s180 = scalar_select %p179, %s15, 1
      %s181 = smul.addr %s180, 2
      %s182 = scalar_lea.vmem %s3, %s181
      %v184 = vld [vmem:[%s172] sm:$0xf]
      %v185 = vld [vmem:[%s172 + $0x8] sm:$0xf]
      %v186 = vld [vmem:[%s172 + $0x10] sm:$0xf]
      %v187 = vld [vmem:[%s172 + $0x18] sm:$0xf]
      %v188 = vld [vmem:[%s172 + $0x20] sm:$0xf]
      %v189 = vld [vmem:[%s172 + $0x28] sm:$0xf]
      %v190 = vld [vmem:[%s172 + $0x30] sm:$0xf]
      %v191 = vld [vmem:[%s172 + $0x38] sm:$0xf]
      %v192 = vld [vmem:[%s1] sm:$0xf]
      %v193 = vld [vmem:[%s1 + $0x4] sm:$0xf]
      %v194 = vld [vmem:[%s1 + $0x8] sm:$0xf]
      %v195 = vld [vmem:[%s1 + $0xc] sm:$0xf]
      %v196 = vld [vmem:[%s172 + $0x4] sm:$0x1]
      %v197 = vld [vmem:[%s172 + $0xc] sm:$0x1]
      %v198 = vld [vmem:[%s172 + $0x14] sm:$0x1]
      %v199 = vld [vmem:[%s172 + $0x1c] sm:$0x1]
      %v200 = vld [vmem:[%s172 + $0x24] sm:$0x1]
      %v201 = vld [vmem:[%s172 + $0x2c] sm:$0x1]
      %v202 = vld [vmem:[%s172 + $0x34] sm:$0x1]
      %v203 = vld [vmem:[%s172 + $0x3c] sm:$0x1]
      %vm204 = vsmask.f32 3328
      %vm205 = vsmask.f32 7440
      %vm206 = vmor %vm204, %vm205
      %v208 = vshrl.u32 %v184, 16
      %v210 = vrot.slane %v208, 4
      %v211 = vshll.u32 %v184, 16
      %v213 = vrot.slane %v211, 5
      %v214 = vor.u32 %v210, %v213
      %v215 = vrot.slane %v214, 4
      %v217 = vshll.u32 %v196, 16
      %v219 = vrot.slane %v217, 5
      %v220 = vsel %vm206, %v215, %v219
      %v222 = vshrl.u32 %v185, 16
      %v224 = vrot.slane %v222, 4
      %v225 = vshll.u32 %v185, 16
      %v227 = vrot.slane %v225, 5
      %v228 = vor.u32 %v224, %v227
      %v229 = vrot.slane %v228, 4
      %v231 = vshll.u32 %v197, 16
      %v233 = vrot.slane %v231, 5
      %v234 = vsel %vm206, %v229, %v233
      %v236 = vshrl.u32 %v186, 16
      %v238 = vrot.slane %v236, 4
      %v239 = vshll.u32 %v186, 16
      %v241 = vrot.slane %v239, 5
      %v242 = vor.u32 %v238, %v241
      %v243 = vrot.slane %v242, 4
      %v245 = vshll.u32 %v198, 16
      %v247 = vrot.slane %v245, 5
      %v248 = vsel %vm206, %v243, %v247
      %v250 = vshrl.u32 %v187, 16
      %v252 = vrot.slane %v250, 4
      %v253 = vshll.u32 %v187, 16
      %v255 = vrot.slane %v253, 5
      %v256 = vor.u32 %v252, %v255
      %v257 = vrot.slane %v256, 4
      %v259 = vshll.u32 %v199, 16
      %v261 = vrot.slane %v259, 5
      %v262 = vsel %vm206, %v257, %v261
      %v264 = vshrl.u32 %v188, 16
      %v266 = vrot.slane %v264, 4
      %v267 = vshll.u32 %v188, 16
      %v269 = vrot.slane %v267, 5
      %v270 = vor.u32 %v266, %v269
      %v271 = vrot.slane %v270, 4
      %v273 = vshll.u32 %v200, 16
      %v275 = vrot.slane %v273, 5
      %v276 = vsel %vm206, %v271, %v275
      %v278 = vshrl.u32 %v189, 16
      %v280 = vrot.slane %v278, 4
      %v281 = vshll.u32 %v189, 16
      %v283 = vrot.slane %v281, 5
      %v284 = vor.u32 %v280, %v283
      %v285 = vrot.slane %v284, 4
      %v287 = vshll.u32 %v201, 16
      %v289 = vrot.slane %v287, 5
      %v290 = vsel %vm206, %v285, %v289
      %v292 = vshrl.u32 %v190, 16
      %v294 = vrot.slane %v292, 4
      %v295 = vshll.u32 %v190, 16
      %v297 = vrot.slane %v295, 5
      %v298 = vor.u32 %v294, %v297
      %v299 = vrot.slane %v298, 4
      %v301 = vshll.u32 %v202, 16
      %v303 = vrot.slane %v301, 5
      %v304 = vsel %vm206, %v299, %v303
      %v306 = vshrl.u32 %v191, 16
      %v308 = vrot.slane %v306, 4
      %v309 = vshll.u32 %v191, 16
      %v311 = vrot.slane %v309, 5
      %v312 = vor.u32 %v308, %v311
      %v313 = vrot.slane %v312, 4
      %v315 = vshll.u32 %v203, 16
      %v317 = vrot.slane %v315, 5
      %v318 = vsel %vm206, %v313, %v317
      %s319 = scalar_lea.vmem %s1, 16
      %v320 = vld [vmem:[%s319] sm:$0xf]
      %v321 = vld [vmem:[%s319 + $0x4] sm:$0xf]
      %v322 = vld [vmem:[%s319 + $0x8] sm:$0xf]
      %v323 = vld [vmem:[%s319 + $0xc] sm:$0xf]
      %v324 = vunpack.c.l.b16 %v220
      %v325 = vunpack.c.l.b16 %v234
      %v326 = vunpack.c.l.b16 %v248
      %v327 = vunpack.c.l.b16 %v262
      %v328 = vunpack.c.l.b16 %v276
      %v329 = vunpack.c.l.b16 %v290
      %v330 = vunpack.c.l.b16 %v304
      %v331 = vunpack.c.l.b16 %v318
      %v332 = vpack.c.b16 %v325, %v324
      %v333 = vpack.c.b16 %v327, %v326
      %v334 = vpack.c.b16 %v329, %v328
      %v335 = vpack.c.b16 %v331, %v330
      %v340 = vunpack.c.l.b16 %v320
      %v341 = vunpack.c.l.b16 %v321
      %v342 = vunpack.c.l.b16 %v322
      %v343 = vunpack.c.l.b16 %v323
      %v344 = vpack.c.b16 %v341, %v340
      %v345 = vpack.c.b16 %v343, %v342
      %vm348 = vcmask 261120
      %v350 = vsel %vm348, %v332, 0
      %v353 = vsel %vm348, %v333, 0
      %v356 = vsel %vm348, %v334, 0
      %v359 = vsel %vm348, %v335, 0
      %361 = vmatprep.subr.bf16.mxu0 0
      %362 = vmatpush1.bf16.msra.mxu0 %v344
      %363 = vmatprep.subr.bf16.mxu0 0
      %364 = vmatpush1.bf16.msra.mxu0 %v345
      %365 = vmatprep.subr.bf16.mxu0 0
      %366 = vmatpush1.bf16.msra.mxu0 0
      %367 = vmatprep.subr.bf16.mxu0 0
      %368 = vmatpush1.bf16.msra.mxu0 0
      %369 = vmatprep.subr.bf16.mxu0 0
      %370 = vmatpush1.bf16.msra.mxu0 0
      %371 = vmatprep.subr.bf16.mxu0 0
      %372 = vmatpush1.bf16.msra.mxu0 0
      %373 = vmatprep.subr.bf16.mxu0 0
      %374 = vmatpush1.bf16.msra.mxu0 0
      %375 = vmatprep.subr.bf16.mxu0 0
      %376 = vmatpush1.bf16.msra.mxu0 0
      %377 = vmatprep.subr.bf16.mxu0 0
      %378 = vmatpush1.bf16.msra.mxu0 0
      %379 = vmatprep.subr.bf16.mxu0 0
      %380 = vmatpush1.bf16.msra.mxu0 0
      %381 = vmatprep.subr.bf16.mxu0 0
      %382 = vmatpush1.bf16.msra.mxu0 0
      %383 = vmatprep.subr.bf16.mxu0 0
      %384 = vmatpush1.bf16.msra.mxu0 0
      %385 = vmatprep.subr.bf16.mxu0 0
      %386 = vmatpush1.bf16.msra.mxu0 0
      %387 = vmatprep.subr.bf16.mxu0 0
      %388 = vmatpush1.bf16.msra.mxu0 0
      %389 = vmatprep.subr.bf16.mxu0 0
      %390 = vmatpush1.bf16.msra.mxu0 0
      %391 = vmatprep.subr.bf16.mxu0 0
      %392 = vmatpush1.bf16.msra.mxu0 0
      %393 = vmatprep.mubr.bf16.mxu0 0
      %394 = vmatmul.mubr.bf16.gmra.mrb[0].mxu0 %v350
      %v395 = vpop.f32.mrb[0].mxu0
      %v396 = vadd.f32 0.0, %v395
      %v397 = vpop.f32.mrb[0].mxu0
      %v398 = vpop.f32.mrb[0].mxu0
      %v399 = vadd.f32 0.0, %v398
      %v400 = vpop.f32.mrb[0].mxu0
      %401 = vmatprep.mubr.bf16.mxu0 0
      %402 = vmatmul.mubr.bf16.gmra.mrb[0].mxu0 %v353
      %v403 = vpop.f32.mrb[0].mxu0
      %v404 = vadd.f32 0.0, %v403
      %v405 = vpop.f32.mrb[0].mxu0
      %v406 = vpop.f32.mrb[0].mxu0
      %v407 = vadd.f32 0.0, %v406
      %v408 = vpop.f32.mrb[0].mxu0
      %409 = vmatprep.mubr.bf16.mxu0 0
      %410 = vmatmul.mubr.bf16.gmra.mrb[0].mxu0 %v356
      %v411 = vpop.f32.mrb[0].mxu0
      %v412 = vadd.f32 0.0, %v411
      %v413 = vpop.f32.mrb[0].mxu0
      %v414 = vpop.f32.mrb[0].mxu0
      %v415 = vadd.f32 0.0, %v414
      %v416 = vpop.f32.mrb[0].mxu0
      %417 = vmatprep.mubr.bf16.mxu0 0
      %418 = vmatmul.mubr.bf16.gmra.mrb[0].mxu0 %v359
      %v419 = vpop.f32.mrb[0].mxu0
      %v420 = vadd.f32 0.0, %v419
      %v421 = vpop.f32.mrb[0].mxu0
      %v422 = vpop.f32.mrb[0].mxu0
      %v423 = vadd.f32 0.0, %v422
      %v424 = vpop.f32.mrb[0].mxu0
      %425 = vdwg.mxu0
      %v434 = vunpack.c.l.b16 %v184
      %v435 = vunpack.c.l.b16 %v185
      %v436 = vunpack.c.l.b16 %v186
      %v437 = vunpack.c.l.b16 %v187
      %v438 = vunpack.c.l.b16 %v188
      %v439 = vunpack.c.l.b16 %v189
      %v440 = vunpack.c.l.b16 %v190
      %v441 = vunpack.c.l.b16 %v191
      %v442 = vpack.c.b16 %v435, %v434
      %v443 = vpack.c.b16 %v437, %v436
      %v444 = vpack.c.b16 %v439, %v438
      %v445 = vpack.c.b16 %v441, %v440
      %v450 = vunpack.c.l.b16 %v192
      %v451 = vunpack.c.l.b16 %v193
      %v452 = vunpack.c.l.b16 %v194
      %v453 = vunpack.c.l.b16 %v195
      %v454 = vpack.c.b16 %v451, %v450
      %v455 = vpack.c.b16 %v453, %v452
      %v459 = vsel %vm348, %v442, 0
      %v462 = vsel %vm348, %v443, 0
      %v465 = vsel %vm348, %v444, 0
      %v468 = vsel %vm348, %v445, 0
      %470 = vmatprep.subr.bf16.mxu0 0
      %471 = vmatpush1.bf16.msra.mxu0 %v454
      %472 = vmatprep.subr.bf16.mxu0 0
      %473 = vmatpush1.bf16.msra.mxu0 %v455
      %474 = vmatprep.subr.bf16.mxu0 0
      %475 = vmatpush1.bf16.msra.mxu0 0
      %476 = vmatprep.subr.bf16.mxu0 0
      %477 = vmatpush1.bf16.msra.mxu0 0
      %478 = vmatprep.subr.bf16.mxu0 0
      %479 = vmatpush1.bf16.msra.mxu0 0
      %480 = vmatprep.subr.bf16.mxu0 0
      %481 = vmatpush1.bf16.msra.mxu0 0
      %482 = vmatprep.subr.bf16.mxu0 0
      %483 = vmatpush1.bf16.msra.mxu0 0
      %484 = vmatprep.subr.bf16.mxu0 0
      %485 = vmatpush1.bf16.msra.mxu0 0
      %486 = vmatprep.subr.bf16.mxu0 0
      %487 = vmatpush1.bf16.msra.mxu0 0
      %488 = vmatprep.subr.bf16.mxu0 0
      %489 = vmatpush1.bf16.msra.mxu0 0
      %490 = vmatprep.subr.bf16.mxu0 0
      %491 = vmatpush1.bf16.msra.mxu0 0
      %492 = vmatprep.subr.bf16.mxu0 0
      %493 = vmatpush1.bf16.msra.mxu0 0
      %494 = vmatprep.subr.bf16.mxu0 0
      %495 = vmatpush1.bf16.msra.mxu0 0
      %496 = vmatprep.subr.bf16.mxu0 0
      %497 = vmatpush1.bf16.msra.mxu0 0
      %498 = vmatprep.subr.bf16.mxu0 0
      %499 = vmatpush1.bf16.msra.mxu0 0
      %500 = vmatprep.subr.bf16.mxu0 0
      %501 = vmatpush1.bf16.msra.mxu0 0
      %502 = vmatprep.mubr.bf16.mxu0 0
      %503 = vmatmul.mubr.bf16.gmra.mrb[0].mxu0 %v459
      %v504 = vpop.f32.mrb[0].mxu0
      %v505 = vadd.f32 %v396, %v504
      %v506 = vpop.f32.mrb[0].mxu0
      %v507 = vpop.f32.mrb[0].mxu0
      %v508 = vadd.f32 %v399, %v507
      %v509 = vpop.f32.mrb[0].mxu0
      %510 = vmatprep.mubr.bf16.mxu0 0
      %511 = vmatmul.mubr.bf16.gmra.mrb[0].mxu0 %v462
      %v512 = vpop.f32.mrb[0].mxu0
      %v513 = vadd.f32 %v404, %v512
      %v514 = vpop.f32.mrb[0].mxu0
      %v515 = vpop.f32.mrb[0].mxu0
      %v516 = vadd.f32 %v407, %v515
      %v517 = vpop.f32.mrb[0].mxu0
      %518 = vmatprep.mubr.bf16.mxu0 0
      %519 = vmatmul.mubr.bf16.gmra.mrb[0].mxu0 %v465
      %v520 = vpop.f32.mrb[0].mxu0
      %v521 = vadd.f32 %v412, %v520
      %v522 = vpop.f32.mrb[0].mxu0
      %v523 = vpop.f32.mrb[0].mxu0
      %v524 = vadd.f32 %v415, %v523
      %v525 = vpop.f32.mrb[0].mxu0
      %526 = vmatprep.mubr.bf16.mxu0 0
      %527 = vmatmul.mubr.bf16.gmra.mrb[0].mxu0 %v468
      %v528 = vpop.f32.mrb[0].mxu0
      %v529 = vadd.f32 %v420, %v528
      %v530 = vpop.f32.mrb[0].mxu0
      %v531 = vpop.f32.mrb[0].mxu0
      %v532 = vadd.f32 %v423, %v531
      %v533 = vpop.f32.mrb[0].mxu0
      %534 = vdwg.mxu0
      %s535 = scalar_lea.vmem %s172, 8
      %v536 = vld [vmem:[%s535] sm:$0xf]
      %v537 = vld [vmem:[%s535 + $0x8] sm:$0xf]
      %v538 = vld [vmem:[%s535 + $0x10] sm:$0xf]
      %v539 = vld [vmem:[%s535 + $0x18] sm:$0xf]
      %v540 = vld [vmem:[%s535 + $0x20] sm:$0xf]
      %v541 = vld [vmem:[%s535 + $0x28] sm:$0xf]
      %v542 = vld [vmem:[%s535 + $0x30] sm:$0xf]
      %v543 = vld [vmem:[%s535 + $0x38] sm:$0xf]
      %s544 = scalar_lea.vmem %s1, 32
      %v545 = vld [vmem:[%s544] sm:$0xf]
      %v546 = vld [vmem:[%s544 + $0x4] sm:$0xf]
      %v547 = vld [vmem:[%s544 + $0x8] sm:$0xf]
      %v548 = vld [vmem:[%s544 + $0xc] sm:$0xf]
      %v557 = vunpack.c.l.b16 %v536
      %v558 = vunpack.c.l.b16 %v537
      %v559 = vunpack.c.l.b16 %v538
      %v560 = vunpack.c.l.b16 %v539
      %v561 = vunpack.c.l.b16 %v540
      %v562 = vunpack.c.l.b16 %v541
      %v563 = vunpack.c.l.b16 %v542
      %v564 = vunpack.c.l.b16 %v543
      %v565 = vpack.c.b16 %v558, %v557
      %v566 = vpack.c.b16 %v560, %v559
      %v567 = vpack.c.b16 %v562, %v561
      %v568 = vpack.c.b16 %v564, %v563
      %v573 = vunpack.c.l.b16 %v545
      %v574 = vunpack.c.l.b16 %v546
      %v575 = vunpack.c.l.b16 %v547
      %v576 = vunpack.c.l.b16 %v548
      %v577 = vpack.c.b16 %v574, %v573
      %v578 = vpack.c.b16 %v576, %v575
      %v582 = vsel %vm348, %v565, 0
      %v585 = vsel %vm348, %v566, 0
      %v588 = vsel %vm348, %v567, 0
      %v591 = vsel %vm348, %v568, 0
      %593 = vmatprep.subr.bf16.mxu0 0
      %594 = vmatpush1.bf16.msra.mxu0 %v577
      %595 = vmatprep.subr.bf16.mxu0 0
      %596 = vmatpush1.bf16.msra.mxu0 %v578
      %597 = vmatprep.subr.bf16.mxu0 0
      %598 = vmatpush1.bf16.msra.mxu0 0
      %599 = vmatprep.subr.bf16.mxu0 0
      %600 = vmatpush1.bf16.msra.mxu0 0
      %601 = vmatprep.subr.bf16.mxu0 0
      %602 = vmatpush1.bf16.msra.mxu0 0
      %603 = vmatprep.subr.bf16.mxu0 0
      %604 = vmatpush1.bf16.msra.mxu0 0
      %605 = vmatprep.subr.bf16.mxu0 0
      %606 = vmatpush1.bf16.msra.mxu0 0
      %607 = vmatprep.subr.bf16.mxu0 0
      %608 = vmatpush1.bf16.msra.mxu0 0
      %609 = vmatprep.subr.bf16.mxu0 0
      %610 = vmatpush1.bf16.msra.mxu0 0
      %611 = vmatprep.subr.bf16.mxu0 0
      %612 = vmatpush1.bf16.msra.mxu0 0
      %613 = vmatprep.subr.bf16.mxu0 0
      %614 = vmatpush1.bf16.msra.mxu0 0
      %615 = vmatprep.subr.bf16.mxu0 0
      %616 = vmatpush1.bf16.msra.mxu0 0
      %617 = vmatprep.subr.bf16.mxu0 0
      %618 = vmatpush1.bf16.msra.mxu0 0
      %619 = vmatprep.subr.bf16.mxu0 0
      %620 = vmatpush1.bf16.msra.mxu0 0
      %621 = vmatprep.subr.bf16.mxu0 0
      %622 = vmatpush1.bf16.msra.mxu0 0
      %623 = vmatprep.subr.bf16.mxu0 0
      %624 = vmatpush1.bf16.msra.mxu0 0
      %625 = vmatprep.mubr.bf16.mxu0 0
      %626 = vmatmul.mubr.bf16.gmra.mrb[0].mxu0 %v582
      %v627 = vpop.f32.mrb[0].mxu0
      %v628 = vadd.f32 0.0, %v627
      %v629 = vpop.f32.mrb[0].mxu0
      %v630 = vpop.f32.mrb[0].mxu0
      %v631 = vadd.f32 0.0, %v630
      %v632 = vpop.f32.mrb[0].mxu0
      %633 = vmatprep.mubr.bf16.mxu0 0
      %634 = vmatmul.mubr.bf16.gmra.mrb[0].mxu0 %v585
      %v635 = vpop.f32.mrb[0].mxu0
      %v636 = vadd.f32 0.0, %v635
      %v637 = vpop.f32.mrb[0].mxu0
      %v638 = vpop.f32.mrb[0].mxu0
      %v639 = vadd.f32 0.0, %v638
      %v640 = vpop.f32.mrb[0].mxu0
      %641 = vmatprep.mubr.bf16.mxu0 0
      %642 = vmatmul.mubr.bf16.gmra.mrb[0].mxu0 %v588
      %v643 = vpop.f32.mrb[0].mxu0
      %v644 = vadd.f32 0.0, %v643
      %v645 = vpop.f32.mrb[0].mxu0
      %v646 = vpop.f32.mrb[0].mxu0
      %v647 = vadd.f32 0.0, %v646
      %v648 = vpop.f32.mrb[0].mxu0
      %649 = vmatprep.mubr.bf16.mxu0 0
      %650 = vmatmul.mubr.bf16.gmra.mrb[0].mxu0 %v591
      %v651 = vpop.f32.mrb[0].mxu0
      %v652 = vadd.f32 0.0, %v651
      %v653 = vpop.f32.mrb[0].mxu0
      %v654 = vpop.f32.mrb[0].mxu0
      %v655 = vadd.f32 0.0, %v654
      %v656 = vpop.f32.mrb[0].mxu0
      %657 = vdwg.mxu0
      %v658 = vadd.f32 %v505, %v628
      %v659 = vadd.f32 %v508, %v631
      %v660 = vadd.f32 %v513, %v636
      %v661 = vadd.f32 %v516, %v639
      %v662 = vadd.f32 %v521, %v644
      %v663 = vadd.f32 %v524, %v647
      %v664 = vadd.f32 %v529, %v652
      %v665 = vadd.f32 %v532, %v655
      %v666 = vld [vmem:[%s535] sm:$0xf]
      %v667 = vld [vmem:[%s535 + $0x4] sm:$0x1]
      %v668 = vld [vmem:[%s535 + $0x8] sm:$0xf]
      %v669 = vld [vmem:[%s535 + $0xc] sm:$0x1]
      %v670 = vld [vmem:[%s535 + $0x10] sm:$0xf]
      %v671 = vld [vmem:[%s535 + $0x14] sm:$0x1]
      %v672 = vld [vmem:[%s535 + $0x18] sm:$0xf]
      %v673 = vld [vmem:[%s535 + $0x1c] sm:$0x1]
      %v674 = vld [vmem:[%s535 + $0x20] sm:$0xf]
      %v675 = vld [vmem:[%s535 + $0x24] sm:$0x1]
      %v676 = vld [vmem:[%s535 + $0x28] sm:$0xf]
      %v677 = vld [vmem:[%s535 + $0x2c] sm:$0x1]
      %v678 = vld [vmem:[%s535 + $0x30] sm:$0xf]
      %v679 = vld [vmem:[%s535 + $0x34] sm:$0x1]
      %v680 = vld [vmem:[%s535 + $0x38] sm:$0xf]
      %v681 = vld [vmem:[%s535 + $0x3c] sm:$0x1]
      %v683 = vshrl.u32 %v666, 16
      %v685 = vrot.slane %v683, 4
      %v686 = vshll.u32 %v666, 16
      %v688 = vrot.slane %v686, 5
      %v689 = vor.u32 %v685, %v688
      %v690 = vrot.slane %v689, 4
      %v692 = vshll.u32 %v667, 16
      %v694 = vrot.slane %v692, 5
      %v695 = vsel %vm206, %v690, %v694
      %v697 = vshrl.u32 %v668, 16
      %v699 = vrot.slane %v697, 4
      %v700 = vshll.u32 %v668, 16
      %v702 = vrot.slane %v700, 5
      %v703 = vor.u32 %v699, %v702
      %v704 = vrot.slane %v703, 4
      %v706 = vshll.u32 %v669, 16
      %v708 = vrot.slane %v706, 5
      %v709 = vsel %vm206, %v704, %v708
      %v711 = vshrl.u32 %v670, 16
      %v713 = vrot.slane %v711, 4
      %v714 = vshll.u32 %v670, 16
      %v716 = vrot.slane %v714, 5
      %v717 = vor.u32 %v713, %v716
      %v718 = vrot.slane %v717, 4
      %v720 = vshll.u32 %v671, 16
      %v722 = vrot.slane %v720, 5
      %v723 = vsel %vm206, %v718, %v722
      %v725 = vshrl.u32 %v672, 16
      %v727 = vrot.slane %v725, 4
      %v728 = vshll.u32 %v672, 16
      %v730 = vrot.slane %v728, 5
      %v731 = vor.u32 %v727, %v730
      %v732 = vrot.slane %v731, 4
      %v734 = vshll.u32 %v673, 16
      %v736 = vrot.slane %v734, 5
      %v737 = vsel %vm206, %v732, %v736
      %v739 = vshrl.u32 %v674, 16
      %v741 = vrot.slane %v739, 4
      %v742 = vshll.u32 %v674, 16
      %v744 = vrot.slane %v742, 5
      %v745 = vor.u32 %v741, %v744
      %v746 = vrot.slane %v745, 4
      %v748 = vshll.u32 %v675, 16
      %v750 = vrot.slane %v748, 5
      %v751 = vsel %vm206, %v746, %v750
      %v753 = vshrl.u32 %v676, 16
      %v755 = vrot.slane %v753, 4
      %v756 = vshll.u32 %v676, 16
      %v758 = vrot.slane %v756, 5
      %v759 = vor.u32 %v755, %v758
      %v760 = vrot.slane %v759, 4
      %v762 = vshll.u32 %v677, 16
      %v764 = vrot.slane %v762, 5
      %v765 = vsel %vm206, %v760, %v764
      %v767 = vshrl.u32 %v678, 16
      %v769 = vrot.slane %v767, 4
      %v770 = vshll.u32 %v678, 16
      %v772 = vrot.slane %v770, 5
      %v773 = vor.u32 %v769, %v772
      %v774 = vrot.slane %v773, 4
      %v776 = vshll.u32 %v679, 16
      %v778 = vrot.slane %v776, 5
      %v779 = vsel %vm206, %v774, %v778
      %v781 = vshrl.u32 %v680, 16
      %v783 = vrot.slane %v781, 4
      %v784 = vshll.u32 %v680, 16
      %v786 = vrot.slane %v784, 5
      %v787 = vor.u32 %v783, %v786
      %v788 = vrot.slane %v787, 4
      %v790 = vshll.u32 %v681, 16
      %v792 = vrot.slane %v790, 5
      %v793 = vsel %vm206, %v788, %v792
      %s794 = scalar_lea.vmem %s1, 48
      %v795 = vld [vmem:[%s794] sm:$0xf]
      %v796 = vld [vmem:[%s794 + $0x4] sm:$0xf]
      %v797 = vld [vmem:[%s794 + $0x8] sm:$0xf]
      %v798 = vld [vmem:[%s794 + $0xc] sm:$0xf]
      %v799 = vunpack.c.l.b16 %v695
      %v800 = vunpack.c.l.b16 %v709
      %v801 = vunpack.c.l.b16 %v723
      %v802 = vunpack.c.l.b16 %v737
      %v803 = vunpack.c.l.b16 %v751
      %v804 = vunpack.c.l.b16 %v765
      %v805 = vunpack.c.l.b16 %v779
      %v806 = vunpack.c.l.b16 %v793
      %v807 = vpack.c.b16 %v800, %v799
      %v808 = vpack.c.b16 %v802, %v801
      %v809 = vpack.c.b16 %v804, %v803
      %v810 = vpack.c.b16 %v806, %v805
      %v815 = vunpack.c.l.b16 %v795
      %v816 = vunpack.c.l.b16 %v796
      %v817 = vunpack.c.l.b16 %v797
      %v818 = vunpack.c.l.b16 %v798
      %v819 = vpack.c.b16 %v816, %v815
      %v820 = vpack.c.b16 %v818, %v817
      %v824 = vsel %vm348, %v807, 0
      %v827 = vsel %vm348, %v808, 0
      %v830 = vsel %vm348, %v809, 0
      %v833 = vsel %vm348, %v810, 0
      %835 = vmatprep.subr.bf16.mxu0 0
      %836 = vmatpush1.bf16.msra.mxu0 %v819
      %837 = vmatprep.subr.bf16.mxu0 0
      %838 = vmatpush1.bf16.msra.mxu0 %v820
      %839 = vmatprep.subr.bf16.mxu0 0
      %840 = vmatpush1.bf16.msra.mxu0 0
      %841 = vmatprep.subr.bf16.mxu0 0
      %842 = vmatpush1.bf16.msra.mxu0 0
      %843 = vmatprep.subr.bf16.mxu0 0
      %844 = vmatpush1.bf16.msra.mxu0 0
      %845 = vmatprep.subr.bf16.mxu0 0
      %846 = vmatpush1.bf16.msra.mxu0 0
      %847 = vmatprep.subr.bf16.mxu0 0
      %848 = vmatpush1.bf16.msra.mxu0 0
      %849 = vmatprep.subr.bf16.mxu0 0
      %850 = vmatpush1.bf16.msra.mxu0 0
      %851 = vmatprep.subr.bf16.mxu0 0
      %852 = vmatpush1.bf16.msra.mxu0 0
      %853 = vmatprep.subr.bf16.mxu0 0
      %854 = vmatpush1.bf16.msra.mxu0 0
      %855 = vmatprep.subr.bf16.mxu0 0
      %856 = vmatpush1.bf16.msra.mxu0 0
      %857 = vmatprep.subr.bf16.mxu0 0
      %858 = vmatpush1.bf16.msra.mxu0 0
      %859 = vmatprep.subr.bf16.mxu0 0
      %860 = vmatpush1.bf16.msra.mxu0 0
      %861 = vmatprep.subr.bf16.mxu0 0
      %862 = vmatpush1.bf16.msra.mxu0 0
      %863 = vmatprep.subr.bf16.mxu0 0
      %864 = vmatpush1.bf16.msra.mxu0 0
      %865 = vmatprep.subr.bf16.mxu0 0
      %866 = vmatpush1.bf16.msra.mxu0 0
      %867 = vmatprep.mubr.bf16.mxu0 0
      %868 = vmatmul.mubr.bf16.gmra.mrb[0].mxu0 %v824
      %v869 = vpop.f32.mrb[0].mxu0
      %v870 = vadd.f32 0.0, %v869
      %v871 = vpop.f32.mrb[0].mxu0
      %v872 = vpop.f32.mrb[0].mxu0
      %v873 = vadd.f32 0.0, %v872
      %v874 = vpop.f32.mrb[0].mxu0
      %875 = vmatprep.mubr.bf16.mxu0 0
      %876 = vmatmul.mubr.bf16.gmra.mrb[0].mxu0 %v827
      %v877 = vpop.f32.mrb[0].mxu0
      %v878 = vadd.f32 0.0, %v877
      %v879 = vpop.f32.mrb[0].mxu0
      %v880 = vpop.f32.mrb[0].mxu0
      %v881 = vadd.f32 0.0, %v880
      %v882 = vpop.f32.mrb[0].mxu0
      %883 = vmatprep.mubr.bf16.mxu0 0
      %884 = vmatmul.mubr.bf16.gmra.mrb[0].mxu0 %v830
      %v885 = vpop.f32.mrb[0].mxu0
      %v886 = vadd.f32 0.0, %v885
      %v887 = vpop.f32.mrb[0].mxu0
      %v888 = vpop.f32.mrb[0].mxu0
      %v889 = vadd.f32 0.0, %v888
      %v890 = vpop.f32.mrb[0].mxu0
      %891 = vmatprep.mubr.bf16.mxu0 0
      %892 = vmatmul.mubr.bf16.gmra.mrb[0].mxu0 %v833
      %v893 = vpop.f32.mrb[0].mxu0
      %v894 = vadd.f32 0.0, %v893
      %v895 = vpop.f32.mrb[0].mxu0
      %v896 = vpop.f32.mrb[0].mxu0
      %v897 = vadd.f32 0.0, %v896
      %v898 = vpop.f32.mrb[0].mxu0
      %899 = vdwg.mxu0
      %v900 = vadd.f32 %v658, %v870
      %v901 = vadd.f32 %v659, %v873
      %v902 = vadd.f32 %v660, %v878
      %v903 = vadd.f32 %v661, %v881
      %v904 = vadd.f32 %v662, %v886
      %v905 = vadd.f32 %v663, %v889
      %v906 = vadd.f32 %v664, %v894
      %v907 = vadd.f32 %v665, %v897
      %v908 = vpack.c.bf16 %v901, %v900
      %v909 = vpack.c.bf16 %v903, %v902
      %v910 = vpack.c.bf16 %v905, %v904
      %v911 = vpack.c.bf16 %v907, %v906
      %v916 = vunpack.c.l.b16 %v908
      %v917 = vunpack.c.h.b16 %v908
      %v918 = vunpack.c.l.b16 %v909
      %v919 = vunpack.c.h.b16 %v909
      %v920 = vunpack.c.l.b16 %v910
      %v921 = vunpack.c.h.b16 %v910
      %v922 = vunpack.c.l.b16 %v911
      %v923 = vunpack.c.h.b16 %v911
      %v924 = vpack.c.b16 %v916, %v916
      %v925 = vpack.c.b16 %v917, %v917
      %v926 = vpack.c.b16 %v918, %v918
      %v927 = vpack.c.b16 %v919, %v919
      %v928 = vpack.c.b16 %v920, %v920
      %v929 = vpack.c.b16 %v921, %v921
      %v930 = vpack.c.b16 %v922, %v922
      %v931 = vpack.c.b16 %v923, %v923
      %vm940 = vcmask 60416
      %941 = vst.msk [vmem:[%s177] sm:$0xf] %vm940, %v924
      %942 = vst.msk [vmem:[%s177 + $0x4] sm:$0xf] %vm940, %v925
      %943 = vst.msk [vmem:[%s177 + $0x8] sm:$0xf] %vm940, %v926
      %944 = vst.msk [vmem:[%s177 + $0xc] sm:$0xf] %vm940, %v927
      %945 = vst.msk [vmem:[%s177 + $0x10] sm:$0xf] %vm940, %v928
      %946 = vst.msk [vmem:[%s177 + $0x14] sm:$0xf] %vm940, %v929
      %947 = vst.msk [vmem:[%s177 + $0x18] sm:$0xf] %vm940, %v930
      %948 = vst.msk [vmem:[%s177 + $0x1c] sm:$0xf] %vm940, %v931
      %vm949 = vcmask 64512
      %v950 = vsel %vm949, %v900, 0.0
      %v951 = vsel %vm949, %v901, 0.0
      %v952 = vadd.f32 %v950, %v951
      %v953 = vsel %vm949, %v902, 0.0
      %v954 = vadd.f32 %v952, %v953
      %v955 = vsel %vm949, %v903, 0.0
      %v956 = vadd.f32 %v954, %v955
      %v957 = vsel %vm949, %v904, 0.0
      %v958 = vadd.f32 %v956, %v957
      %v959 = vsel %vm949, %v905, 0.0
      %v960 = vadd.f32 %v958, %v959
      %v961 = vsel %vm949, %v906, 0.0
      %v962 = vadd.f32 %v960, %v961
      %v963 = vsel %vm949, %v907, 0.0
      %v964 = vadd.f32 %v962, %v963
      %v965 = vrot.slane %v964, 4
      %v966 = vadd.f32 %v964, %v965
      %v967 = vrot.slane %v966, 2
      %v968 = vadd.f32 %v966, %v967
      %v969 = vrot.slane %v968, 1
      %v970 = vadd.f32 %v968, %v969
      %v971 = vmul.f32 %v900, %v900
      %v972 = vmul.f32 %v901, %v901
      %v973 = vmul.f32 %v902, %v902
      %v974 = vmul.f32 %v903, %v903
      %v975 = vmul.f32 %v904, %v904
      %v976 = vmul.f32 %v905, %v905
      %v977 = vmul.f32 %v906, %v906
      %v978 = vmul.f32 %v907, %v907
      %v979 = vsel %vm949, %v971, 0.0
      %v980 = vsel %vm949, %v972, 0.0
      %v981 = vadd.f32 %v979, %v980
      %v982 = vsel %vm949, %v973, 0.0
      %v983 = vadd.f32 %v981, %v982
      %v984 = vsel %vm949, %v974, 0.0
      %v985 = vadd.f32 %v983, %v984
      %v986 = vsel %vm949, %v975, 0.0
      %v987 = vadd.f32 %v985, %v986
      %v988 = vsel %vm949, %v976, 0.0
      %v989 = vadd.f32 %v987, %v988
      %v990 = vsel %vm949, %v977, 0.0
      %v991 = vadd.f32 %v989, %v990
      %v992 = vsel %vm949, %v978, 0.0
      %v993 = vadd.f32 %v991, %v992
      %v994 = vrot.slane %v993, 4
      %v995 = vadd.f32 %v993, %v994
      %v996 = vrot.slane %v995, 2
      %v997 = vadd.f32 %v995, %v996
      %v998 = vrot.slane %v997, 1
      %v999 = vadd.f32 %v997, %v998
      %vm1000 = vcmask 1040384
      %v1001 = vsel %vm1000, %v970, %v999
      %vm1002 = vcmask 58368
      %1003 = vst.msk [vmem:[%s182] sm:$0x3] %vm1002, %v1001
      %s1004 = smul.u32 8, %s15
      %p1005 = scmp.lt.s32.totalorder %s1004, 15
      %s1006 = scalar_select %p1005, %s1004, 15
      %s1007 = smul.addr %s1006, 4
      %s1008 = scalar_lea.vmem %s2, %s1007
      %p1009 = scmp.lt.s32.totalorder %s15, 1
      %s1010 = scalar_select %p1009, %s15, 1
      %s1011 = smul.addr %s1010, 2
      %s1012 = scalar_lea.vmem %s3, %s1011
      // Predicated region
      $region29: #{bottleneck_shuffle_forward.5} parent=27 // pred_check
        %p1013 = pneg %p80
      $region30: #{bottleneck_shuffle_forward.5} parent=27 // pred_check_branch
        %1015 = sbr.rel (%p1013) target = $region32
      $region31: #{bottleneck_shuffle_forward.5} parent=27 // pred_region
        %s1016 = smul.u32 8, %s15
      $region32: #{bottleneck_shuffle_forward.5} parent=27 // pred_fallthru
        _
      // Predicated region
      $region33: #{bottleneck_shuffle_forward.5} parent=27 // pred_check
        %p1017 = pneg %p106
      $region34: #{bottleneck_shuffle_forward.5} parent=27 // pred_check_branch
        %1019 = sbr.rel (%p1017) target = $region36
      $region35: #{bottleneck_shuffle_forward.5} parent=27 // pred_region
        _
      $region36: #{bottleneck_shuffle_forward.5} parent=27 // pred_fallthru
        _
    $region28: #{bottleneck_shuffle_forward.5} parent=5 // pred_fallthru
      _
    %p1020 = scmp.le.s32.totalorder 2, %s10
    // Predicated region
    $region37: #{bottleneck_shuffle_forward.5} parent=5 // pred_check
      %p1021 = pneg %p1020
    $region38: #{bottleneck_shuffle_forward.5} parent=5 // pred_check_branch
      %1023 = sbr.rel (%p1021) target = $region40
    $region39: #{bottleneck_shuffle_forward.5} parent=5 // pred_region
      %s1024 = ssub.s32 %s10, 2
      // Predicated region
      $region41: #{bottleneck_shuffle_forward.5} parent=39 // pred_check
        %p1025 = pneg %p86
      $region42: #{bottleneck_shuffle_forward.5} parent=39 // pred_check_branch
        %1027 = sbr.rel (%p1025) target = $region44
      $region43: #{bottleneck_shuffle_forward.5} parent=39 // pred_region
        %s1028 = smul.u32 8, %s16
        %p1029 = scmp.lt.s32.totalorder %s1028, 15
        %s1030 = scalar_select %p1029, %s1028, 15
        %s1031 = smul.addr %s1030, 4
        %s1032 = scalar_lea.vmem %s2, %s1031
      $region44: #{bottleneck_shuffle_forward.5} parent=39 // pred_fallthru
        _
      // Predicated region
      $region45: #{bottleneck_shuffle_forward.5} parent=39 // pred_check
        %p1033 = pneg %p112
      $region46: #{bottleneck_shuffle_forward.5} parent=39 // pred_check_branch
        %1035 = sbr.rel (%p1033) target = $region48
      $region47: #{bottleneck_shuffle_forward.5} parent=39 // pred_region
        %p1036 = scmp.lt.s32.totalorder %s16, 1
        %s1037 = scalar_select %p1036, %s16, 1
        %s1038 = smul.addr %s1037, 2
        %s1039 = scalar_lea.vmem %s3, %s1038
      $region48: #{bottleneck_shuffle_forward.5} parent=39 // pred_fallthru
        _
    $region40: #{bottleneck_shuffle_forward.5} parent=5 // pred_fallthru
      _
  $region6: #{bottleneck_shuffle_forward.5} parent=0 // loop_footer
    %s14 = sadd.s32 1, %s10
  $region7: #{bottleneck_shuffle_forward.5} parent=0 // loop_footer_branch
    %9 = sbr.rel target = $region3
  $region8: #{bottleneck_shuffle_forward.5} parent=0 // loop_exit
    _

</llo_original>
